<compile_context>
chip_gen: v5e
topology: v5e:2x2
jax: 0.10.0
libtpu: 0.0.40
codegen_flags: <defaults>
</compile_context>

<pallas_src>
import functools

import jax
import jax.numpy as jnp
import numpy as np
from jax import lax
from jax.experimental import pallas as pl
from jax.experimental.pallas import tpu as pltpu

HIDDEN = 256
MLP1 = 128
LANE = 128
SUBLANE = 8


def _round_up(n, m):
    return ((n + m - 1) // m) * m


# ---------------------------------------------------------------------------
# Fused kernel: input projection + LSTM recurrence + MLP head
# ---------------------------------------------------------------------------
def fused_lstm_mlp_kernel(x_ref, wih_ref, whh_ref, blstm_ref,
                          w1_ref, b1_ref, w2_ref, b2_ref,
                          out_ref, gx_scr, hbuf, h_scr, c_scr, *, unroll):
    tt, bb, d = x_ref.shape
    out_pad = out_ref.shape[-1]

    # (re)initialize recurrent state at the first time-block of each batch
    # block (time is the innermost, sequential "arbitrary" grid axis).
    @pl.when(pl.program_id(1) == 0)
    def _():
        h_scr[...] = jnp.zeros_like(h_scr)
        c_scr[...] = jnp.zeros_like(c_scr)

    # ---- phase A: fused input projection (bf16 MXU, f32 accumulate) -------
    x2 = x_ref[...].reshape(tt * bb, d).astype(jnp.bfloat16)
    gx = jnp.dot(x2, wih_ref[...], preferred_element_type=jnp.float32)
    gx_scr[...] = (gx + blstm_ref[...]).reshape(tt, bb, 4 * HIDDEN)

    whh = whh_ref[...]

    # ---- phase B: time recurrence (only h @ W_hh^T inside the loop) --------
    def step(i, carry):
        gates = gx_scr[i] + jnp.dot(h_scr[...].astype(jnp.bfloat16), whh,
                                    preferred_element_type=jnp.float32)
        i_g = jax.nn.sigmoid(gates[:, 0 * HIDDEN:1 * HIDDEN])
        f_g = jax.nn.sigmoid(gates[:, 1 * HIDDEN:2 * HIDDEN])
        g_g = jnp.tanh(gates[:, 2 * HIDDEN:3 * HIDDEN])
        o_g = jax.nn.sigmoid(gates[:, 3 * HIDDEN:4 * HIDDEN])
        c_new = f_g * c_scr[...] + i_g * g_g
        h_new = o_g * jnp.tanh(c_new)
        c_scr[...] = c_new
        h_scr[...] = h_new
        hbuf[i] = h_new                       # leading-axis store, lane-dense
        return carry

    lax.fori_loop(0, tt, step, 0, unroll=unroll)

    # ---- phase C: MLP head over all tt*bb rows (lane-dense padded output) --
    y = jnp.maximum(hbuf[...], 0.0).reshape(tt * bb, HIDDEN).astype(jnp.bfloat16)
    y = jnp.dot(y, w1_ref[...], preferred_element_type=jnp.float32) + b1_ref[...]
    y = jnp.maximum(y, 0.0).astype(jnp.bfloat16)
    y = jnp.dot(y, w2_ref[...], preferred_element_type=jnp.float32) + b2_ref[...]
    out_ref[...] = y.reshape(tt, bb, out_pad).astype(out_ref.dtype)


# ---------------------------------------------------------------------------
# VMEM-budget-derived time block
# ---------------------------------------------------------------------------
def _vmem_need(tt, bb, d, out_pad):
    f32, bf16 = 4, 2
    x_blk = tt * bb * d * f32 * 2            # double-buffered input block
    out_blk = tt * bb * out_pad * f32 * 2    # double-buffered output block
    gx = tt * bb * 4 * HIDDEN * f32          # gates-x scratch
    hb = tt * bb * HIDDEN * f32              # h-sequence scratch
    hc = 2 * bb * HIDDEN * f32               # h, c state
    w = (d * 4 * HIDDEN + HIDDEN * 4 * HIDDEN
         + HIDDEN * MLP1 + MLP1 * out_pad) * bf16 * 2
    b = (4 * HIDDEN + MLP1 + out_pad) * f32 * 2
    return x_blk + out_blk + gx + hb + hc + w + b


def _pick_time_block(t, bb, d, out_pad, budget=20 * 1024 * 1024, cap=64):
    tt = max(1, min(t, cap))
    while tt > 1 and _vmem_need(tt, bb, d, out_pad) > budget:
        tt -= 1
    return tt


# ---------------------------------------------------------------------------
# Wrapper
# ---------------------------------------------------------------------------
def torch_lstm_forward(x, packed, out_dim):
    """x: (B, T, D_in) f32 -> (B, T, out_dim) f32."""
    wih_t, whh_t, b_lstm, w1_t, b1, w2p_t, b2p = packed
    B, T, D = x.shape
    out_pad = w2p_t.shape[1]

    # pad batch to a sublane multiple; split into two blocks when big enough
    # so the "parallel" batch axis can use both v7x TensorCores.
    Bp = _round_up(B, SUBLANE)
    bb = Bp // 2 if (Bp >= 16 and Bp % 16 == 0) else Bp

    tt = _pick_time_block(T, bb, D, out_pad)
    Tp = _round_up(T, tt)

    # zero-pad (padded rows/steps are independent and sliced off below) and go
    # time-major so per-timestep state lives on the leading axis.
    x_pad = jnp.zeros((Bp, Tp, D), x.dtype).at[:B, :T, :].set(x)
    x_tm = jnp.transpose(x_pad, (1, 0, 2))                 # (Tp, Bp, D)

    nb, nt = Bp // bb, Tp // tt
    unroll = int(max(1, min(tt, max(1, 512 // bb))))        # partial unroll

    kernel = functools.partial(fused_lstm_mlp_kernel, unroll=unroll)
    out_tm = pl.pallas_call(
        kernel,
        out_shape=jax.ShapeDtypeStruct((Tp, Bp, out_pad), jnp.float32),
        grid_spec=pltpu.PrefetchScalarGridSpec(
            num_scalar_prefetch=0,
            grid=(nb, nt),
            in_specs=[
                pl.BlockSpec((tt, bb, D), lambda b, t: (t, b, 0)),        # x
                pl.BlockSpec((D, 4 * HIDDEN), lambda b, t: (0, 0)),       # W_ih^T
                pl.BlockSpec((HIDDEN, 4 * HIDDEN), lambda b, t: (0, 0)),  # W_hh^T
                pl.BlockSpec((1, 4 * HIDDEN), lambda b, t: (0, 0)),       # b_ih+b_hh
                pl.BlockSpec((HIDDEN, MLP1), lambda b, t: (0, 0)),        # W1^T
                pl.BlockSpec((1, MLP1), lambda b, t: (0, 0)),             # b1
                pl.BlockSpec((MLP1, out_pad), lambda b, t: (0, 0)),       # W2^T pad
                pl.BlockSpec((1, out_pad), lambda b, t: (0, 0)),          # b2 pad
            ],
            out_specs=pl.BlockSpec((tt, bb, out_pad), lambda b, t: (t, b, 0)),
            scratch_shapes=[
                pltpu.VMEM((tt, bb, 4 * HIDDEN), jnp.float32),  # gates-x
                pltpu.VMEM((tt, bb, HIDDEN), jnp.float32),      # h sequence
                pltpu.VMEM((bb, HIDDEN), jnp.float32),          # h state
                pltpu.VMEM((bb, HIDDEN), jnp.float32),          # c state
            ],
        ),
        compiler_params=pltpu.CompilerParams(
            dimension_semantics=("parallel", "arbitrary"),
            vmem_limit_bytes=32 * 1024 * 1024),
    )(x_tm, wih_t, whh_t, b_lstm, w1_t, b1, w2p_t, b2p)

    # slice off padding and return batch-major (B, T, out_dim)
    return jnp.transpose(out_tm[:T, :B, :out_dim], (1, 0, 2))


# ---------------------------------------------------------------------------
# Params (PyTorch layout) and packing for the kernel
# ---------------------------------------------------------------------------
def make_params(key, d_in, out_dim):
    """Deterministic synthetic weights with PyTorch-style uniform init bounds."""
    ks = jax.random.split(key, 8)
    bound_lstm = 1.0 / np.sqrt(HIDDEN)
    bound_l1 = 1.0 / np.sqrt(HIDDEN)
    bound_l2 = 1.0 / np.sqrt(MLP1)
    u = lambda k, shape, b: jax.random.uniform(k, shape, jnp.float32, -b, b)
    w_ih = u(ks[0], (4 * HIDDEN, d_in), bound_lstm)     # weight_ih_l0
    w_hh = u(ks[1], (4 * HIDDEN, HIDDEN), bound_lstm)   # weight_hh_l0
    b_ih = u(ks[2], (4 * HIDDEN,), bound_lstm)
    b_hh = u(ks[3], (4 * HIDDEN,), bound_lstm)
    w1 = u(ks[4], (MLP1, HIDDEN), bound_l1)             # Linear(256,128)
    b1 = u(ks[5], (MLP1,), bound_l1)
    w2 = u(ks[6], (out_dim, MLP1), bound_l2)            # Linear(128,out)
    b2 = u(ks[7], (out_dim,), bound_l2)
    return (w_ih, w_hh, b_ih, b_hh, w1, b1, w2, b2)


def pack_params(raw, out_dim):
    """Pre-transpose, pad output to 128 lanes, cast matmul weights to bf16."""
    w_ih, w_hh, b_ih, b_hh, w1, b1, w2, b2 = raw
    out_pad = _round_up(out_dim, LANE)
    w2p = jnp.zeros((out_pad, MLP1), jnp.float32).at[:out_dim].set(w2)
    b2p = jnp.zeros((out_pad,), jnp.float32).at[:out_dim].set(b2)
    return (w_ih.T.astype(jnp.bfloat16),
            w_hh.T.astype(jnp.bfloat16),
            (b_ih + b_hh)[None, :].astype(jnp.float32),
            w1.T.astype(jnp.bfloat16),
            b1[None, :].astype(jnp.float32),
            w2p.T.astype(jnp.bfloat16),
            b2p[None, :].astype(jnp.float32))


def reference_forward(x, raw):
    """Pure-JAX f32 reference of the same forward."""
    w_ih, w_hh, b_ih, b_hh, w1, b1, w2, b2 = raw
    B = x.shape[0]
    b_lstm = b_ih + b_hh

    def step(carry, x_t):
        h, c = carry
        gates = x_t @ w_ih.T + h @ w_hh.T + b_lstm
        i_g = jax.nn.sigmoid(gates[:, 0 * HIDDEN:1 * HIDDEN])
        f_g = jax.nn.sigmoid(gates[:, 1 * HIDDEN:2 * HIDDEN])
        g_g = jnp.tanh(gates[:, 2 * HIDDEN:3 * HIDDEN])
        o_g = jax.nn.sigmoid(gates[:, 3 * HIDDEN:4 * HIDDEN])
        c = f_g * c + i_g * g_g
        h = o_g * jnp.tanh(c)
        return (h, c), h

    h0 = jnp.zeros((B, HIDDEN), jnp.float32)
    c0 = jnp.zeros((B, HIDDEN), jnp.float32)
    _, hs = lax.scan(step, (h0, c0), jnp.transpose(x, (1, 0, 2)))
    hs = jnp.transpose(hs, (1, 0, 2))                       # (B, T, H)
    y = jnp.maximum(hs, 0.0)
    y = jnp.maximum(y @ w1.T + b1, 0.0)
    return y @ w2.T + b2


if __name__ == "__main__":
    B, T, D_IN, OUT = 2, 8, 32, 16
    key = jax.random.PRNGKey(0)
    kx, kp = jax.random.split(key)
    x = jax.random.normal(kx, (B, T, D_IN), jnp.float32)
    raw = make_params(kp, D_IN, OUT)
    packed = pack_params(raw, OUT)

    out = jax.block_until_ready(torch_lstm_forward(x, packed, OUT))
    ref = jax.block_until_ready(reference_forward(x, raw))
    # bf16 MXU matmuls (f32 accumulation / f32 gate math) -> loosened tolerance
    np.testing.assert_allclose(np.asarray(out), np.asarray(ref),
                               rtol=2e-2, atol=2e-2)
    print("KERNEL_OK")
</pallas_src>

<mosaic_0001>
module attributes {stable_mosaic.version = 11 : i64} {
  func.func @fused_lstm_mlp_kernel(%arg0: i32, %arg1: i32, %arg2: memref<8x8x32xf32, #tpu.memory_space<vmem>>, %arg3: memref<32x1024xbf16, #tpu.memory_space<vmem>>, %arg4: memref<256x1024xbf16, #tpu.memory_space<vmem>>, %arg5: memref<1x1024xf32, #tpu.memory_space<vmem>>, %arg6: memref<256x128xbf16, #tpu.memory_space<vmem>>, %arg7: memref<1x128xf32, #tpu.memory_space<vmem>>, %arg8: memref<128x128xbf16, #tpu.memory_space<vmem>>, %arg9: memref<1x128xf32, #tpu.memory_space<vmem>>, %arg10: memref<8x8x128xf32, #tpu.memory_space<vmem>>, %arg11: memref<8x8x1024xf32, #tpu.memory_space<vmem>>, %arg12: memref<8x8x256xf32, #tpu.memory_space<vmem>>, %arg13: memref<8x256xf32, #tpu.memory_space<vmem>>, %arg14: memref<8x256xf32, #tpu.memory_space<vmem>>) attributes {dimension_semantics = [#tpu.dimension_semantics<parallel>, #tpu.dimension_semantics<arbitrary>], iteration_bounds = array<i64: 1, 1>, scalar_prefetch = 0 : i64, scratch_operands = 4 : i64, tpu.core_type = #tpu.core_type<tc>, window_params = [{transform_indices = @transform_0, window_bounds = array<i64: 8, 8, 32>}, {pipeline_mode = #tpu.pipeline_mode<synchronous>, transform_indices = @transform_1, window_bounds = array<i64: 32, 1024>}, {pipeline_mode = #tpu.pipeline_mode<synchronous>, transform_indices = @transform_2, window_bounds = array<i64: 256, 1024>}, {pipeline_mode = #tpu.pipeline_mode<synchronous>, transform_indices = @transform_3, window_bounds = array<i64: 1, 1024>}, {pipeline_mode = #tpu.pipeline_mode<synchronous>, transform_indices = @transform_4, window_bounds = array<i64: 256, 128>}, {pipeline_mode = #tpu.pipeline_mode<synchronous>, transform_indices = @transform_5, window_bounds = array<i64: 1, 128>}, {pipeline_mode = #tpu.pipeline_mode<synchronous>, transform_indices = @transform_6, window_bounds = array<i64: 128, 128>}, {pipeline_mode = #tpu.pipeline_mode<synchronous>, transform_indices = @transform_7, window_bounds = array<i64: 1, 128>}, {transform_indices = @transform_8, window_bounds = array<i64: 8, 8, 128>}]} {
    %c0_i32 = arith.constant 0 : i32
    %0 = arith.cmpi eq, %arg1, %c0_i32 : i32
    %1 = arith.extui %0 : i1 to i32
    %c0_i32_0 = arith.constant 0 : i32
    %2 = arith.cmpi ne, %1, %c0_i32_0 : i32
    scf.if %2 {
      %cst_159 = arith.constant 0.000000e+00 : f32
      %346 = vector.broadcast %cst_159 : f32 to vector<8x256xf32>
      %c0_160 = arith.constant 0 : index
      %c0_161 = arith.constant 0 : index
      %347 = vector.load %arg13[%c0_160, %c0_161] : memref<8x256xf32, #tpu.memory_space<vmem>>, vector<8x256xf32>
      tpu.vector_store %arg13[%c0_160, %c0_161], %346 {strides = array<i32>} : memref<8x256xf32, #tpu.memory_space<vmem>>, vector<8x256xf32>,
      %cst_162 = arith.constant 0.000000e+00 : f32
      %348 = vector.broadcast %cst_162 : f32 to vector<8x256xf32>
      %c0_163 = arith.constant 0 : index
      %c0_164 = arith.constant 0 : index
      %349 = vector.load %arg14[%c0_163, %c0_164] : memref<8x256xf32, #tpu.memory_space<vmem>>, vector<8x256xf32>
      tpu.vector_store %arg14[%c0_163, %c0_164], %348 {strides = array<i32>} : memref<8x256xf32, #tpu.memory_space<vmem>>, vector<8x256xf32>,
    } else {
    }
    %c0 = arith.constant 0 : index
    %c0_1 = arith.constant 0 : index
    %c0_2 = arith.constant 0 : index
    %3 = vector.load %arg2[%c0, %c0_1, %c0_2] : memref<8x8x32xf32, #tpu.memory_space<vmem>>, vector<8x8x32xf32>
    %4 = vector.shape_cast %3 : vector<8x8x32xf32> to vector<64x32xf32>
    %5 = arith.truncf %4 : vector<64x32xf32> to vector<64x32xbf16>
    %c0_3 = arith.constant 0 : index
    %c0_4 = arith.constant 0 : index
    %6 = vector.load %arg3[%c0_3, %c0_4] : memref<32x1024xbf16, #tpu.memory_space<vmem>>, vector<32x1024xbf16>
    %cst = arith.constant dense<0.000000e+00> : vector<64x1024xf32>
    %7 = tpu.matmul %5, %6, %cst {dimension_numbers = #tpu.dot_dimension_numbers<[1], [0], [0], [1], [0, 0, 1, 1], [], []>} : vector<64x32xbf16>, vector<32x1024xbf16>, vector<64x1024xf32> -> vector<64x1024xf32>
    %c0_5 = arith.constant 0 : index
    %c0_6 = arith.constant 0 : index
    %8 = vector.load %arg5[%c0_5, %c0_6] : memref<1x1024xf32, #tpu.memory_space<vmem>>, vector<1x1024xf32>
    %9 = vector.broadcast %8 : vector<1x1024xf32> to vector<64x1024xf32>
    %10 = arith.addf %7, %9 : vector<64x1024xf32>
    %11 = vector.shape_cast %10 : vector<64x1024xf32> to vector<8x8x1024xf32>
    %c0_7 = arith.constant 0 : index
    %c0_8 = arith.constant 0 : index
    %c0_9 = arith.constant 0 : index
    %12 = vector.load %arg11[%c0_7, %c0_8, %c0_9] : memref<8x8x1024xf32, #tpu.memory_space<vmem>>, vector<8x8x1024xf32>
    tpu.vector_store %arg11[%c0_7, %c0_8, %c0_9], %11 {strides = array<i32>} : memref<8x8x1024xf32, #tpu.memory_space<vmem>>, vector<8x8x1024xf32>,
    %c0_10 = arith.constant 0 : index
    %c0_11 = arith.constant 0 : index
    %13 = vector.load %arg4[%c0_10, %c0_11] : memref<256x1024xbf16, #tpu.memory_space<vmem>>, vector<256x1024xbf16>
    %c0_i32_12 = arith.constant 0 : i32
    %14 = arith.index_cast %c0_i32_12 : i32 to index
    %c0_13 = arith.constant 0 : index
    %c0_14 = arith.constant 0 : index
    %15 = vector.load %arg11[%14, %c0_13, %c0_14] : memref<8x8x1024xf32, #tpu.memory_space<vmem>>, vector<1x8x1024xf32>
    %16 = vector.shape_cast %15 : vector<1x8x1024xf32> to vector<8x1024xf32>
    %c0_15 = arith.constant 0 : index
    %c0_16 = arith.constant 0 : index
    %17 = vector.load %arg13[%c0_15, %c0_16] : memref<8x256xf32, #tpu.memory_space<vmem>>, vector<8x256xf32>
    %18 = arith.truncf %17 : vector<8x256xf32> to vector<8x256xbf16>
    %cst_17 = arith.constant dense<0.000000e+00> : vector<8x1024xf32>
    %19 = tpu.matmul %18, %13, %cst_17 {dimension_numbers = #tpu.dot_dimension_numbers<[1], [0], [0], [1], [0, 0, 1, 1], [], []>} : vector<8x256xbf16>, vector<256x1024xbf16>, vector<8x1024xf32> -> vector<8x1024xf32>
    %20 = arith.addf %16, %19 : vector<8x1024xf32>
    %21 = vector.extract_strided_slice %20 {offsets = [0, 0], sizes = [8, 256], strides = [1, 1]} : vector<8x1024xf32> to vector<8x256xf32>
    %22 = arith.negf %21 : vector<8x256xf32>
    %23 = math.exp %22 : vector<8x256xf32>
    %cst_18 = arith.constant 1.000000e+00 : f32
    %24 = vector.broadcast %cst_18 : f32 to vector<8x256xf32>
    %25 = arith.addf %24, %23 : vector<8x256xf32>
    %26 = arith.divf %24, %25 : vector<8x256xf32>
    %27 = vector.extract_strided_slice %20 {offsets = [0, 256], sizes = [8, 256], strides = [1, 1]} : vector<8x1024xf32> to vector<8x256xf32>
    %28 = arith.negf %27 : vector<8x256xf32>
    %29 = math.exp %28 : vector<8x256xf32>
    %cst_19 = arith.constant 1.000000e+00 : f32
    %30 = vector.broadcast %cst_19 : f32 to vector<8x256xf32>
    %31 = arith.addf %30, %29 : vector<8x256xf32>
    %32 = arith.divf %30, %31 : vector<8x256xf32>
    %33 = vector.extract_strided_slice %20 {offsets = [0, 512], sizes = [8, 256], strides = [1, 1]} : vector<8x1024xf32> to vector<8x256xf32>
    %34 = math.tanh %33 : vector<8x256xf32>
    %35 = vector.extract_strided_slice %20 {offsets = [0, 768], sizes = [8, 256], strides = [1, 1]} : vector<8x1024xf32> to vector<8x256xf32>
    %36 = arith.negf %35 : vector<8x256xf32>
    %37 = math.exp %36 : vector<8x256xf32>
    %cst_20 = arith.constant 1.000000e+00 : f32
    %38 = vector.broadcast %cst_20 : f32 to vector<8x256xf32>
    %39 = arith.addf %38, %37 : vector<8x256xf32>
    %40 = arith.divf %38, %39 : vector<8x256xf32>
    %c0_21 = arith.constant 0 : index
    %c0_22 = arith.constant 0 : index
    %41 = vector.load %arg14[%c0_21, %c0_22] : memref<8x256xf32, #tpu.memory_space<vmem>>, vector<8x256xf32>
    %42 = arith.mulf %32, %41 : vector<8x256xf32>
    %43 = arith.mulf %26, %34 : vector<8x256xf32>
    %44 = arith.addf %42, %43 : vector<8x256xf32>
    %45 = math.tanh %44 : vector<8x256xf32>
    %46 = arith.mulf %40, %45 : vector<8x256xf32>
    %c0_23 = arith.constant 0 : index
    %c0_24 = arith.constant 0 : index
    %47 = vector.load %arg14[%c0_23, %c0_24] : memref<8x256xf32, #tpu.memory_space<vmem>>, vector<8x256xf32>
    tpu.vector_store %arg14[%c0_23, %c0_24], %44 {strides = array<i32>} : memref<8x256xf32, #tpu.memory_space<vmem>>, vector<8x256xf32>,
    %c0_25 = arith.constant 0 : index
    %c0_26 = arith.constant 0 : index
    %48 = vector.load %arg13[%c0_25, %c0_26] : memref<8x256xf32, #tpu.memory_space<vmem>>, vector<8x256xf32>
    tpu.vector_store %arg13[%c0_25, %c0_26], %46 {strides = array<i32>} : memref<8x256xf32, #tpu.memory_space<vmem>>, vector<8x256xf32>,
    %49 = arith.index_cast %c0_i32_12 : i32 to index
    %c0_27 = arith.constant 0 : index
    %c0_28 = arith.constant 0 : index
    %50 = vector.load %arg12[%49, %c0_27, %c0_28] : memref<8x8x256xf32, #tpu.memory_space<vmem>>, vector<1x8x256xf32>
    %51 = vector.shape_cast %50 : vector<1x8x256xf32> to vector<8x256xf32>
    %52 = vector.shape_cast %46 : vector<8x256xf32> to vector<1x8x256xf32>
    tpu.vector_store %arg12[%49, %c0_27, %c0_28], %52 {strides = array<i32>} : memref<8x8x256xf32, #tpu.memory_space<vmem>>, vector<1x8x256xf32>,
    %c1_i32 = arith.constant 1 : i32
    %53 = arith.index_cast %c1_i32 : i32 to index
    %c0_29 = arith.constant 0 : index
    %c0_30 = arith.constant 0 : index
    %54 = vector.load %arg11[%53, %c0_29, %c0_30] : memref<8x8x1024xf32, #tpu.memory_space<vmem>>, vector<1x8x1024xf32>
    %55 = vector.shape_cast %54 : vector<1x8x1024xf32> to vector<8x1024xf32>
    %c0_31 = arith.constant 0 : index
    %c0_32 = arith.constant 0 : index
    %56 = vector.load %arg13[%c0_31, %c0_32] : memref<8x256xf32, #tpu.memory_space<vmem>>, vector<8x256xf32>
    %57 = arith.truncf %56 : vector<8x256xf32> to vector<8x256xbf16>
    %cst_33 = arith.constant dense<0.000000e+00> : vector<8x1024xf32>
    %58 = tpu.matmul %57, %13, %cst_33 {dimension_numbers = #tpu.dot_dimension_numbers<[1], [0], [0], [1], [0, 0, 1, 1], [], []>} : vector<8x256xbf16>, vector<256x1024xbf16>, vector<8x1024xf32> -> vector<8x1024xf32>
    %59 = arith.addf %55, %58 : vector<8x1024xf32>
    %60 = vector.extract_strided_slice %59 {offsets = [0, 0], sizes = [8, 256], strides = [1, 1]} : vector<8x1024xf32> to vector<8x256xf32>
    %61 = arith.negf %60 : vector<8x256xf32>
    %62 = math.exp %61 : vector<8x256xf32>
    %cst_34 = arith.constant 1.000000e+00 : f32
    %63 = vector.broadcast %cst_34 : f32 to vector<8x256xf32>
    %64 = arith.addf %63, %62 : vector<8x256xf32>
    %65 = arith.divf %63, %64 : vector<8x256xf32>
    %66 = vector.extract_strided_slice %59 {offsets = [0, 256], sizes = [8, 256], strides = [1, 1]} : vector<8x1024xf32> to vector<8x256xf32>
    %67 = arith.negf %66 : vector<8x256xf32>
    %68 = math.exp %67 : vector<8x256xf32>
    %cst_35 = arith.constant 1.000000e+00 : f32
    %69 = vector.broadcast %cst_35 : f32 to vector<8x256xf32>
    %70 = arith.addf %69, %68 : vector<8x256xf32>
    %71 = arith.divf %69, %70 : vector<8x256xf32>
    %72 = vector.extract_strided_slice %59 {offsets = [0, 512], sizes = [8, 256], strides = [1, 1]} : vector<8x1024xf32> to vector<8x256xf32>
    %73 = math.tanh %72 : vector<8x256xf32>
    %74 = vector.extract_strided_slice %59 {offsets = [0, 768], sizes = [8, 256], strides = [1, 1]} : vector<8x1024xf32> to vector<8x256xf32>
    %75 = arith.negf %74 : vector<8x256xf32>
    %76 = math.exp %75 : vector<8x256xf32>
    %cst_36 = arith.constant 1.000000e+00 : f32
    %77 = vector.broadcast %cst_36 : f32 to vector<8x256xf32>
    %78 = arith.addf %77, %76 : vector<8x256xf32>
    %79 = arith.divf %77, %78 : vector<8x256xf32>
    %c0_37 = arith.constant 0 : index
    %c0_38 = arith.constant 0 : index
    %80 = vector.load %arg14[%c0_37, %c0_38] : memref<8x256xf32, #tpu.memory_space<vmem>>, vector<8x256xf32>
    %81 = arith.mulf %71, %80 : vector<8x256xf32>
    %82 = arith.mulf %65, %73 : vector<8x256xf32>
    %83 = arith.addf %81, %82 : vector<8x256xf32>
    %84 = math.tanh %83 : vector<8x256xf32>
    %85 = arith.mulf %79, %84 : vector<8x256xf32>
    %c0_39 = arith.constant 0 : index
    %c0_40 = arith.constant 0 : index
    %86 = vector.load %arg14[%c0_39, %c0_40] : memref<8x256xf32, #tpu.memory_space<vmem>>, vector<8x256xf32>
    tpu.vector_store %arg14[%c0_39, %c0_40], %83 {strides = array<i32>} : memref<8x256xf32, #tpu.memory_space<vmem>>, vector<8x256xf32>,
    %c0_41 = arith.constant 0 : index
    %c0_42 = arith.constant 0 : index
    %87 = vector.load %arg13[%c0_41, %c0_42] : memref<8x256xf32, #tpu.memory_space<vmem>>, vector<8x256xf32>
    tpu.vector_store %arg13[%c0_41, %c0_42], %85 {strides = array<i32>} : memref<8x256xf32, #tpu.memory_space<vmem>>, vector<8x256xf32>,
    %88 = arith.index_cast %c1_i32 : i32 to index
    %c0_43 = arith.constant 0 : index
    %c0_44 = arith.constant 0 : index
    %89 = vector.load %arg12[%88, %c0_43, %c0_44] : memref<8x8x256xf32, #tpu.memory_space<vmem>>, vector<1x8x256xf32>
    %90 = vector.shape_cast %89 : vector<1x8x256xf32> to vector<8x256xf32>
    %91 = vector.shape_cast %85 : vector<8x256xf32> to vector<1x8x256xf32>
    tpu.vector_store %arg12[%88, %c0_43, %c0_44], %91 {strides = array<i32>} : memref<8x8x256xf32, #tpu.memory_space<vmem>>, vector<1x8x256xf32>,
    %c2_i32 = arith.constant 2 : i32
    %92 = arith.index_cast %c2_i32 : i32 to index
    %c0_45 = arith.constant 0 : index
    %c0_46 = arith.constant 0 : index
    %93 = vector.load %arg11[%92, %c0_45, %c0_46] : memref<8x8x1024xf32, #tpu.memory_space<vmem>>, vector<1x8x1024xf32>
    %94 = vector.shape_cast %93 : vector<1x8x1024xf32> to vector<8x1024xf32>
    %c0_47 = arith.constant 0 : index
    %c0_48 = arith.constant 0 : index
    %95 = vector.load %arg13[%c0_47, %c0_48] : memref<8x256xf32, #tpu.memory_space<vmem>>, vector<8x256xf32>
    %96 = arith.truncf %95 : vector<8x256xf32> to vector<8x256xbf16>
    %cst_49 = arith.constant dense<0.000000e+00> : vector<8x1024xf32>
    %97 = tpu.matmul %96, %13, %cst_49 {dimension_numbers = #tpu.dot_dimension_numbers<[1], [0], [0], [1], [0, 0, 1, 1], [], []>} : vector<8x256xbf16>, vector<256x1024xbf16>, vector<8x1024xf32> -> vector<8x1024xf32>
    %98 = arith.addf %94, %97 : vector<8x1024xf32>
    %99 = vector.extract_strided_slice %98 {offsets = [0, 0], sizes = [8, 256], strides = [1, 1]} : vector<8x1024xf32> to vector<8x256xf32>
    %100 = arith.negf %99 : vector<8x256xf32>
    %101 = math.exp %100 : vector<8x256xf32>
    %cst_50 = arith.constant 1.000000e+00 : f32
    %102 = vector.broadcast %cst_50 : f32 to vector<8x256xf32>
    %103 = arith.addf %102, %101 : vector<8x256xf32>
    %104 = arith.divf %102, %103 : vector<8x256xf32>
    %105 = vector.extract_strided_slice %98 {offsets = [0, 256], sizes = [8, 256], strides = [1, 1]} : vector<8x1024xf32> to vector<8x256xf32>
    %106 = arith.negf %105 : vector<8x256xf32>
    %107 = math.exp %106 : vector<8x256xf32>
    %cst_51 = arith.constant 1.000000e+00 : f32
    %108 = vector.broadcast %cst_51 : f32 to vector<8x256xf32>
    %109 = arith.addf %108, %107 : vector<8x256xf32>
    %110 = arith.divf %108, %109 : vector<8x256xf32>
    %111 = vector.extract_strided_slice %98 {offsets = [0, 512], sizes = [8, 256], strides = [1, 1]} : vector<8x1024xf32> to vector<8x256xf32>
    %112 = math.tanh %111 : vector<8x256xf32>
    %113 = vector.extract_strided_slice %98 {offsets = [0, 768], sizes = [8, 256], strides = [1, 1]} : vector<8x1024xf32> to vector<8x256xf32>
    %114 = arith.negf %113 : vector<8x256xf32>
    %115 = math.exp %114 : vector<8x256xf32>
    %cst_52 = arith.constant 1.000000e+00 : f32
    %116 = vector.broadcast %cst_52 : f32 to vector<8x256xf32>
    %117 = arith.addf %116, %115 : vector<8x256xf32>
    %118 = arith.divf %116, %117 : vector<8x256xf32>
    %c0_53 = arith.constant 0 : index
    %c0_54 = arith.constant 0 : index
    %119 = vector.load %arg14[%c0_53, %c0_54] : memref<8x256xf32, #tpu.memory_space<vmem>>, vector<8x256xf32>
    %120 = arith.mulf %110, %119 : vector<8x256xf32>
    %121 = arith.mulf %104, %112 : vector<8x256xf32>
    %122 = arith.addf %120, %121 : vector<8x256xf32>
    %123 = math.tanh %122 : vector<8x256xf32>
    %124 = arith.mulf %118, %123 : vector<8x256xf32>
    %c0_55 = arith.constant 0 : index
    %c0_56 = arith.constant 0 : index
    %125 = vector.load %arg14[%c0_55, %c0_56] : memref<8x256xf32, #tpu.memory_space<vmem>>, vector<8x256xf32>
    tpu.vector_store %arg14[%c0_55, %c0_56], %122 {strides = array<i32>} : memref<8x256xf32, #tpu.memory_space<vmem>>, vector<8x256xf32>,
    %c0_57 = arith.constant 0 : index
    %c0_58 = arith.constant 0 : index
    %126 = vector.load %arg13[%c0_57, %c0_58] : memref<8x256xf32, #tpu.memory_space<vmem>>, vector<8x256xf32>
    tpu.vector_store %arg13[%c0_57, %c0_58], %124 {strides = array<i32>} : memref<8x256xf32, #tpu.memory_space<vmem>>, vector<8x256xf32>,
    %127 = arith.index_cast %c2_i32 : i32 to index
    %c0_59 = arith.constant 0 : index
    %c0_60 = arith.constant 0 : index
    %128 = vector.load %arg12[%127, %c0_59, %c0_60] : memref<8x8x256xf32, #tpu.memory_space<vmem>>, vector<1x8x256xf32>
    %129 = vector.shape_cast %128 : vector<1x8x256xf32> to vector<8x256xf32>
    %130 = vector.shape_cast %124 : vector<8x256xf32> to vector<1x8x256xf32>
    tpu.vector_store %arg12[%127, %c0_59, %c0_60], %130 {strides = array<i32>} : memref<8x8x256xf32, #tpu.memory_space<vmem>>, vector<1x8x256xf32>,
    %c3_i32 = arith.constant 3 : i32
    %131 = arith.index_cast %c3_i32 : i32 to index
    %c0_61 = arith.constant 0 : index
    %c0_62 = arith.constant 0 : index
    %132 = vector.load %arg11[%131, %c0_61, %c0_62] : memref<8x8x1024xf32, #tpu.memory_space<vmem>>, vector<1x8x1024xf32>
    %133 = vector.shape_cast %132 : vector<1x8x1024xf32> to vector<8x1024xf32>
    %c0_63 = arith.constant 0 : index
    %c0_64 = arith.constant 0 : index
    %134 = vector.load %arg13[%c0_63, %c0_64] : memref<8x256xf32, #tpu.memory_space<vmem>>, vector<8x256xf32>
    %135 = arith.truncf %134 : vector<8x256xf32> to vector<8x256xbf16>
    %cst_65 = arith.constant dense<0.000000e+00> : vector<8x1024xf32>
    %136 = tpu.matmul %135, %13, %cst_65 {dimension_numbers = #tpu.dot_dimension_numbers<[1], [0], [0], [1], [0, 0, 1, 1], [], []>} : vector<8x256xbf16>, vector<256x1024xbf16>, vector<8x1024xf32> -> vector<8x1024xf32>
    %137 = arith.addf %133, %136 : vector<8x1024xf32>
    %138 = vector.extract_strided_slice %137 {offsets = [0, 0], sizes = [8, 256], strides = [1, 1]} : vector<8x1024xf32> to vector<8x256xf32>
    %139 = arith.negf %138 : vector<8x256xf32>
    %140 = math.exp %139 : vector<8x256xf32>
    %cst_66 = arith.constant 1.000000e+00 : f32
    %141 = vector.broadcast %cst_66 : f32 to vector<8x256xf32>
    %142 = arith.addf %141, %140 : vector<8x256xf32>
    %143 = arith.divf %141, %142 : vector<8x256xf32>
    %144 = vector.extract_strided_slice %137 {offsets = [0, 256], sizes = [8, 256], strides = [1, 1]} : vector<8x1024xf32> to vector<8x256xf32>
    %145 = arith.negf %144 : vector<8x256xf32>
    %146 = math.exp %145 : vector<8x256xf32>
    %cst_67 = arith.constant 1.000000e+00 : f32
    %147 = vector.broadcast %cst_67 : f32 to vector<8x256xf32>
    %148 = arith.addf %147, %146 : vector<8x256xf32>
    %149 = arith.divf %147, %148 : vector<8x256xf32>
    %150 = vector.extract_strided_slice %137 {offsets = [0, 512], sizes = [8, 256], strides = [1, 1]} : vector<8x1024xf32> to vector<8x256xf32>
    %151 = math.tanh %150 : vector<8x256xf32>
    %152 = vector.extract_strided_slice %137 {offsets = [0, 768], sizes = [8, 256], strides = [1, 1]} : vector<8x1024xf32> to vector<8x256xf32>
    %153 = arith.negf %152 : vector<8x256xf32>
    %154 = math.exp %153 : vector<8x256xf32>
    %cst_68 = arith.constant 1.000000e+00 : f32
    %155 = vector.broadcast %cst_68 : f32 to vector<8x256xf32>
    %156 = arith.addf %155, %154 : vector<8x256xf32>
    %157 = arith.divf %155, %156 : vector<8x256xf32>
    %c0_69 = arith.constant 0 : index
    %c0_70 = arith.constant 0 : index
    %158 = vector.load %arg14[%c0_69, %c0_70] : memref<8x256xf32, #tpu.memory_space<vmem>>, vector<8x256xf32>
    %159 = arith.mulf %149, %158 : vector<8x256xf32>
    %160 = arith.mulf %143, %151 : vector<8x256xf32>
    %161 = arith.addf %159, %160 : vector<8x256xf32>
    %162 = math.tanh %161 : vector<8x256xf32>
    %163 = arith.mulf %157, %162 : vector<8x256xf32>
    %c0_71 = arith.constant 0 : index
    %c0_72 = arith.constant 0 : index
    %164 = vector.load %arg14[%c0_71, %c0_72] : memref<8x256xf32, #tpu.memory_space<vmem>>, vector<8x256xf32>
    tpu.vector_store %arg14[%c0_71, %c0_72], %161 {strides = array<i32>} : memref<8x256xf32, #tpu.memory_space<vmem>>, vector<8x256xf32>,
    %c0_73 = arith.constant 0 : index
    %c0_74 = arith.constant 0 : index
    %165 = vector.load %arg13[%c0_73, %c0_74] : memref<8x256xf32, #tpu.memory_space<vmem>>, vector<8x256xf32>
    tpu.vector_store %arg13[%c0_73, %c0_74], %163 {strides = array<i32>} : memref<8x256xf32, #tpu.memory_space<vmem>>, vector<8x256xf32>,
    %166 = arith.index_cast %c3_i32 : i32 to index
    %c0_75 = arith.constant 0 : index
    %c0_76 = arith.constant 0 : index
    %167 = vector.load %arg12[%166, %c0_75, %c0_76] : memref<8x8x256xf32, #tpu.memory_space<vmem>>, vector<1x8x256xf32>
    %168 = vector.shape_cast %167 : vector<1x8x256xf32> to vector<8x256xf32>
    %169 = vector.shape_cast %163 : vector<8x256xf32> to vector<1x8x256xf32>
    tpu.vector_store %arg12[%166, %c0_75, %c0_76], %169 {strides = array<i32>} : memref<8x8x256xf32, #tpu.memory_space<vmem>>, vector<1x8x256xf32>,
    %c4_i32 = arith.constant 4 : i32
    %170 = arith.index_cast %c4_i32 : i32 to index
    %c0_77 = arith.constant 0 : index
    %c0_78 = arith.constant 0 : index
    %171 = vector.load %arg11[%170, %c0_77, %c0_78] : memref<8x8x1024xf32, #tpu.memory_space<vmem>>, vector<1x8x1024xf32>
    %172 = vector.shape_cast %171 : vector<1x8x1024xf32> to vector<8x1024xf32>
    %c0_79 = arith.constant 0 : index
    %c0_80 = arith.constant 0 : index
    %173 = vector.load %arg13[%c0_79, %c0_80] : memref<8x256xf32, #tpu.memory_space<vmem>>, vector<8x256xf32>
    %174 = arith.truncf %173 : vector<8x256xf32> to vector<8x256xbf16>
    %cst_81 = arith.constant dense<0.000000e+00> : vector<8x1024xf32>
    %175 = tpu.matmul %174, %13, %cst_81 {dimension_numbers = #tpu.dot_dimension_numbers<[1], [0], [0], [1], [0, 0, 1, 1], [], []>} : vector<8x256xbf16>, vector<256x1024xbf16>, vector<8x1024xf32> -> vector<8x1024xf32>
    %176 = arith.addf %172, %175 : vector<8x1024xf32>
    %177 = vector.extract_strided_slice %176 {offsets = [0, 0], sizes = [8, 256], strides = [1, 1]} : vector<8x1024xf32> to vector<8x256xf32>
    %178 = arith.negf %177 : vector<8x256xf32>
    %179 = math.exp %178 : vector<8x256xf32>
    %cst_82 = arith.constant 1.000000e+00 : f32
    %180 = vector.broadcast %cst_82 : f32 to vector<8x256xf32>
    %181 = arith.addf %180, %179 : vector<8x256xf32>
    %182 = arith.divf %180, %181 : vector<8x256xf32>
    %183 = vector.extract_strided_slice %176 {offsets = [0, 256], sizes = [8, 256], strides = [1, 1]} : vector<8x1024xf32> to vector<8x256xf32>
    %184 = arith.negf %183 : vector<8x256xf32>
    %185 = math.exp %184 : vector<8x256xf32>
    %cst_83 = arith.constant 1.000000e+00 : f32
    %186 = vector.broadcast %cst_83 : f32 to vector<8x256xf32>
    %187 = arith.addf %186, %185 : vector<8x256xf32>
    %188 = arith.divf %186, %187 : vector<8x256xf32>
    %189 = vector.extract_strided_slice %176 {offsets = [0, 512], sizes = [8, 256], strides = [1, 1]} : vector<8x1024xf32> to vector<8x256xf32>
    %190 = math.tanh %189 : vector<8x256xf32>
    %191 = vector.extract_strided_slice %176 {offsets = [0, 768], sizes = [8, 256], strides = [1, 1]} : vector<8x1024xf32> to vector<8x256xf32>
    %192 = arith.negf %191 : vector<8x256xf32>
    %193 = math.exp %192 : vector<8x256xf32>
    %cst_84 = arith.constant 1.000000e+00 : f32
    %194 = vector.broadcast %cst_84 : f32 to vector<8x256xf32>
    %195 = arith.addf %194, %193 : vector<8x256xf32>
    %196 = arith.divf %194, %195 : vector<8x256xf32>
    %c0_85 = arith.constant 0 : index
    %c0_86 = arith.constant 0 : index
    %197 = vector.load %arg14[%c0_85, %c0_86] : memref<8x256xf32, #tpu.memory_space<vmem>>, vector<8x256xf32>
    %198 = arith.mulf %188, %197 : vector<8x256xf32>
    %199 = arith.mulf %182, %190 : vector<8x256xf32>
    %200 = arith.addf %198, %199 : vector<8x256xf32>
    %201 = math.tanh %200 : vector<8x256xf32>
    %202 = arith.mulf %196, %201 : vector<8x256xf32>
    %c0_87 = arith.constant 0 : index
    %c0_88 = arith.constant 0 : index
    %203 = vector.load %arg14[%c0_87, %c0_88] : memref<8x256xf32, #tpu.memory_space<vmem>>, vector<8x256xf32>
    tpu.vector_store %arg14[%c0_87, %c0_88], %200 {strides = array<i32>} : memref<8x256xf32, #tpu.memory_space<vmem>>, vector<8x256xf32>,
    %c0_89 = arith.constant 0 : index
    %c0_90 = arith.constant 0 : index
    %204 = vector.load %arg13[%c0_89, %c0_90] : memref<8x256xf32, #tpu.memory_space<vmem>>, vector<8x256xf32>
    tpu.vector_store %arg13[%c0_89, %c0_90], %202 {strides = array<i32>} : memref<8x256xf32, #tpu.memory_space<vmem>>, vector<8x256xf32>,
    %205 = arith.index_cast %c4_i32 : i32 to index
    %c0_91 = arith.constant 0 : index
    %c0_92 = arith.constant 0 : index
    %206 = vector.load %arg12[%205, %c0_91, %c0_92] : memref<8x8x256xf32, #tpu.memory_space<vmem>>, vector<1x8x256xf32>
    %207 = vector.shape_cast %206 : vector<1x8x256xf32> to vector<8x256xf32>
    %208 = vector.shape_cast %202 : vector<8x256xf32> to vector<1x8x256xf32>
    tpu.vector_store %arg12[%205, %c0_91, %c0_92], %208 {strides = array<i32>} : memref<8x8x256xf32, #tpu.memory_space<vmem>>, vector<1x8x256xf32>,
    %c5_i32 = arith.constant 5 : i32
    %209 = arith.index_cast %c5_i32 : i32 to index
    %c0_93 = arith.constant 0 : index
    %c0_94 = arith.constant 0 : index
    %210 = vector.load %arg11[%209, %c0_93, %c0_94] : memref<8x8x1024xf32, #tpu.memory_space<vmem>>, vector<1x8x1024xf32>
    %211 = vector.shape_cast %210 : vector<1x8x1024xf32> to vector<8x1024xf32>
    %c0_95 = arith.constant 0 : index
    %c0_96 = arith.constant 0 : index
    %212 = vector.load %arg13[%c0_95, %c0_96] : memref<8x256xf32, #tpu.memory_space<vmem>>, vector<8x256xf32>
    %213 = arith.truncf %212 : vector<8x256xf32> to vector<8x256xbf16>
    %cst_97 = arith.constant dense<0.000000e+00> : vector<8x1024xf32>
    %214 = tpu.matmul %213, %13, %cst_97 {dimension_numbers = #tpu.dot_dimension_numbers<[1], [0], [0], [1], [0, 0, 1, 1], [], []>} : vector<8x256xbf16>, vector<256x1024xbf16>, vector<8x1024xf32> -> vector<8x1024xf32>
    %215 = arith.addf %211, %214 : vector<8x1024xf32>
    %216 = vector.extract_strided_slice %215 {offsets = [0, 0], sizes = [8, 256], strides = [1, 1]} : vector<8x1024xf32> to vector<8x256xf32>
    %217 = arith.negf %216 : vector<8x256xf32>
    %218 = math.exp %217 : vector<8x256xf32>
    %cst_98 = arith.constant 1.000000e+00 : f32
    %219 = vector.broadcast %cst_98 : f32 to vector<8x256xf32>
    %220 = arith.addf %219, %218 : vector<8x256xf32>
    %221 = arith.divf %219, %220 : vector<8x256xf32>
    %222 = vector.extract_strided_slice %215 {offsets = [0, 256], sizes = [8, 256], strides = [1, 1]} : vector<8x1024xf32> to vector<8x256xf32>
    %223 = arith.negf %222 : vector<8x256xf32>
    %224 = math.exp %223 : vector<8x256xf32>
    %cst_99 = arith.constant 1.000000e+00 : f32
    %225 = vector.broadcast %cst_99 : f32 to vector<8x256xf32>
    %226 = arith.addf %225, %224 : vector<8x256xf32>
    %227 = arith.divf %225, %226 : vector<8x256xf32>
    %228 = vector.extract_strided_slice %215 {offsets = [0, 512], sizes = [8, 256], strides = [1, 1]} : vector<8x1024xf32> to vector<8x256xf32>
    %229 = math.tanh %228 : vector<8x256xf32>
    %230 = vector.extract_strided_slice %215 {offsets = [0, 768], sizes = [8, 256], strides = [1, 1]} : vector<8x1024xf32> to vector<8x256xf32>
    %231 = arith.negf %230 : vector<8x256xf32>
    %232 = math.exp %231 : vector<8x256xf32>
    %cst_100 = arith.constant 1.000000e+00 : f32
    %233 = vector.broadcast %cst_100 : f32 to vector<8x256xf32>
    %234 = arith.addf %233, %232 : vector<8x256xf32>
    %235 = arith.divf %233, %234 : vector<8x256xf32>
    %c0_101 = arith.constant 0 : index
    %c0_102 = arith.constant 0 : index
    %236 = vector.load %arg14[%c0_101, %c0_102] : memref<8x256xf32, #tpu.memory_space<vmem>>, vector<8x256xf32>
    %237 = arith.mulf %227, %236 : vector<8x256xf32>
    %238 = arith.mulf %221, %229 : vector<8x256xf32>
    %239 = arith.addf %237, %238 : vector<8x256xf32>
    %240 = math.tanh %239 : vector<8x256xf32>
    %241 = arith.mulf %235, %240 : vector<8x256xf32>
    %c0_103 = arith.constant 0 : index
    %c0_104 = arith.constant 0 : index
    %242 = vector.load %arg14[%c0_103, %c0_104] : memref<8x256xf32, #tpu.memory_space<vmem>>, vector<8x256xf32>
    tpu.vector_store %arg14[%c0_103, %c0_104], %239 {strides = array<i32>} : memref<8x256xf32, #tpu.memory_space<vmem>>, vector<8x256xf32>,
    %c0_105 = arith.constant 0 : index
    %c0_106 = arith.constant 0 : index
    %243 = vector.load %arg13[%c0_105, %c0_106] : memref<8x256xf32, #tpu.memory_space<vmem>>, vector<8x256xf32>
    tpu.vector_store %arg13[%c0_105, %c0_106], %241 {strides = array<i32>} : memref<8x256xf32, #tpu.memory_space<vmem>>, vector<8x256xf32>,
    %244 = arith.index_cast %c5_i32 : i32 to index
    %c0_107 = arith.constant 0 : index
    %c0_108 = arith.constant 0 : index
    %245 = vector.load %arg12[%244, %c0_107, %c0_108] : memref<8x8x256xf32, #tpu.memory_space<vmem>>, vector<1x8x256xf32>
    %246 = vector.shape_cast %245 : vector<1x8x256xf32> to vector<8x256xf32>
    %247 = vector.shape_cast %241 : vector<8x256xf32> to vector<1x8x256xf32>
    tpu.vector_store %arg12[%244, %c0_107, %c0_108], %247 {strides = array<i32>} : memref<8x8x256xf32, #tpu.memory_space<vmem>>, vector<1x8x256xf32>,
    %c6_i32 = arith.constant 6 : i32
    %248 = arith.index_cast %c6_i32 : i32 to index
    %c0_109 = arith.constant 0 : index
    %c0_110 = arith.constant 0 : index
    %249 = vector.load %arg11[%248, %c0_109, %c0_110] : memref<8x8x1024xf32, #tpu.memory_space<vmem>>, vector<1x8x1024xf32>
    %250 = vector.shape_cast %249 : vector<1x8x1024xf32> to vector<8x1024xf32>
    %c0_111 = arith.constant 0 : index
    %c0_112 = arith.constant 0 : index
    %251 = vector.load %arg13[%c0_111, %c0_112] : memref<8x256xf32, #tpu.memory_space<vmem>>, vector<8x256xf32>
    %252 = arith.truncf %251 : vector<8x256xf32> to vector<8x256xbf16>
    %cst_113 = arith.constant dense<0.000000e+00> : vector<8x1024xf32>
    %253 = tpu.matmul %252, %13, %cst_113 {dimension_numbers = #tpu.dot_dimension_numbers<[1], [0], [0], [1], [0, 0, 1, 1], [], []>} : vector<8x256xbf16>, vector<256x1024xbf16>, vector<8x1024xf32> -> vector<8x1024xf32>
    %254 = arith.addf %250, %253 : vector<8x1024xf32>
    %255 = vector.extract_strided_slice %254 {offsets = [0, 0], sizes = [8, 256], strides = [1, 1]} : vector<8x1024xf32> to vector<8x256xf32>
    %256 = arith.negf %255 : vector<8x256xf32>
    %257 = math.exp %256 : vector<8x256xf32>
    %cst_114 = arith.constant 1.000000e+00 : f32
    %258 = vector.broadcast %cst_114 : f32 to vector<8x256xf32>
    %259 = arith.addf %258, %257 : vector<8x256xf32>
    %260 = arith.divf %258, %259 : vector<8x256xf32>
    %261 = vector.extract_strided_slice %254 {offsets = [0, 256], sizes = [8, 256], strides = [1, 1]} : vector<8x1024xf32> to vector<8x256xf32>
    %262 = arith.negf %261 : vector<8x256xf32>
    %263 = math.exp %262 : vector<8x256xf32>
    %cst_115 = arith.constant 1.000000e+00 : f32
    %264 = vector.broadcast %cst_115 : f32 to vector<8x256xf32>
    %265 = arith.addf %264, %263 : vector<8x256xf32>
    %266 = arith.divf %264, %265 : vector<8x256xf32>
    %267 = vector.extract_strided_slice %254 {offsets = [0, 512], sizes = [8, 256], strides = [1, 1]} : vector<8x1024xf32> to vector<8x256xf32>
    %268 = math.tanh %267 : vector<8x256xf32>
    %269 = vector.extract_strided_slice %254 {offsets = [0, 768], sizes = [8, 256], strides = [1, 1]} : vector<8x1024xf32> to vector<8x256xf32>
    %270 = arith.negf %269 : vector<8x256xf32>
    %271 = math.exp %270 : vector<8x256xf32>
    %cst_116 = arith.constant 1.000000e+00 : f32
    %272 = vector.broadcast %cst_116 : f32 to vector<8x256xf32>
    %273 = arith.addf %272, %271 : vector<8x256xf32>
    %274 = arith.divf %272, %273 : vector<8x256xf32>
    %c0_117 = arith.constant 0 : index
    %c0_118 = arith.constant 0 : index
    %275 = vector.load %arg14[%c0_117, %c0_118] : memref<8x256xf32, #tpu.memory_space<vmem>>, vector<8x256xf32>
    %276 = arith.mulf %266, %275 : vector<8x256xf32>
    %277 = arith.mulf %260, %268 : vector<8x256xf32>
    %278 = arith.addf %276, %277 : vector<8x256xf32>
    %279 = math.tanh %278 : vector<8x256xf32>
    %280 = arith.mulf %274, %279 : vector<8x256xf32>
    %c0_119 = arith.constant 0 : index
    %c0_120 = arith.constant 0 : index
    %281 = vector.load %arg14[%c0_119, %c0_120] : memref<8x256xf32, #tpu.memory_space<vmem>>, vector<8x256xf32>
    tpu.vector_store %arg14[%c0_119, %c0_120], %278 {strides = array<i32>} : memref<8x256xf32, #tpu.memory_space<vmem>>, vector<8x256xf32>,
    %c0_121 = arith.constant 0 : index
    %c0_122 = arith.constant 0 : index
    %282 = vector.load %arg13[%c0_121, %c0_122] : memref<8x256xf32, #tpu.memory_space<vmem>>, vector<8x256xf32>
    tpu.vector_store %arg13[%c0_121, %c0_122], %280 {strides = array<i32>} : memref<8x256xf32, #tpu.memory_space<vmem>>, vector<8x256xf32>,
    %283 = arith.index_cast %c6_i32 : i32 to index
    %c0_123 = arith.constant 0 : index
    %c0_124 = arith.constant 0 : index
    %284 = vector.load %arg12[%283, %c0_123, %c0_124] : memref<8x8x256xf32, #tpu.memory_space<vmem>>, vector<1x8x256xf32>
    %285 = vector.shape_cast %284 : vector<1x8x256xf32> to vector<8x256xf32>
    %286 = vector.shape_cast %280 : vector<8x256xf32> to vector<1x8x256xf32>
    tpu.vector_store %arg12[%283, %c0_123, %c0_124], %286 {strides = array<i32>} : memref<8x8x256xf32, #tpu.memory_space<vmem>>, vector<1x8x256xf32>,
    %c7_i32 = arith.constant 7 : i32
    %287 = arith.index_cast %c7_i32 : i32 to index
    %c0_125 = arith.constant 0 : index
    %c0_126 = arith.constant 0 : index
    %288 = vector.load %arg11[%287, %c0_125, %c0_126] : memref<8x8x1024xf32, #tpu.memory_space<vmem>>, vector<1x8x1024xf32>
    %289 = vector.shape_cast %288 : vector<1x8x1024xf32> to vector<8x1024xf32>
    %c0_127 = arith.constant 0 : index
    %c0_128 = arith.constant 0 : index
    %290 = vector.load %arg13[%c0_127, %c0_128] : memref<8x256xf32, #tpu.memory_space<vmem>>, vector<8x256xf32>
    %291 = arith.truncf %290 : vector<8x256xf32> to vector<8x256xbf16>
    %cst_129 = arith.constant dense<0.000000e+00> : vector<8x1024xf32>
    %292 = tpu.matmul %291, %13, %cst_129 {dimension_numbers = #tpu.dot_dimension_numbers<[1], [0], [0], [1], [0, 0, 1, 1], [], []>} : vector<8x256xbf16>, vector<256x1024xbf16>, vector<8x1024xf32> -> vector<8x1024xf32>
    %293 = arith.addf %289, %292 : vector<8x1024xf32>
    %294 = vector.extract_strided_slice %293 {offsets = [0, 0], sizes = [8, 256], strides = [1, 1]} : vector<8x1024xf32> to vector<8x256xf32>
    %295 = arith.negf %294 : vector<8x256xf32>
    %296 = math.exp %295 : vector<8x256xf32>
    %cst_130 = arith.constant 1.000000e+00 : f32
    %297 = vector.broadcast %cst_130 : f32 to vector<8x256xf32>
    %298 = arith.addf %297, %296 : vector<8x256xf32>
    %299 = arith.divf %297, %298 : vector<8x256xf32>
    %300 = vector.extract_strided_slice %293 {offsets = [0, 256], sizes = [8, 256], strides = [1, 1]} : vector<8x1024xf32> to vector<8x256xf32>
    %301 = arith.negf %300 : vector<8x256xf32>
    %302 = math.exp %301 : vector<8x256xf32>
    %cst_131 = arith.constant 1.000000e+00 : f32
    %303 = vector.broadcast %cst_131 : f32 to vector<8x256xf32>
    %304 = arith.addf %303, %302 : vector<8x256xf32>
    %305 = arith.divf %303, %304 : vector<8x256xf32>
    %306 = vector.extract_strided_slice %293 {offsets = [0, 512], sizes = [8, 256], strides = [1, 1]} : vector<8x1024xf32> to vector<8x256xf32>
    %307 = math.tanh %306 : vector<8x256xf32>
    %308 = vector.extract_strided_slice %293 {offsets = [0, 768], sizes = [8, 256], strides = [1, 1]} : vector<8x1024xf32> to vector<8x256xf32>
    %309 = arith.negf %308 : vector<8x256xf32>
    %310 = math.exp %309 : vector<8x256xf32>
    %cst_132 = arith.constant 1.000000e+00 : f32
    %311 = vector.broadcast %cst_132 : f32 to vector<8x256xf32>
    %312 = arith.addf %311, %310 : vector<8x256xf32>
    %313 = arith.divf %311, %312 : vector<8x256xf32>
    %c0_133 = arith.constant 0 : index
    %c0_134 = arith.constant 0 : index
    %314 = vector.load %arg14[%c0_133, %c0_134] : memref<8x256xf32, #tpu.memory_space<vmem>>, vector<8x256xf32>
    %315 = arith.mulf %305, %314 : vector<8x256xf32>
    %316 = arith.mulf %299, %307 : vector<8x256xf32>
    %317 = arith.addf %315, %316 : vector<8x256xf32>
    %318 = math.tanh %317 : vector<8x256xf32>
    %319 = arith.mulf %313, %318 : vector<8x256xf32>
    %c0_135 = arith.constant 0 : index
    %c0_136 = arith.constant 0 : index
    %320 = vector.load %arg14[%c0_135, %c0_136] : memref<8x256xf32, #tpu.memory_space<vmem>>, vector<8x256xf32>
    tpu.vector_store %arg14[%c0_135, %c0_136], %317 {strides = array<i32>} : memref<8x256xf32, #tpu.memory_space<vmem>>, vector<8x256xf32>,
    %c0_137 = arith.constant 0 : index
    %c0_138 = arith.constant 0 : index
    %321 = vector.load %arg13[%c0_137, %c0_138] : memref<8x256xf32, #tpu.memory_space<vmem>>, vector<8x256xf32>
    tpu.vector_store %arg13[%c0_137, %c0_138], %319 {strides = array<i32>} : memref<8x256xf32, #tpu.memory_space<vmem>>, vector<8x256xf32>,
    %322 = arith.index_cast %c7_i32 : i32 to index
    %c0_139 = arith.constant 0 : index
    %c0_140 = arith.constant 0 : index
    %323 = vector.load %arg12[%322, %c0_139, %c0_140] : memref<8x8x256xf32, #tpu.memory_space<vmem>>, vector<1x8x256xf32>
    %324 = vector.shape_cast %323 : vector<1x8x256xf32> to vector<8x256xf32>
    %325 = vector.shape_cast %319 : vector<8x256xf32> to vector<1x8x256xf32>
    tpu.vector_store %arg12[%322, %c0_139, %c0_140], %325 {strides = array<i32>} : memref<8x8x256xf32, #tpu.memory_space<vmem>>, vector<1x8x256xf32>,
    %c8_i32 = arith.constant 8 : i32
    %c0_141 = arith.constant 0 : index
    %c0_142 = arith.constant 0 : index
    %c0_143 = arith.constant 0 : index
    %326 = vector.load %arg12[%c0_141, %c0_142, %c0_143] : memref<8x8x256xf32, #tpu.memory_space<vmem>>, vector<8x8x256xf32>
    %cst_144 = arith.constant 0.000000e+00 : f32
    %327 = vector.broadcast %cst_144 : f32 to vector<8x8x256xf32>
    %328 = arith.maximumf %326, %327 : vector<8x8x256xf32>
    %329 = vector.shape_cast %328 : vector<8x8x256xf32> to vector<64x256xf32>
    %330 = arith.truncf %329 : vector<64x256xf32> to vector<64x256xbf16>
    %c0_145 = arith.constant 0 : index
    %c0_146 = arith.constant 0 : index
    %331 = vector.load %arg6[%c0_145, %c0_146] : memref<256x128xbf16, #tpu.memory_space<vmem>>, vector<256x128xbf16>
    %cst_147 = arith.constant dense<0.000000e+00> : vector<64x128xf32>
    %332 = tpu.matmul %330, %331, %cst_147 {dimension_numbers = #tpu.dot_dimension_numbers<[1], [0], [0], [1], [0, 0, 1, 1], [], []>} : vector<64x256xbf16>, vector<256x128xbf16>, vector<64x128xf32> -> vector<64x128xf32>
    %c0_148 = arith.constant 0 : index
    %c0_149 = arith.constant 0 : index
    %333 = vector.load %arg7[%c0_148, %c0_149] : memref<1x128xf32, #tpu.memory_space<vmem>>, vector<1x128xf32>
    %334 = vector.broadcast %333 : vector<1x128xf32> to vector<64x128xf32>
    %335 = arith.addf %332, %334 : vector<64x128xf32>
    %cst_150 = arith.constant 0.000000e+00 : f32
    %336 = vector.broadcast %cst_150 : f32 to vector<64x128xf32>
    %337 = arith.maximumf %335, %336 : vector<64x128xf32>
    %338 = arith.truncf %337 : vector<64x128xf32> to vector<64x128xbf16>
    %c0_151 = arith.constant 0 : index
    %c0_152 = arith.constant 0 : index
    %339 = vector.load %arg8[%c0_151, %c0_152] : memref<128x128xbf16, #tpu.memory_space<vmem>>, vector<128x128xbf16>
    %cst_153 = arith.constant dense<0.000000e+00> : vector<64x128xf32>
    %340 = tpu.matmul %338, %339, %cst_153 {dimension_numbers = #tpu.dot_dimension_numbers<[1], [0], [0], [1], [0, 0, 1, 1], [], []>} : vector<64x128xbf16>, vector<128x128xbf16>, vector<64x128xf32> -> vector<64x128xf32>
    %c0_154 = arith.constant 0 : index
    %c0_155 = arith.constant 0 : index
    %341 = vector.load %arg9[%c0_154, %c0_155] : memref<1x128xf32, #tpu.memory_space<vmem>>, vector<1x128xf32>
    %342 = vector.broadcast %341 : vector<1x128xf32> to vector<64x128xf32>
    %343 = arith.addf %340, %342 : vector<64x128xf32>
    %344 = vector.shape_cast %343 : vector<64x128xf32> to vector<8x8x128xf32>
    %c0_156 = arith.constant 0 : index
    %c0_157 = arith.constant 0 : index
    %c0_158 = arith.constant 0 : index
    %345 = vector.load %arg10[%c0_156, %c0_157, %c0_158] : memref<8x8x128xf32, #tpu.memory_space<vmem>>, vector<8x8x128xf32>
    tpu.vector_store %arg10[%c0_156, %c0_157, %c0_158], %344 {strides = array<i32>} : memref<8x8x128xf32, #tpu.memory_space<vmem>>, vector<8x8x128xf32>,
    return
  }
  func.func @transform_0(%arg0: i32, %arg1: i32) -> (i32, i32, i32) {
    %c0_i32 = arith.constant 0 : i32
    %c0_i32_0 = arith.constant 0 : i32
    return %arg1, %arg0, %c0_i32 : i32, i32, i32
  }
  func.func @transform_1(%arg0: i32, %arg1: i32) -> (i32, i32) {
    %c0_i32 = arith.constant 0 : i32
    %c0_i32_0 = arith.constant 0 : i32
    %c0_i32_1 = arith.constant 0 : i32
    return %c0_i32, %c0_i32_0 : i32, i32
  }
  func.func @transform_2(%arg0: i32, %arg1: i32) -> (i32, i32) {
    %c0_i32 = arith.constant 0 : i32
    %c0_i32_0 = arith.constant 0 : i32
    %c0_i32_1 = arith.constant 0 : i32
    return %c0_i32, %c0_i32_0 : i32, i32
  }
  func.func @transform_3(%arg0: i32, %arg1: i32) -> (i32, i32) {
    %c0_i32 = arith.constant 0 : i32
    %c0_i32_0 = arith.constant 0 : i32
    %c0_i32_1 = arith.constant 0 : i32
    return %c0_i32, %c0_i32_0 : i32, i32
  }
  func.func @transform_4(%arg0: i32, %arg1: i32) -> (i32, i32) {
    %c0_i32 = arith.constant 0 : i32
    %c0_i32_0 = arith.constant 0 : i32
    %c0_i32_1 = arith.constant 0 : i32
    return %c0_i32, %c0_i32_0 : i32, i32
  }
  func.func @transform_5(%arg0: i32, %arg1: i32) -> (i32, i32) {
    %c0_i32 = arith.constant 0 : i32
    %c0_i32_0 = arith.constant 0 : i32
    %c0_i32_1 = arith.constant 0 : i32
    return %c0_i32, %c0_i32_0 : i32, i32
  }
  func.func @transform_6(%arg0: i32, %arg1: i32) -> (i32, i32) {
    %c0_i32 = arith.constant 0 : i32
    %c0_i32_0 = arith.constant 0 : i32
    %c0_i32_1 = arith.constant 0 : i32
    return %c0_i32, %c0_i32_0 : i32, i32
  }
  func.func @transform_7(%arg0: i32, %arg1: i32) -> (i32, i32) {
    %c0_i32 = arith.constant 0 : i32
    %c0_i32_0 = arith.constant 0 : i32
    %c0_i32_1 = arith.constant 0 : i32
    return %c0_i32, %c0_i32_0 : i32, i32
  }
  func.func @transform_8(%arg0: i32, %arg1: i32) -> (i32, i32, i32) {
    %c0_i32 = arith.constant 0 : i32
    %c0_i32_0 = arith.constant 0 : i32
    return %arg1, %arg0, %c0_i32 : i32, i32, i32
  }
}

</mosaic_0001>

<llo_original>
// kernel: tpu_custom_call.1
$region0: #{tpu_custom_call.1}
  #allocation0 [shape = 'u32[]', space=smem, size = 0x4, offset = 0x4, fixed_abs, tag = 'smem constant byte address 0x4 - core index']
  #allocation1 [shape = 'u32[72,128]{1,0:T(1,128)}', space=vmem, size = 0x9000, scoped, tag = 'internal scratch']
  #allocation2 [shape = 'f32[8,8,1024]{2,1,0:T(8,128)}', space=vmem, size = 0x40000, scoped, tag = 'scratch operand']
  #allocation3 [shape = 'f32[8,8,256]{2,1,0:T(8,128)}', space=vmem, size = 0x10000, scoped, tag = 'scratch operand']
  #allocation4 [shape = 'f32[8,256]{1,0:T(8,128)}', space=vmem, size = 0x2000, scoped, tag = 'scratch operand']
  #allocation5 [shape = 'f32[8,256]{1,0:T(8,128)}', space=vmem, size = 0x2000, scoped, tag = 'scratch operand']
  %s0 = inlined_call_operand.hbm [shape: f32[8,8,32], index: 0, kind: input, shape index: {}]
  %s1 = inlined_call_operand.hbm [shape: bf16[32,1024], index: 1, kind: input, shape index: {}]
  %s2 = inlined_call_operand.hbm [shape: bf16[256,1024], index: 2, kind: input, shape index: {}]
  %s3 = inlined_call_operand.hbm [shape: f32[1,1024], index: 3, kind: input, shape index: {}]
  %s4 = inlined_call_operand.hbm [shape: bf16[256,128], index: 4, kind: input, shape index: {}]
  %s5 = inlined_call_operand.vmem [shape: f32[1,128], index: 5, kind: input, shape index: {}]
  %s6 = inlined_call_operand.hbm [shape: bf16[128,128], index: 6, kind: input, shape index: {}]
  %s7 = inlined_call_operand.vmem [shape: f32[1,128], index: 7, kind: input, shape index: {}]
  %s8 = inlined_call_operand.hbm [shape: f32[8,8,128], index: 8, kind: output, shape index: {}]
  %s9 = sld [smem:[#allocation0]]
  $region70: #{tpu_custom_call.1} parent=0
    _
  %s11 = ssub.s32 1, %s9
  %s12 = scalar_select 0, %s11, %s9
  $region1: #{tpu_custom_call.1} parent=0
    #allocation6 [shape = 'u8[32768]{0}', space=vmem, size = 0x8000, scoped, tag = 'input window, operand 0, single buffered']
    #allocation7 [shape = 's32[1]{0}', space=sflag, size = 0x4, scoped, tag = 'scoped memory for tpu_custom_call.1']
    #allocation8 [shape = 's32[1]{0}', space=sflag, size = 0x4, scoped, tag = 'scoped memory for tpu_custom_call.1']
    #allocation9 [shape = 'u8[65536]{0}', space=vmem, size = 0x10000, scoped, tag = 'input window, operand 1, single buffered']
    #allocation10 [shape = 's32[1]{0}', space=sflag, size = 0x4, scoped, tag = 'scoped memory for tpu_custom_call.1']
    #allocation11 [shape = 'u8[524288]{0}', space=vmem, size = 0x80000, scoped, tag = 'input window, operand 2, single buffered']
    #allocation12 [shape = 'u8[4096]{0}', space=vmem, size = 0x1000, scoped, tag = 'input window, operand 3, single buffered']
    #allocation13 [shape = 's32[1]{0}', space=sflag, size = 0x4, scoped, tag = 'scoped memory for tpu_custom_call.1']
    #allocation14 [shape = 'u8[65536]{0}', space=vmem, size = 0x10000, scoped, tag = 'input window, operand 4, single buffered']
    #allocation15 [shape = 'u8[32768]{0}', space=vmem, size = 0x8000, scoped, tag = 'input window, operand 6, single buffered']
    #allocation16 [shape = 's32[1]{0}', space=sflag, size = 0x4, scoped, tag = 'scoped memory for tpu_custom_call.1']
    #allocation17 [shape = 'u8[32768]{0}', space=vmem, size = 0x8000, scoped, tag = 'output window, operand 0, single buffered']
    %13 = vsyncpa [#allocation7], 0
    %14 = vsyncpa [#allocation10], 0
    %15 = vsyncpa [#allocation13], 0
    %16 = vsyncpa [#allocation16], 0
    %17 = vsyncpa [#allocation8], 0
    // Predicated region
    $region2: #{tpu_custom_call.1} parent=1 // pred_check
      _
    $region3: #{tpu_custom_call.1} parent=1 // pred_check_branch
      %19 = sbr.rel (0) target = $region5
    $region4: #{tpu_custom_call.1} parent=1 // pred_region
      %21 = vsyncadd [#allocation7], 0
      %s22 = sshll.u32 %s0, 4
      %s23 = int_to_ptr.hbm [resolvable:$true] %s22
      %s24 = sshll.u32 [#allocation6], 4
      %s25 = int_to_ptr.vmem [resolvable:$true] %s24
      %30 = dma.hbm_to_vmem [thread:$0]  %s23, 1024, %s25, [#allocation7], 128, 128, 8
    $region5: #{tpu_custom_call.1} parent=1 // pred_fallthru
      _
    // Predicated region
    $region6: #{tpu_custom_call.1} parent=1 // pred_check
      _
    $region7: #{tpu_custom_call.1} parent=1 // pred_check_branch
      %32 = sbr.rel (0) target = $region9
    $region8: #{tpu_custom_call.1} parent=1 // pred_region
      %34 = vsyncadd [#allocation10], 0
      %s35 = sshll.u32 %s1, 4
      %s36 = int_to_ptr.hbm [resolvable:$true] %s35
      %s37 = sshll.u32 [#allocation9], 4
      %s38 = int_to_ptr.vmem [resolvable:$true] %s37
      %43 = dma.hbm_to_vmem [thread:$0]  %s36, 2048, %s38, [#allocation10], 512, 512, 32
    $region9: #{tpu_custom_call.1} parent=1 // pred_fallthru
      _
    // Predicated region
    $region10: #{tpu_custom_call.1} parent=1 // pred_check
      _
    $region11: #{tpu_custom_call.1} parent=1 // pred_check_branch
      %45 = sbr.rel (0) target = $region13
    $region12: #{tpu_custom_call.1} parent=1 // pred_region
      %47 = vsyncadd [#allocation10], 0
      %s48 = sshll.u32 %s2, 4
      %s49 = int_to_ptr.hbm [resolvable:$true] %s48
      %s50 = sshll.u32 [#allocation11], 4
      %s51 = int_to_ptr.vmem [resolvable:$true] %s50
      %56 = dma.hbm_to_vmem [thread:$0]  %s49, 16384, %s51, [#allocation10], 512, 512, 32
    $region13: #{tpu_custom_call.1} parent=1 // pred_fallthru
      _
    // Predicated region
    $region14: #{tpu_custom_call.1} parent=1 // pred_check
      _
    $region15: #{tpu_custom_call.1} parent=1 // pred_check_branch
      %58 = sbr.rel (0) target = $region17
    $region16: #{tpu_custom_call.1} parent=1 // pred_region
      %60 = vsyncadd [#allocation13], 0
      %s62 = sshll.u32 %s3, 4
      %s63 = int_to_ptr.hbm [resolvable:$true] %s62
      %s64 = sshll.u32 [#allocation12], 4
      %s65 = int_to_ptr.vmem [resolvable:$true] %s64
      %67 = dma.hbm_to_vmem [thread:$0]  %s63, 128, %s65, [#allocation13]
    $region17: #{tpu_custom_call.1} parent=1 // pred_fallthru
      _
    // Predicated region
    $region18: #{tpu_custom_call.1} parent=1 // pred_check
      _
    $region19: #{tpu_custom_call.1} parent=1 // pred_check_branch
      %69 = sbr.rel (0) target = $region21
    $region20: #{tpu_custom_call.1} parent=1 // pred_region
      %71 = vsyncadd [#allocation13], 0
      %s72 = sshll.u32 %s4, 4
      %s73 = int_to_ptr.hbm [resolvable:$true] %s72
      %s74 = sshll.u32 [#allocation14], 4
      %s75 = int_to_ptr.vmem [resolvable:$true] %s74
      %80 = dma.hbm_to_vmem [thread:$0]  %s73, 2048, %s75, [#allocation13], 64, 64, 4
    $region21: #{tpu_custom_call.1} parent=1 // pred_fallthru
      _
    // Predicated region
    $region22: #{tpu_custom_call.1} parent=1 // pred_check
      _
    $region23: #{tpu_custom_call.1} parent=1 // pred_check_branch
      %82 = sbr.rel (0) target = $region25
    $region24: #{tpu_custom_call.1} parent=1 // pred_region
      _
    $region25: #{tpu_custom_call.1} parent=1 // pred_fallthru
      _
    // Predicated region
    $region26: #{tpu_custom_call.1} parent=1 // pred_check
      _
    $region27: #{tpu_custom_call.1} parent=1 // pred_check_branch
      %84 = sbr.rel (0) target = $region29
    $region28: #{tpu_custom_call.1} parent=1 // pred_region
      %86 = vsyncadd [#allocation16], 0
      %s87 = sshll.u32 %s6, 4
      %s88 = int_to_ptr.hbm [resolvable:$true] %s87
      %s89 = sshll.u32 [#allocation15], 4
      %s90 = int_to_ptr.vmem [resolvable:$true] %s89
      %95 = dma.hbm_to_vmem [thread:$0]  %s88, 1024, %s90, [#allocation16], 64, 64, 4
    $region29: #{tpu_custom_call.1} parent=1 // pred_fallthru
      _
    // Predicated region
    $region30: #{tpu_custom_call.1} parent=1 // pred_check
      _
    $region31: #{tpu_custom_call.1} parent=1 // pred_check_branch
      %97 = sbr.rel (0) target = $region33
    $region32: #{tpu_custom_call.1} parent=1 // pred_region
      _
    $region33: #{tpu_custom_call.1} parent=1 // pred_fallthru
      _
    // Predicated region
    $region34: #{tpu_custom_call.1} parent=1 // pred_check
      _
    $region35: #{tpu_custom_call.1} parent=1 // pred_check_branch
      %99 = sbr.rel (0) target = $region37
    $region36: #{tpu_custom_call.1} parent=1 // pred_region
      %101 = dma.done [#allocation7], 1024
    $region37: #{tpu_custom_call.1} parent=1 // pred_fallthru
      _
    // Predicated region
    $region38: #{tpu_custom_call.1} parent=1 // pred_check
      _
    $region39: #{tpu_custom_call.1} parent=1 // pred_check_branch
      %103 = sbr.rel (0) target = $region41
    $region40: #{tpu_custom_call.1} parent=1 // pred_region
      %105 = dma.done [#allocation10], 2048
    $region41: #{tpu_custom_call.1} parent=1 // pred_fallthru
      _
    // Predicated region
    $region42: #{tpu_custom_call.1} parent=1 // pred_check
      _
    $region43: #{tpu_custom_call.1} parent=1 // pred_check_branch
      %107 = sbr.rel (0) target = $region45
    $region44: #{tpu_custom_call.1} parent=1 // pred_region
      %109 = dma.done [#allocation10], 16384
    $region45: #{tpu_custom_call.1} parent=1 // pred_fallthru
      _
    // Predicated region
    $region46: #{tpu_custom_call.1} parent=1 // pred_check
      _
    $region47: #{tpu_custom_call.1} parent=1 // pred_check_branch
      %111 = sbr.rel (0) target = $region49
    $region48: #{tpu_custom_call.1} parent=1 // pred_region
      %113 = dma.done [#allocation13], 128
    $region49: #{tpu_custom_call.1} parent=1 // pred_fallthru
      _
    // Predicated region
    $region50: #{tpu_custom_call.1} parent=1 // pred_check
      _
    $region51: #{tpu_custom_call.1} parent=1 // pred_check_branch
      %115 = sbr.rel (0) target = $region53
    $region52: #{tpu_custom_call.1} parent=1 // pred_region
      %117 = dma.done [#allocation13], 2048
    $region53: #{tpu_custom_call.1} parent=1 // pred_fallthru
      _
    // Predicated region
    $region54: #{tpu_custom_call.1} parent=1 // pred_check
      _
    $region55: #{tpu_custom_call.1} parent=1 // pred_check_branch
      %119 = sbr.rel (0) target = $region57
    $region56: #{tpu_custom_call.1} parent=1 // pred_region
      %121 = dma.done [#allocation16], 1024
    $region57: #{tpu_custom_call.1} parent=1 // pred_fallthru
      _
    %p123 = scmp.eq.s32.totalorder 0, 0
    // Predicated region
    $region58: #{tpu_custom_call.1} parent=1 // pred_check
      %p124 = pneg %p123
    $region59: #{tpu_custom_call.1} parent=1 // pred_check_branch
      %126 = sbr.rel (%p124) target = $region61
    $region60: #{tpu_custom_call.1} parent=1 // pred_region
      %127 = vst [vmem:[#allocation4] sm:$0xff] 0.0
      %128 = vst [vmem:[#allocation4 + $0x8] sm:$0xff] 0.0
      %129 = vst [vmem:[#allocation5] sm:$0xff] 0.0
      %130 = vst [vmem:[#allocation5 + $0x8] sm:$0xff] 0.0
    $region61: #{tpu_custom_call.1} parent=1 // pred_fallthru
      _
    %v131 = vld [vmem:[#allocation6] sm:$0xff]
    %v132 = vld [vmem:[#allocation6 + $0x8] sm:$0xff]
    %v133 = vld [vmem:[#allocation6 + $0x10] sm:$0xff]
    %v134 = vld [vmem:[#allocation6 + $0x18] sm:$0xff]
    %v135 = vld [vmem:[#allocation6 + $0x20] sm:$0xff]
    %v136 = vld [vmem:[#allocation6 + $0x28] sm:$0xff]
    %v137 = vld [vmem:[#allocation6 + $0x30] sm:$0xff]
    %v138 = vld [vmem:[#allocation6 + $0x38] sm:$0xff]
    %v139 = vpack.c.bf16 %v132, %v131
    %v140 = vpack.c.bf16 %v134, %v133
    %v141 = vpack.c.bf16 %v136, %v135
    %v142 = vpack.c.bf16 %v138, %v137
    %v143 = vld [vmem:[#allocation9] sm:$0xff]
    %v144 = vld [vmem:[#allocation9 + $0x8] sm:$0xff]
    %v145 = vld [vmem:[#allocation9 + $0x10] sm:$0xff]
    %v146 = vld [vmem:[#allocation9 + $0x18] sm:$0xff]
    %v147 = vld [vmem:[#allocation9 + $0x20] sm:$0xff]
    %v148 = vld [vmem:[#allocation9 + $0x28] sm:$0xff]
    %v149 = vld [vmem:[#allocation9 + $0x30] sm:$0xff]
    %v150 = vld [vmem:[#allocation9 + $0x38] sm:$0xff]
    %v151 = vld [vmem:[#allocation9 + $0x40] sm:$0xff]
    %v152 = vld [vmem:[#allocation9 + $0x48] sm:$0xff]
    %v153 = vld [vmem:[#allocation9 + $0x50] sm:$0xff]
    %v154 = vld [vmem:[#allocation9 + $0x58] sm:$0xff]
    %v155 = vld [vmem:[#allocation9 + $0x60] sm:$0xff]
    %v156 = vld [vmem:[#allocation9 + $0x68] sm:$0xff]
    %v157 = vld [vmem:[#allocation9 + $0x70] sm:$0xff]
    %v158 = vld [vmem:[#allocation9 + $0x78] sm:$0xff]
    %v159 = vld [vmem:[#allocation12] sm:$0xff]
    %v161 = vperm.slane %v159, 0
    %v162 = vperm.slane %v159, 1
    %v163 = vperm.slane %v159, 2
    %v164 = vperm.slane %v159, 3
    %v165 = vperm.slane %v159, 4
    %v166 = vperm.slane %v159, 5
    %v167 = vperm.slane %v159, 6
    %v168 = vperm.slane %v159, 7
    %v193 = vunpack.c.l.b16 %v143
    %v194 = vunpack.c.h.b16 %v143
    %v195 = vunpack.c.l.b16 %v144
    %v196 = vunpack.c.h.b16 %v144
    %v197 = vunpack.c.l.b16 %v145
    %v198 = vunpack.c.h.b16 %v145
    %v199 = vunpack.c.l.b16 %v146
    %v200 = vunpack.c.h.b16 %v146
    %v201 = vunpack.c.l.b16 %v147
    %v202 = vunpack.c.h.b16 %v147
    %v203 = vunpack.c.l.b16 %v148
    %v204 = vunpack.c.h.b16 %v148
    %v205 = vunpack.c.l.b16 %v149
    %v206 = vunpack.c.h.b16 %v149
    %v207 = vunpack.c.l.b16 %v150
    %v208 = vunpack.c.h.b16 %v150
    %v209 = vunpack.c.l.b16 %v151
    %v210 = vunpack.c.h.b16 %v151
    %v211 = vunpack.c.l.b16 %v152
    %v212 = vunpack.c.h.b16 %v152
    %v213 = vunpack.c.l.b16 %v153
    %v214 = vunpack.c.h.b16 %v153
    %v215 = vunpack.c.l.b16 %v154
    %v216 = vunpack.c.h.b16 %v154
    %v217 = vunpack.c.l.b16 %v155
    %v218 = vunpack.c.h.b16 %v155
    %v219 = vunpack.c.l.b16 %v156
    %v220 = vunpack.c.h.b16 %v156
    %v221 = vunpack.c.l.b16 %v157
    %v222 = vunpack.c.h.b16 %v157
    %v223 = vunpack.c.l.b16 %v158
    %v224 = vunpack.c.h.b16 %v158
    %v225 = vpack.c.b16 %v201, %v193
    %v226 = vpack.c.b16 %v202, %v194
    %v227 = vpack.c.b16 %v203, %v195
    %v228 = vpack.c.b16 %v204, %v196
    %v229 = vpack.c.b16 %v205, %v197
    %v230 = vpack.c.b16 %v206, %v198
    %v231 = vpack.c.b16 %v207, %v199
    %v232 = vpack.c.b16 %v208, %v200
    %v233 = vpack.c.b16 %v217, %v209
    %v234 = vpack.c.b16 %v218, %v210
    %v235 = vpack.c.b16 %v219, %v211
    %v236 = vpack.c.b16 %v220, %v212
    %v237 = vpack.c.b16 %v221, %v213
    %v238 = vpack.c.b16 %v222, %v214
    %v239 = vpack.c.b16 %v223, %v215
    %v240 = vpack.c.b16 %v224, %v216
    %vm257 = vcmask 261120
    %v259 = vsel %vm257, %v139, 0
    %v262 = vsel %vm257, %v140, 0
    %v265 = vsel %vm257, %v141, 0
    %v268 = vsel %vm257, %v142, 0
    %270 = vmatpush.bf16.msra.mxu0 0
    %271 = vmatpush.bf16.msra.mxu0 0
    %272 = vmatpush.bf16.msra.mxu0 0
    %273 = vmatpush.bf16.msra.mxu0 0
    %274 = vmatpush.bf16.msra.mxu0 0
    %275 = vmatpush.bf16.msra.mxu0 0
    %276 = vmatpush.bf16.msra.mxu0 %v233
    %277 = vmatpush.bf16.msra.mxu0 %v225
    %278 = vmatmul.bf16.gmra.mxu0 %v259
    %v279 = vpop.f32.mrf.mxu0
    %v280 = vadd.f32 %v161, %v279
    %v281 = vpop.f32.mrf.mxu0
    %v282 = vadd.f32 %v161, %v281
    %283 = vmatmul.bf16.gmra.mxu0 %v262
    %v284 = vpop.f32.mrf.mxu0
    %v285 = vadd.f32 %v161, %v284
    %v286 = vpop.f32.mrf.mxu0
    %v287 = vadd.f32 %v161, %v286
    %288 = vmatmul.bf16.gmra.mxu0 %v265
    %v289 = vpop.f32.mrf.mxu0
    %v290 = vadd.f32 %v161, %v289
    %v291 = vpop.f32.mrf.mxu0
    %v292 = vadd.f32 %v161, %v291
    %293 = vmatmul.bf16.gmra.mxu0 %v268
    %v294 = vpop.f32.mrf.mxu0
    %v295 = vadd.f32 %v161, %v294
    %v296 = vpop.f32.mrf.mxu0
    %v297 = vadd.f32 %v161, %v296
    %298 = vdwg.mxu0
    %299 = vmatpush.bf16.msra.mxu0 0
    %300 = vmatpush.bf16.msra.mxu0 0
    %301 = vmatpush.bf16.msra.mxu0 0
    %302 = vmatpush.bf16.msra.mxu0 0
    %303 = vmatpush.bf16.msra.mxu0 0
    %304 = vmatpush.bf16.msra.mxu0 0
    %305 = vmatpush.bf16.msra.mxu0 %v234
    %306 = vmatpush.bf16.msra.mxu0 %v226
    %307 = vmatmul.bf16.gmra.mxu0 %v259
    %v308 = vpop.f32.mrf.mxu0
    %v309 = vadd.f32 %v162, %v308
    %v310 = vpop.f32.mrf.mxu0
    %v311 = vadd.f32 %v162, %v310
    %312 = vmatmul.bf16.gmra.mxu0 %v262
    %v313 = vpop.f32.mrf.mxu0
    %v314 = vadd.f32 %v162, %v313
    %v315 = vpop.f32.mrf.mxu0
    %v316 = vadd.f32 %v162, %v315
    %317 = vmatmul.bf16.gmra.mxu0 %v265
    %v318 = vpop.f32.mrf.mxu0
    %v319 = vadd.f32 %v162, %v318
    %v320 = vpop.f32.mrf.mxu0
    %v321 = vadd.f32 %v162, %v320
    %322 = vmatmul.bf16.gmra.mxu0 %v268
    %v323 = vpop.f32.mrf.mxu0
    %v324 = vadd.f32 %v162, %v323
    %v325 = vpop.f32.mrf.mxu0
    %v326 = vadd.f32 %v162, %v325
    %327 = vdwg.mxu0
    %328 = vmatpush.bf16.msra.mxu0 0
    %329 = vmatpush.bf16.msra.mxu0 0
    %330 = vmatpush.bf16.msra.mxu0 0
    %331 = vmatpush.bf16.msra.mxu0 0
    %332 = vmatpush.bf16.msra.mxu0 0
    %333 = vmatpush.bf16.msra.mxu0 0
    %334 = vmatpush.bf16.msra.mxu0 %v235
    %335 = vmatpush.bf16.msra.mxu0 %v227
    %336 = vmatmul.bf16.gmra.mxu0 %v259
    %v337 = vpop.f32.mrf.mxu0
    %v338 = vadd.f32 %v163, %v337
    %v339 = vpop.f32.mrf.mxu0
    %v340 = vadd.f32 %v163, %v339
    %341 = vmatmul.bf16.gmra.mxu0 %v262
    %v342 = vpop.f32.mrf.mxu0
    %v343 = vadd.f32 %v163, %v342
    %v344 = vpop.f32.mrf.mxu0
    %v345 = vadd.f32 %v163, %v344
    %346 = vmatmul.bf16.gmra.mxu0 %v265
    %v347 = vpop.f32.mrf.mxu0
    %v348 = vadd.f32 %v163, %v347
    %v349 = vpop.f32.mrf.mxu0
    %v350 = vadd.f32 %v163, %v349
    %351 = vmatmul.bf16.gmra.mxu0 %v268
    %v352 = vpop.f32.mrf.mxu0
    %v353 = vadd.f32 %v163, %v352
    %v354 = vpop.f32.mrf.mxu0
    %v355 = vadd.f32 %v163, %v354
    %356 = vdwg.mxu0
    %357 = vmatpush.bf16.msra.mxu0 0
    %358 = vmatpush.bf16.msra.mxu0 0
    %359 = vmatpush.bf16.msra.mxu0 0
    %360 = vmatpush.bf16.msra.mxu0 0
    %361 = vmatpush.bf16.msra.mxu0 0
    %362 = vmatpush.bf16.msra.mxu0 0
    %363 = vmatpush.bf16.msra.mxu0 %v236
    %364 = vmatpush.bf16.msra.mxu0 %v228
    %365 = vmatmul.bf16.gmra.mxu0 %v259
    %v366 = vpop.f32.mrf.mxu0
    %v367 = vadd.f32 %v164, %v366
    %v368 = vpop.f32.mrf.mxu0
    %v369 = vadd.f32 %v164, %v368
    %370 = vmatmul.bf16.gmra.mxu0 %v262
    %v371 = vpop.f32.mrf.mxu0
    %v372 = vadd.f32 %v164, %v371
    %v373 = vpop.f32.mrf.mxu0
    %v374 = vadd.f32 %v164, %v373
    %375 = vmatmul.bf16.gmra.mxu0 %v265
    %v376 = vpop.f32.mrf.mxu0
    %v377 = vadd.f32 %v164, %v376
    %v378 = vpop.f32.mrf.mxu0
    %v379 = vadd.f32 %v164, %v378
    %380 = vmatmul.bf16.gmra.mxu0 %v268
    %v381 = vpop.f32.mrf.mxu0
    %v382 = vadd.f32 %v164, %v381
    %v383 = vpop.f32.mrf.mxu0
    %v384 = vadd.f32 %v164, %v383
    %385 = vdwg.mxu0
    %386 = vmatpush.bf16.msra.mxu0 0
    %387 = vmatpush.bf16.msra.mxu0 0
    %388 = vmatpush.bf16.msra.mxu0 0
    %389 = vmatpush.bf16.msra.mxu0 0
    %390 = vmatpush.bf16.msra.mxu0 0
    %391 = vmatpush.bf16.msra.mxu0 0
    %392 = vmatpush.bf16.msra.mxu0 %v237
    %393 = vmatpush.bf16.msra.mxu0 %v229
    %394 = vmatmul.bf16.gmra.mxu0 %v259
    %v395 = vpop.f32.mrf.mxu0
    %v396 = vadd.f32 %v165, %v395
    %v397 = vpop.f32.mrf.mxu0
    %v398 = vadd.f32 %v165, %v397
    %399 = vmatmul.bf16.gmra.mxu0 %v262
    %v400 = vpop.f32.mrf.mxu0
    %v401 = vadd.f32 %v165, %v400
    %v402 = vpop.f32.mrf.mxu0
    %v403 = vadd.f32 %v165, %v402
    %404 = vmatmul.bf16.gmra.mxu0 %v265
    %v405 = vpop.f32.mrf.mxu0
    %v406 = vadd.f32 %v165, %v405
    %v407 = vpop.f32.mrf.mxu0
    %v408 = vadd.f32 %v165, %v407
    %409 = vmatmul.bf16.gmra.mxu0 %v268
    %v410 = vpop.f32.mrf.mxu0
    %v411 = vadd.f32 %v165, %v410
    %v412 = vpop.f32.mrf.mxu0
    %v413 = vadd.f32 %v165, %v412
    %414 = vdwg.mxu0
    %415 = vmatpush.bf16.msra.mxu0 0
    %416 = vmatpush.bf16.msra.mxu0 0
    %417 = vmatpush.bf16.msra.mxu0 0
    %418 = vmatpush.bf16.msra.mxu0 0
    %419 = vmatpush.bf16.msra.mxu0 0
    %420 = vmatpush.bf16.msra.mxu0 0
    %421 = vmatpush.bf16.msra.mxu0 %v238
    %422 = vmatpush.bf16.msra.mxu0 %v230
    %423 = vmatmul.bf16.gmra.mxu0 %v259
    %v424 = vpop.f32.mrf.mxu0
    %v425 = vadd.f32 %v166, %v424
    %v426 = vpop.f32.mrf.mxu0
    %v427 = vadd.f32 %v166, %v426
    %428 = vmatmul.bf16.gmra.mxu0 %v262
    %v429 = vpop.f32.mrf.mxu0
    %v430 = vadd.f32 %v166, %v429
    %v431 = vpop.f32.mrf.mxu0
    %v432 = vadd.f32 %v166, %v431
    %433 = vmatmul.bf16.gmra.mxu0 %v265
    %v434 = vpop.f32.mrf.mxu0
    %v435 = vadd.f32 %v166, %v434
    %v436 = vpop.f32.mrf.mxu0
    %v437 = vadd.f32 %v166, %v436
    %438 = vmatmul.bf16.gmra.mxu0 %v268
    %v439 = vpop.f32.mrf.mxu0
    %v440 = vadd.f32 %v166, %v439
    %v441 = vpop.f32.mrf.mxu0
    %v442 = vadd.f32 %v166, %v441
    %443 = vdwg.mxu0
    %444 = vmatpush.bf16.msra.mxu0 0
    %445 = vmatpush.bf16.msra.mxu0 0
    %446 = vmatpush.bf16.msra.mxu0 0
    %447 = vmatpush.bf16.msra.mxu0 0
    %448 = vmatpush.bf16.msra.mxu0 0
    %449 = vmatpush.bf16.msra.mxu0 0
    %450 = vmatpush.bf16.msra.mxu0 %v239
    %451 = vmatpush.bf16.msra.mxu0 %v231
    %452 = vmatmul.bf16.gmra.mxu0 %v259
    %v453 = vpop.f32.mrf.mxu0
    %v454 = vadd.f32 %v167, %v453
    %v455 = vpop.f32.mrf.mxu0
    %v456 = vadd.f32 %v167, %v455
    %457 = vmatmul.bf16.gmra.mxu0 %v262
    %v458 = vpop.f32.mrf.mxu0
    %v459 = vadd.f32 %v167, %v458
    %v460 = vpop.f32.mrf.mxu0
    %v461 = vadd.f32 %v167, %v460
    %462 = vmatmul.bf16.gmra.mxu0 %v265
    %v463 = vpop.f32.mrf.mxu0
    %v464 = vadd.f32 %v167, %v463
    %v465 = vpop.f32.mrf.mxu0
    %v466 = vadd.f32 %v167, %v465
    %467 = vmatmul.bf16.gmra.mxu0 %v268
    %v468 = vpop.f32.mrf.mxu0
    %v469 = vadd.f32 %v167, %v468
    %v470 = vpop.f32.mrf.mxu0
    %v471 = vadd.f32 %v167, %v470
    %472 = vdwg.mxu0
    %473 = vmatpush.bf16.msra.mxu0 0
    %474 = vmatpush.bf16.msra.mxu0 0
    %475 = vmatpush.bf16.msra.mxu0 0
    %476 = vmatpush.bf16.msra.mxu0 0
    %477 = vmatpush.bf16.msra.mxu0 0
    %478 = vmatpush.bf16.msra.mxu0 0
    %479 = vmatpush.bf16.msra.mxu0 %v240
    %480 = vmatpush.bf16.msra.mxu0 %v232
    %481 = vmatmul.bf16.gmra.mxu0 %v259
    %v482 = vpop.f32.mrf.mxu0
    %v483 = vadd.f32 %v168, %v482
    %v484 = vpop.f32.mrf.mxu0
    %v485 = vadd.f32 %v168, %v484
    %486 = vmatmul.bf16.gmra.mxu0 %v262
    %v487 = vpop.f32.mrf.mxu0
    %v488 = vadd.f32 %v168, %v487
    %v489 = vpop.f32.mrf.mxu0
    %v490 = vadd.f32 %v168, %v489
    %491 = vmatmul.bf16.gmra.mxu0 %v265
    %v492 = vpop.f32.mrf.mxu0
    %v493 = vadd.f32 %v168, %v492
    %v494 = vpop.f32.mrf.mxu0
    %v495 = vadd.f32 %v168, %v494
    %496 = vmatmul.bf16.gmra.mxu0 %v268
    %v497 = vpop.f32.mrf.mxu0
    %v498 = vadd.f32 %v168, %v497
    %v499 = vpop.f32.mrf.mxu0
    %v500 = vadd.f32 %v168, %v499
    %501 = vdwg.mxu0
    %502 = vst [vmem:[#allocation2] sm:$0xff] %v280
    %503 = vst [vmem:[#allocation2 + $0x8] sm:$0xff] %v309
    %504 = vst [vmem:[#allocation2 + $0x10] sm:$0xff] %v338
    %505 = vst [vmem:[#allocation2 + $0x18] sm:$0xff] %v367
    %506 = vst [vmem:[#allocation2 + $0x20] sm:$0xff] %v396
    %507 = vst [vmem:[#allocation2 + $0x28] sm:$0xff] %v425
    %508 = vst [vmem:[#allocation2 + $0x30] sm:$0xff] %v454
    %509 = vst [vmem:[#allocation2 + $0x38] sm:$0xff] %v483
    %510 = vst [vmem:[#allocation2 + $0x40] sm:$0xff] %v282
    %511 = vst [vmem:[#allocation2 + $0x48] sm:$0xff] %v311
    %512 = vst [vmem:[#allocation2 + $0x50] sm:$0xff] %v340
    %513 = vst [vmem:[#allocation2 + $0x58] sm:$0xff] %v369
    %514 = vst [vmem:[#allocation2 + $0x60] sm:$0xff] %v398
    %515 = vst [vmem:[#allocation2 + $0x68] sm:$0xff] %v427
    %516 = vst [vmem:[#allocation2 + $0x70] sm:$0xff] %v456
    %517 = vst [vmem:[#allocation2 + $0x78] sm:$0xff] %v485
    %518 = vst [vmem:[#allocation2 + $0x80] sm:$0xff] %v285
    %519 = vst [vmem:[#allocation2 + $0x88] sm:$0xff] %v314
    %520 = vst [vmem:[#allocation2 + $0x90] sm:$0xff] %v343
    %521 = vst [vmem:[#allocation2 + $0x98] sm:$0xff] %v372
    %522 = vst [vmem:[#allocation2 + $0xa0] sm:$0xff] %v401
    %523 = vst [vmem:[#allocation2 + $0xa8] sm:$0xff] %v430
    %524 = vst [vmem:[#allocation2 + $0xb0] sm:$0xff] %v459
    %525 = vst [vmem:[#allocation2 + $0xb8] sm:$0xff] %v488
    %526 = vst [vmem:[#allocation2 + $0xc0] sm:$0xff] %v287
    %527 = vst [vmem:[#allocation2 + $0xc8] sm:$0xff] %v316
    %528 = vst [vmem:[#allocation2 + $0xd0] sm:$0xff] %v345
    %529 = vst [vmem:[#allocation2 + $0xd8] sm:$0xff] %v374
    %530 = vst [vmem:[#allocation2 + $0xe0] sm:$0xff] %v403
    %531 = vst [vmem:[#allocation2 + $0xe8] sm:$0xff] %v432
    %532 = vst [vmem:[#allocation2 + $0xf0] sm:$0xff] %v461
    %533 = vst [vmem:[#allocation2 + $0xf8] sm:$0xff] %v490
    %534 = vst [vmem:[#allocation2 + $0x100] sm:$0xff] %v290
    %535 = vst [vmem:[#allocation2 + $0x108] sm:$0xff] %v319
    %536 = vst [vmem:[#allocation2 + $0x110] sm:$0xff] %v348
    %537 = vst [vmem:[#allocation2 + $0x118] sm:$0xff] %v377
    %538 = vst [vmem:[#allocation2 + $0x120] sm:$0xff] %v406
    %539 = vst [vmem:[#allocation2 + $0x128] sm:$0xff] %v435
    %540 = vst [vmem:[#allocation2 + $0x130] sm:$0xff] %v464
    %541 = vst [vmem:[#allocation2 + $0x138] sm:$0xff] %v493
    %542 = vst [vmem:[#allocation2 + $0x140] sm:$0xff] %v292
    %543 = vst [vmem:[#allocation2 + $0x148] sm:$0xff] %v321
    %544 = vst [vmem:[#allocation2 + $0x150] sm:$0xff] %v350
    %545 = vst [vmem:[#allocation2 + $0x158] sm:$0xff] %v379
    %546 = vst [vmem:[#allocation2 + $0x160] sm:$0xff] %v408
    %547 = vst [vmem:[#allocation2 + $0x168] sm:$0xff] %v437
    %548 = vst [vmem:[#allocation2 + $0x170] sm:$0xff] %v466
    %549 = vst [vmem:[#allocation2 + $0x178] sm:$0xff] %v495
    %550 = vst [vmem:[#allocation2 + $0x180] sm:$0xff] %v295
    %551 = vst [vmem:[#allocation2 + $0x188] sm:$0xff] %v324
    %552 = vst [vmem:[#allocation2 + $0x190] sm:$0xff] %v353
    %553 = vst [vmem:[#allocation2 + $0x198] sm:$0xff] %v382
    %554 = vst [vmem:[#allocation2 + $0x1a0] sm:$0xff] %v411
    %555 = vst [vmem:[#allocation2 + $0x1a8] sm:$0xff] %v440
    %556 = vst [vmem:[#allocation2 + $0x1b0] sm:$0xff] %v469
    %557 = vst [vmem:[#allocation2 + $0x1b8] sm:$0xff] %v498
    %558 = vst [vmem:[#allocation2 + $0x1c0] sm:$0xff] %v297
    %559 = vst [vmem:[#allocation2 + $0x1c8] sm:$0xff] %v326
    %560 = vst [vmem:[#allocation2 + $0x1d0] sm:$0xff] %v355
    %561 = vst [vmem:[#allocation2 + $0x1d8] sm:$0xff] %v384
    %562 = vst [vmem:[#allocation2 + $0x1e0] sm:$0xff] %v413
    %563 = vst [vmem:[#allocation2 + $0x1e8] sm:$0xff] %v442
    %564 = vst [vmem:[#allocation2 + $0x1f0] sm:$0xff] %v471
    %565 = vst [vmem:[#allocation2 + $0x1f8] sm:$0xff] %v500
    %v566 = vld [vmem:[#allocation11] sm:$0xff]
    %v567 = vld [vmem:[#allocation11 + $0x8] sm:$0xff]
    %v568 = vld [vmem:[#allocation11 + $0x10] sm:$0xff]
    %v569 = vld [vmem:[#allocation11 + $0x18] sm:$0xff]
    %v570 = vld [vmem:[#allocation11 + $0x20] sm:$0xff]
    %v571 = vld [vmem:[#allocation11 + $0x28] sm:$0xff]
    %v572 = vld [vmem:[#allocation11 + $0x30] sm:$0xff]
    %v573 = vld [vmem:[#allocation11 + $0x38] sm:$0xff]
    %v574 = vld [vmem:[#allocation11 + $0x40] sm:$0xff]
    %v575 = vld [vmem:[#allocation11 + $0x48] sm:$0xff]
    %v576 = vld [vmem:[#allocation11 + $0x50] sm:$0xff]
    %v577 = vld [vmem:[#allocation11 + $0x58] sm:$0xff]
    %v578 = vld [vmem:[#allocation11 + $0x60] sm:$0xff]
    %v579 = vld [vmem:[#allocation11 + $0x68] sm:$0xff]
    %v580 = vld [vmem:[#allocation11 + $0x70] sm:$0xff]
    %v581 = vld [vmem:[#allocation11 + $0x78] sm:$0xff]
    %v582 = vld [vmem:[#allocation11 + $0x80] sm:$0xff]
    %v583 = vld [vmem:[#allocation11 + $0x88] sm:$0xff]
    %v584 = vld [vmem:[#allocation11 + $0x90] sm:$0xff]
    %v585 = vld [vmem:[#allocation11 + $0x98] sm:$0xff]
    %v586 = vld [vmem:[#allocation11 + $0xa0] sm:$0xff]
    %v587 = vld [vmem:[#allocation11 + $0xa8] sm:$0xff]
    %v588 = vld [vmem:[#allocation11 + $0xb0] sm:$0xff]
    %v589 = vld [vmem:[#allocation11 + $0xb8] sm:$0xff]
    %v590 = vld [vmem:[#allocation11 + $0xc0] sm:$0xff]
    %v591 = vld [vmem:[#allocation11 + $0xc8] sm:$0xff]
    %v592 = vld [vmem:[#allocation11 + $0xd0] sm:$0xff]
    %v593 = vld [vmem:[#allocation11 + $0xd8] sm:$0xff]
    %v594 = vld [vmem:[#allocation11 + $0xe0] sm:$0xff]
    %v595 = vld [vmem:[#allocation11 + $0xe8] sm:$0xff]
    %v596 = vld [vmem:[#allocation11 + $0xf0] sm:$0xff]
    %v597 = vld [vmem:[#allocation11 + $0xf8] sm:$0xff]
    %v598 = vld [vmem:[#allocation11 + $0x100] sm:$0xff]
    %v599 = vld [vmem:[#allocation11 + $0x108] sm:$0xff]
    %v600 = vld [vmem:[#allocation11 + $0x110] sm:$0xff]
    %v601 = vld [vmem:[#allocation11 + $0x118] sm:$0xff]
    %v602 = vld [vmem:[#allocation11 + $0x120] sm:$0xff]
    %v603 = vld [vmem:[#allocation11 + $0x128] sm:$0xff]
    %v604 = vld [vmem:[#allocation11 + $0x130] sm:$0xff]
    %v605 = vld [vmem:[#allocation11 + $0x138] sm:$0xff]
    %v606 = vld [vmem:[#allocation11 + $0x140] sm:$0xff]
    %v607 = vld [vmem:[#allocation11 + $0x148] sm:$0xff]
    %v608 = vld [vmem:[#allocation11 + $0x150] sm:$0xff]
    %v609 = vld [vmem:[#allocation11 + $0x158] sm:$0xff]
    %v610 = vld [vmem:[#allocation11 + $0x160] sm:$0xff]
    %v611 = vld [vmem:[#allocation11 + $0x168] sm:$0xff]
    %v612 = vld [vmem:[#allocation11 + $0x170] sm:$0xff]
    %v613 = vld [vmem:[#allocation11 + $0x178] sm:$0xff]
    %v614 = vld [vmem:[#allocation11 + $0x180] sm:$0xff]
    %v615 = vld [vmem:[#allocation11 + $0x188] sm:$0xff]
    %v616 = vld [vmem:[#allocation11 + $0x190] sm:$0xff]
    %v617 = vld [vmem:[#allocation11 + $0x198] sm:$0xff]
    %v618 = vld [vmem:[#allocation11 + $0x1a0] sm:$0xff]
    %v619 = vld [vmem:[#allocation11 + $0x1a8] sm:$0xff]
    %v620 = vld [vmem:[#allocation11 + $0x1b0] sm:$0xff]
    %v621 = vld [vmem:[#allocation11 + $0x1b8] sm:$0xff]
    %v622 = vld [vmem:[#allocation11 + $0x1c0] sm:$0xff]
    %v623 = vld [vmem:[#allocation11 + $0x1c8] sm:$0xff]
    %v624 = vld [vmem:[#allocation11 + $0x1d0] sm:$0xff]
    %v625 = vld [vmem:[#allocation11 + $0x1d8] sm:$0xff]
    %v626 = vld [vmem:[#allocation11 + $0x1e0] sm:$0xff]
    %v627 = vld [vmem:[#allocation11 + $0x1e8] sm:$0xff]
    %v628 = vld [vmem:[#allocation11 + $0x1f0] sm:$0xff]
    %v629 = vld [vmem:[#allocation11 + $0x1f8] sm:$0xff]
    %v630 = vld [vmem:[#allocation11 + $0x200] sm:$0xff]
    %v631 = vld [vmem:[#allocation11 + $0x208] sm:$0xff]
    %v632 = vld [vmem:[#allocation11 + $0x210] sm:$0xff]
    %v633 = vld [vmem:[#allocation11 + $0x218] sm:$0xff]
    %v634 = vld [vmem:[#allocation11 + $0x220] sm:$0xff]
    %v635 = vld [vmem:[#allocation11 + $0x228] sm:$0xff]
    %v636 = vld [vmem:[#allocation11 + $0x230] sm:$0xff]
    %v637 = vld [vmem:[#allocation11 + $0x238] sm:$0xff]
    %v638 = vld [vmem:[#allocation11 + $0x240] sm:$0xff]
    %v639 = vld [vmem:[#allocation11 + $0x248] sm:$0xff]
    %v640 = vld [vmem:[#allocation11 + $0x250] sm:$0xff]
    %v641 = vld [vmem:[#allocation11 + $0x258] sm:$0xff]
    %v642 = vld [vmem:[#allocation11 + $0x260] sm:$0xff]
    %v643 = vld [vmem:[#allocation11 + $0x268] sm:$0xff]
    %v644 = vld [vmem:[#allocation11 + $0x270] sm:$0xff]
    %v645 = vld [vmem:[#allocation11 + $0x278] sm:$0xff]
    %v646 = vld [vmem:[#allocation11 + $0x280] sm:$0xff]
    %v647 = vld [vmem:[#allocation11 + $0x288] sm:$0xff]
    %v648 = vld [vmem:[#allocation11 + $0x290] sm:$0xff]
    %v649 = vld [vmem:[#allocation11 + $0x298] sm:$0xff]
    %v650 = vld [vmem:[#allocation11 + $0x2a0] sm:$0xff]
    %v651 = vld [vmem:[#allocation11 + $0x2a8] sm:$0xff]
    %v652 = vld [vmem:[#allocation11 + $0x2b0] sm:$0xff]
    %v653 = vld [vmem:[#allocation11 + $0x2b8] sm:$0xff]
    %v654 = vld [vmem:[#allocation11 + $0x2c0] sm:$0xff]
    %v655 = vld [vmem:[#allocation11 + $0x2c8] sm:$0xff]
    %v656 = vld [vmem:[#allocation11 + $0x2d0] sm:$0xff]
    %v657 = vld [vmem:[#allocation11 + $0x2d8] sm:$0xff]
    %v658 = vld [vmem:[#allocation11 + $0x2e0] sm:$0xff]
    %v659 = vld [vmem:[#allocation11 + $0x2e8] sm:$0xff]
    %v660 = vld [vmem:[#allocation11 + $0x2f0] sm:$0xff]
    %v661 = vld [vmem:[#allocation11 + $0x2f8] sm:$0xff]
    %v662 = vld [vmem:[#allocation11 + $0x300] sm:$0xff]
    %v663 = vld [vmem:[#allocation11 + $0x308] sm:$0xff]
    %v664 = vld [vmem:[#allocation11 + $0x310] sm:$0xff]
    %v665 = vld [vmem:[#allocation11 + $0x318] sm:$0xff]
    %v666 = vld [vmem:[#allocation11 + $0x320] sm:$0xff]
    %v667 = vld [vmem:[#allocation11 + $0x328] sm:$0xff]
    %v668 = vld [vmem:[#allocation11 + $0x330] sm:$0xff]
    %v669 = vld [vmem:[#allocation11 + $0x338] sm:$0xff]
    %v670 = vld [vmem:[#allocation11 + $0x340] sm:$0xff]
    %v671 = vld [vmem:[#allocation11 + $0x348] sm:$0xff]
    %v672 = vld [vmem:[#allocation11 + $0x350] sm:$0xff]
    %v673 = vld [vmem:[#allocation11 + $0x358] sm:$0xff]
    %v674 = vld [vmem:[#allocation11 + $0x360] sm:$0xff]
    %v675 = vld [vmem:[#allocation11 + $0x368] sm:$0xff]
    %v676 = vld [vmem:[#allocation11 + $0x370] sm:$0xff]
    %v677 = vld [vmem:[#allocation11 + $0x378] sm:$0xff]
    %v678 = vld [vmem:[#allocation11 + $0x380] sm:$0xff]
    %v679 = vld [vmem:[#allocation11 + $0x388] sm:$0xff]
    %v680 = vld [vmem:[#allocation11 + $0x390] sm:$0xff]
    %v681 = vld [vmem:[#allocation11 + $0x398] sm:$0xff]
    %v682 = vld [vmem:[#allocation11 + $0x3a0] sm:$0xff]
    %v683 = vld [vmem:[#allocation11 + $0x3a8] sm:$0xff]
    %v684 = vld [vmem:[#allocation11 + $0x3b0] sm:$0xff]
    %v685 = vld [vmem:[#allocation11 + $0x3b8] sm:$0xff]
    %v686 = vld [vmem:[#allocation11 + $0x3c0] sm:$0xff]
    %v687 = vld [vmem:[#allocation11 + $0x3c8] sm:$0xff]
    %v688 = vld [vmem:[#allocation11 + $0x3d0] sm:$0xff]
    %v689 = vld [vmem:[#allocation11 + $0x3d8] sm:$0xff]
    %v690 = vld [vmem:[#allocation11 + $0x3e0] sm:$0xff]
    %v691 = vld [vmem:[#allocation11 + $0x3e8] sm:$0xff]
    %v692 = vld [vmem:[#allocation11 + $0x3f0] sm:$0xff]
    %v693 = vld [vmem:[#allocation11 + $0x3f8] sm:$0xff]
    %v694 = vld [vmem:[#allocation2] sm:$0xff]
    %v695 = vld [vmem:[#allocation2 + $0x8] sm:$0xff]
    %v696 = vld [vmem:[#allocation2 + $0x10] sm:$0xff]
    %v697 = vld [vmem:[#allocation2 + $0x18] sm:$0xff]
    %v698 = vld [vmem:[#allocation2 + $0x20] sm:$0xff]
    %v699 = vld [vmem:[#allocation2 + $0x28] sm:$0xff]
    %v700 = vld [vmem:[#allocation2 + $0x30] sm:$0xff]
    %v701 = vld [vmem:[#allocation2 + $0x38] sm:$0xff]
    %v702 = vld [vmem:[#allocation4] sm:$0xff]
    %v703 = vld [vmem:[#allocation4 + $0x8] sm:$0xff]
    %v704 = vpack.c.bf16 %v702, %v702
    %v705 = vpack.c.bf16 %v703, %v703
    %v834 = vunpack.c.l.b16 %v566
    %v835 = vunpack.c.h.b16 %v566
    %v836 = vunpack.c.l.b16 %v567
    %v837 = vunpack.c.h.b16 %v567
    %v838 = vunpack.c.l.b16 %v568
    %v839 = vunpack.c.h.b16 %v568
    %v840 = vunpack.c.l.b16 %v569
    %v841 = vunpack.c.h.b16 %v569
    %v842 = vunpack.c.l.b16 %v570
    %v843 = vunpack.c.h.b16 %v570
    %v844 = vunpack.c.l.b16 %v571
    %v845 = vunpack.c.h.b16 %v571
    %v846 = vunpack.c.l.b16 %v572
    %v847 = vunpack.c.h.b16 %v572
    %v848 = vunpack.c.l.b16 %v573
    %v849 = vunpack.c.h.b16 %v573
    %v850 = vunpack.c.l.b16 %v574
    %v851 = vunpack.c.h.b16 %v574
    %v852 = vunpack.c.l.b16 %v575
    %v853 = vunpack.c.h.b16 %v575
    %v854 = vunpack.c.l.b16 %v576
    %v855 = vunpack.c.h.b16 %v576
    %v856 = vunpack.c.l.b16 %v577
    %v857 = vunpack.c.h.b16 %v577
    %v858 = vunpack.c.l.b16 %v578
    %v859 = vunpack.c.h.b16 %v578
    %v860 = vunpack.c.l.b16 %v579
    %v861 = vunpack.c.h.b16 %v579
    %v862 = vunpack.c.l.b16 %v580
    %v863 = vunpack.c.h.b16 %v580
    %v864 = vunpack.c.l.b16 %v581
    %v865 = vunpack.c.h.b16 %v581
    %v866 = vunpack.c.l.b16 %v582
    %v867 = vunpack.c.h.b16 %v582
    %v868 = vunpack.c.l.b16 %v583
    %v869 = vunpack.c.h.b16 %v583
    %v870 = vunpack.c.l.b16 %v584
    %v871 = vunpack.c.h.b16 %v584
    %v872 = vunpack.c.l.b16 %v585
    %v873 = vunpack.c.h.b16 %v585
    %v874 = vunpack.c.l.b16 %v586
    %v875 = vunpack.c.h.b16 %v586
    %v876 = vunpack.c.l.b16 %v587
    %v877 = vunpack.c.h.b16 %v587
    %v878 = vunpack.c.l.b16 %v588
    %v879 = vunpack.c.h.b16 %v588
    %v880 = vunpack.c.l.b16 %v589
    %v881 = vunpack.c.h.b16 %v589
    %v882 = vunpack.c.l.b16 %v590
    %v883 = vunpack.c.h.b16 %v590
    %v884 = vunpack.c.l.b16 %v591
    %v885 = vunpack.c.h.b16 %v591
    %v886 = vunpack.c.l.b16 %v592
    %v887 = vunpack.c.h.b16 %v592
    %v888 = vunpack.c.l.b16 %v593
    %v889 = vunpack.c.h.b16 %v593
    %v890 = vunpack.c.l.b16 %v594
    %v891 = vunpack.c.h.b16 %v594
    %v892 = vunpack.c.l.b16 %v595
    %v893 = vunpack.c.h.b16 %v595
    %v894 = vunpack.c.l.b16 %v596
    %v895 = vunpack.c.h.b16 %v596
    %v896 = vunpack.c.l.b16 %v597
    %v897 = vunpack.c.h.b16 %v597
    %v898 = vunpack.c.l.b16 %v598
    %v899 = vunpack.c.h.b16 %v598
    %v900 = vunpack.c.l.b16 %v599
    %v901 = vunpack.c.h.b16 %v599
    %v902 = vunpack.c.l.b16 %v600
    %v903 = vunpack.c.h.b16 %v600
    %v904 = vunpack.c.l.b16 %v601
    %v905 = vunpack.c.h.b16 %v601
    %v906 = vunpack.c.l.b16 %v602
    %v907 = vunpack.c.h.b16 %v602
    %v908 = vunpack.c.l.b16 %v603
    %v909 = vunpack.c.h.b16 %v603
    %v910 = vunpack.c.l.b16 %v604
    %v911 = vunpack.c.h.b16 %v604
    %v912 = vunpack.c.l.b16 %v605
    %v913 = vunpack.c.h.b16 %v605
    %v914 = vunpack.c.l.b16 %v606
    %v915 = vunpack.c.h.b16 %v606
    %v916 = vunpack.c.l.b16 %v607
    %v917 = vunpack.c.h.b16 %v607
    %v918 = vunpack.c.l.b16 %v608
    %v919 = vunpack.c.h.b16 %v608
    %v920 = vunpack.c.l.b16 %v609
    %v921 = vunpack.c.h.b16 %v609
    %v922 = vunpack.c.l.b16 %v610
    %v923 = vunpack.c.h.b16 %v610
    %v924 = vunpack.c.l.b16 %v611
    %v925 = vunpack.c.h.b16 %v611
    %v926 = vunpack.c.l.b16 %v612
    %v927 = vunpack.c.h.b16 %v612
    %v928 = vunpack.c.l.b16 %v613
    %v929 = vunpack.c.h.b16 %v613
    %v930 = vunpack.c.l.b16 %v614
    %v931 = vunpack.c.h.b16 %v614
    %v932 = vunpack.c.l.b16 %v615
    %v933 = vunpack.c.h.b16 %v615
    %v934 = vunpack.c.l.b16 %v616
    %v935 = vunpack.c.h.b16 %v616
    %v936 = vunpack.c.l.b16 %v617
    %v937 = vunpack.c.h.b16 %v617
    %v938 = vunpack.c.l.b16 %v618
    %v939 = vunpack.c.h.b16 %v618
    %v940 = vunpack.c.l.b16 %v619
    %v941 = vunpack.c.h.b16 %v619
    %v942 = vunpack.c.l.b16 %v620
    %v943 = vunpack.c.h.b16 %v620
    %v944 = vunpack.c.l.b16 %v621
    %v945 = vunpack.c.h.b16 %v621
    %v946 = vunpack.c.l.b16 %v622
    %v947 = vunpack.c.h.b16 %v622
    %v948 = vunpack.c.l.b16 %v623
    %v949 = vunpack.c.h.b16 %v623
    %v950 = vunpack.c.l.b16 %v624
    %v951 = vunpack.c.h.b16 %v624
    %v952 = vunpack.c.l.b16 %v625
    %v953 = vunpack.c.h.b16 %v625
    %v954 = vunpack.c.l.b16 %v626
    %v955 = vunpack.c.h.b16 %v626
    %v956 = vunpack.c.l.b16 %v627
    %v957 = vunpack.c.h.b16 %v627
    %v958 = vunpack.c.l.b16 %v628
    %v959 = vunpack.c.h.b16 %v628
    %v960 = vunpack.c.l.b16 %v629
    %v961 = vunpack.c.h.b16 %v629
    %v962 = vunpack.c.l.b16 %v630
    %v963 = vunpack.c.h.b16 %v630
    %v964 = vunpack.c.l.b16 %v631
    %v965 = vunpack.c.h.b16 %v631
    %v966 = vunpack.c.l.b16 %v632
    %v967 = vunpack.c.h.b16 %v632
    %v968 = vunpack.c.l.b16 %v633
    %v969 = vunpack.c.h.b16 %v633
    %v970 = vunpack.c.l.b16 %v634
    %v971 = vunpack.c.h.b16 %v634
    %v972 = vunpack.c.l.b16 %v635
    %v973 = vunpack.c.h.b16 %v635
    %v974 = vunpack.c.l.b16 %v636
    %v975 = vunpack.c.h.b16 %v636
    %v976 = vunpack.c.l.b16 %v637
    %v977 = vunpack.c.h.b16 %v637
    %v978 = vunpack.c.l.b16 %v638
    %v979 = vunpack.c.h.b16 %v638
    %v980 = vunpack.c.l.b16 %v639
    %v981 = vunpack.c.h.b16 %v639
    %v982 = vunpack.c.l.b16 %v640
    %v983 = vunpack.c.h.b16 %v640
    %v984 = vunpack.c.l.b16 %v641
    %v985 = vunpack.c.h.b16 %v641
    %v986 = vunpack.c.l.b16 %v642
    %v987 = vunpack.c.h.b16 %v642
    %v988 = vunpack.c.l.b16 %v643
    %v989 = vunpack.c.h.b16 %v643
    %v990 = vunpack.c.l.b16 %v644
    %v991 = vunpack.c.h.b16 %v644
    %v992 = vunpack.c.l.b16 %v645
    %v993 = vunpack.c.h.b16 %v645
    %v994 = vunpack.c.l.b16 %v646
    %v995 = vunpack.c.h.b16 %v646
    %v996 = vunpack.c.l.b16 %v647
    %v997 = vunpack.c.h.b16 %v647
    %v998 = vunpack.c.l.b16 %v648
    %v999 = vunpack.c.h.b16 %v648
    %v1000 = vunpack.c.l.b16 %v649
    %v1001 = vunpack.c.h.b16 %v649
    %v1002 = vunpack.c.l.b16 %v650
    %v1003 = vunpack.c.h.b16 %v650
    %v1004 = vunpack.c.l.b16 %v651
    %v1005 = vunpack.c.h.b16 %v651
    %v1006 = vunpack.c.l.b16 %v652
    %v1007 = vunpack.c.h.b16 %v652
    %v1008 = vunpack.c.l.b16 %v653
    %v1009 = vunpack.c.h.b16 %v653
    %v1010 = vunpack.c.l.b16 %v654
    %v1011 = vunpack.c.h.b16 %v654
    %v1012 = vunpack.c.l.b16 %v655
    %v1013 = vunpack.c.h.b16 %v655
    %v1014 = vunpack.c.l.b16 %v656
    %v1015 = vunpack.c.h.b16 %v656
    %v1016 = vunpack.c.l.b16 %v657
    %v1017 = vunpack.c.h.b16 %v657
    %v1018 = vunpack.c.l.b16 %v658
    %v1019 = vunpack.c.h.b16 %v658
    %v1020 = vunpack.c.l.b16 %v659
    %v1021 = vunpack.c.h.b16 %v659
    %v1022 = vunpack.c.l.b16 %v660
    %v1023 = vunpack.c.h.b16 %v660
    %v1024 = vunpack.c.l.b16 %v661
    %v1025 = vunpack.c.h.b16 %v661
    %v1026 = vunpack.c.l.b16 %v662
    %v1027 = vunpack.c.h.b16 %v662
    %v1028 = vunpack.c.l.b16 %v663
    %v1029 = vunpack.c.h.b16 %v663
    %v1030 = vunpack.c.l.b16 %v664
    %v1031 = vunpack.c.h.b16 %v664
    %v1032 = vunpack.c.l.b16 %v665
    %v1033 = vunpack.c.h.b16 %v665
    %v1034 = vunpack.c.l.b16 %v666
    %v1035 = vunpack.c.h.b16 %v666
    %v1036 = vunpack.c.l.b16 %v667
    %v1037 = vunpack.c.h.b16 %v667
    %v1038 = vunpack.c.l.b16 %v668
    %v1039 = vunpack.c.h.b16 %v668
    %v1040 = vunpack.c.l.b16 %v669
    %v1041 = vunpack.c.h.b16 %v669
    %v1042 = vunpack.c.l.b16 %v670
    %v1043 = vunpack.c.h.b16 %v670
    %v1044 = vunpack.c.l.b16 %v671
    %v1045 = vunpack.c.h.b16 %v671
    %v1046 = vunpack.c.l.b16 %v672
    %v1047 = vunpack.c.h.b16 %v672
    %v1048 = vunpack.c.l.b16 %v673
    %v1049 = vunpack.c.h.b16 %v673
    %v1050 = vunpack.c.l.b16 %v674
    %v1051 = vunpack.c.h.b16 %v674
    %v1052 = vunpack.c.l.b16 %v675
    %v1053 = vunpack.c.h.b16 %v675
    %v1054 = vunpack.c.l.b16 %v676
    %v1055 = vunpack.c.h.b16 %v676
    %v1056 = vunpack.c.l.b16 %v677
    %v1057 = vunpack.c.h.b16 %v677
    %v1058 = vunpack.c.l.b16 %v678
    %v1059 = vunpack.c.h.b16 %v678
    %v1060 = vunpack.c.l.b16 %v679
    %v1061 = vunpack.c.h.b16 %v679
    %v1062 = vunpack.c.l.b16 %v680
    %v1063 = vunpack.c.h.b16 %v680
    %v1064 = vunpack.c.l.b16 %v681
    %v1065 = vunpack.c.h.b16 %v681
    %v1066 = vunpack.c.l.b16 %v682
    %v1067 = vunpack.c.h.b16 %v682
    %v1068 = vunpack.c.l.b16 %v683
    %v1069 = vunpack.c.h.b16 %v683
    %v1070 = vunpack.c.l.b16 %v684
    %v1071 = vunpack.c.h.b16 %v684
    %v1072 = vunpack.c.l.b16 %v685
    %v1073 = vunpack.c.h.b16 %v685
    %v1074 = vunpack.c.l.b16 %v686
    %v1075 = vunpack.c.h.b16 %v686
    %v1076 = vunpack.c.l.b16 %v687
    %v1077 = vunpack.c.h.b16 %v687
    %v1078 = vunpack.c.l.b16 %v688
    %v1079 = vunpack.c.h.b16 %v688
    %v1080 = vunpack.c.l.b16 %v689
    %v1081 = vunpack.c.h.b16 %v689
    %v1082 = vunpack.c.l.b16 %v690
    %v1083 = vunpack.c.h.b16 %v690
    %v1084 = vunpack.c.l.b16 %v691
    %v1085 = vunpack.c.h.b16 %v691
    %v1086 = vunpack.c.l.b16 %v692
    %v1087 = vunpack.c.h.b16 %v692
    %v1088 = vunpack.c.l.b16 %v693
    %v1089 = vunpack.c.h.b16 %v693
    %v1090 = vpack.c.b16 %v842, %v834
    %v1091 = vpack.c.b16 %v843, %v835
    %v1092 = vpack.c.b16 %v844, %v836
    %v1093 = vpack.c.b16 %v845, %v837
    %v1094 = vpack.c.b16 %v846, %v838
    %v1095 = vpack.c.b16 %v847, %v839
    %v1096 = vpack.c.b16 %v848, %v840
    %v1097 = vpack.c.b16 %v849, %v841
    %v1098 = vpack.c.b16 %v858, %v850
    %v1099 = vpack.c.b16 %v859, %v851
    %v1100 = vpack.c.b16 %v860, %v852
    %v1101 = vpack.c.b16 %v861, %v853
    %v1102 = vpack.c.b16 %v862, %v854
    %v1103 = vpack.c.b16 %v863, %v855
    %v1104 = vpack.c.b16 %v864, %v856
    %v1105 = vpack.c.b16 %v865, %v857
    %v1106 = vpack.c.b16 %v874, %v866
    %v1107 = vpack.c.b16 %v875, %v867
    %v1108 = vpack.c.b16 %v876, %v868
    %v1109 = vpack.c.b16 %v877, %v869
    %v1110 = vpack.c.b16 %v878, %v870
    %v1111 = vpack.c.b16 %v879, %v871
    %v1112 = vpack.c.b16 %v880, %v872
    %v1113 = vpack.c.b16 %v881, %v873
    %v1114 = vpack.c.b16 %v890, %v882
    %v1115 = vpack.c.b16 %v891, %v883
    %v1116 = vpack.c.b16 %v892, %v884
    %v1117 = vpack.c.b16 %v893, %v885
    %v1118 = vpack.c.b16 %v894, %v886
    %v1119 = vpack.c.b16 %v895, %v887
    %v1120 = vpack.c.b16 %v896, %v888
    %v1121 = vpack.c.b16 %v897, %v889
    %v1122 = vpack.c.b16 %v906, %v898
    %v1123 = vpack.c.b16 %v907, %v899
    %v1124 = vpack.c.b16 %v908, %v900
    %v1125 = vpack.c.b16 %v909, %v901
    %v1126 = vpack.c.b16 %v910, %v902
    %v1127 = vpack.c.b16 %v911, %v903
    %v1128 = vpack.c.b16 %v912, %v904
    %v1129 = vpack.c.b16 %v913, %v905
    %v1130 = vpack.c.b16 %v922, %v914
    %v1131 = vpack.c.b16 %v923, %v915
    %v1132 = vpack.c.b16 %v924, %v916
    %v1133 = vpack.c.b16 %v925, %v917
    %v1134 = vpack.c.b16 %v926, %v918
    %v1135 = vpack.c.b16 %v927, %v919
    %v1136 = vpack.c.b16 %v928, %v920
    %v1137 = vpack.c.b16 %v929, %v921
    %v1138 = vpack.c.b16 %v938, %v930
    %v1139 = vpack.c.b16 %v939, %v931
    %v1140 = vpack.c.b16 %v940, %v932
    %v1141 = vpack.c.b16 %v941, %v933
    %v1142 = vpack.c.b16 %v942, %v934
    %v1143 = vpack.c.b16 %v943, %v935
    %v1144 = vpack.c.b16 %v944, %v936
    %v1145 = vpack.c.b16 %v945, %v937
    %v1146 = vpack.c.b16 %v954, %v946
    %v1147 = vpack.c.b16 %v955, %v947
    %v1148 = vpack.c.b16 %v956, %v948
    %v1149 = vpack.c.b16 %v957, %v949
    %v1150 = vpack.c.b16 %v958, %v950
    %v1151 = vpack.c.b16 %v959, %v951
    %v1152 = vpack.c.b16 %v960, %v952
    %v1153 = vpack.c.b16 %v961, %v953
    %v1154 = vpack.c.b16 %v970, %v962
    %v1155 = vpack.c.b16 %v971, %v963
    %v1156 = vpack.c.b16 %v972, %v964
    %v1157 = vpack.c.b16 %v973, %v965
    %v1158 = vpack.c.b16 %v974, %v966
    %v1159 = vpack.c.b16 %v975, %v967
    %v1160 = vpack.c.b16 %v976, %v968
    %v1161 = vpack.c.b16 %v977, %v969
    %v1162 = vpack.c.b16 %v986, %v978
    %v1163 = vpack.c.b16 %v987, %v979
    %v1164 = vpack.c.b16 %v988, %v980
    %v1165 = vpack.c.b16 %v989, %v981
    %v1166 = vpack.c.b16 %v990, %v982
    %v1167 = vpack.c.b16 %v991, %v983
    %v1168 = vpack.c.b16 %v992, %v984
    %v1169 = vpack.c.b16 %v993, %v985
    %v1170 = vpack.c.b16 %v1002, %v994
    %v1171 = vpack.c.b16 %v1003, %v995
    %v1172 = vpack.c.b16 %v1004, %v996
    %v1173 = vpack.c.b16 %v1005, %v997
    %v1174 = vpack.c.b16 %v1006, %v998
    %v1175 = vpack.c.b16 %v1007, %v999
    %v1176 = vpack.c.b16 %v1008, %v1000
    %v1177 = vpack.c.b16 %v1009, %v1001
    %v1178 = vpack.c.b16 %v1018, %v1010
    %v1179 = vpack.c.b16 %v1019, %v1011
    %v1180 = vpack.c.b16 %v1020, %v1012
    %v1181 = vpack.c.b16 %v1021, %v1013
    %v1182 = vpack.c.b16 %v1022, %v1014
    %v1183 = vpack.c.b16 %v1023, %v1015
    %v1184 = vpack.c.b16 %v1024, %v1016
    %v1185 = vpack.c.b16 %v1025, %v1017
    %v1186 = vpack.c.b16 %v1034, %v1026
    %v1187 = vpack.c.b16 %v1035, %v1027
    %v1188 = vpack.c.b16 %v1036, %v1028
    %v1189 = vpack.c.b16 %v1037, %v1029
    %v1190 = vpack.c.b16 %v1038, %v1030
    %v1191 = vpack.c.b16 %v1039, %v1031
    %v1192 = vpack.c.b16 %v1040, %v1032
    %v1193 = vpack.c.b16 %v1041, %v1033
    %v1194 = vpack.c.b16 %v1050, %v1042
    %v1195 = vpack.c.b16 %v1051, %v1043
    %v1196 = vpack.c.b16 %v1052, %v1044
    %v1197 = vpack.c.b16 %v1053, %v1045
    %v1198 = vpack.c.b16 %v1054, %v1046
    %v1199 = vpack.c.b16 %v1055, %v1047
    %v1200 = vpack.c.b16 %v1056, %v1048
    %v1201 = vpack.c.b16 %v1057, %v1049
    %v1202 = vpack.c.b16 %v1066, %v1058
    %v1203 = vpack.c.b16 %v1067, %v1059
    %v1204 = vpack.c.b16 %v1068, %v1060
    %v1205 = vpack.c.b16 %v1069, %v1061
    %v1206 = vpack.c.b16 %v1070, %v1062
    %v1207 = vpack.c.b16 %v1071, %v1063
    %v1208 = vpack.c.b16 %v1072, %v1064
    %v1209 = vpack.c.b16 %v1073, %v1065
    %v1210 = vpack.c.b16 %v1082, %v1074
    %v1211 = vpack.c.b16 %v1083, %v1075
    %v1212 = vpack.c.b16 %v1084, %v1076
    %v1213 = vpack.c.b16 %v1085, %v1077
    %v1214 = vpack.c.b16 %v1086, %v1078
    %v1215 = vpack.c.b16 %v1087, %v1079
    %v1216 = vpack.c.b16 %v1088, %v1080
    %v1217 = vpack.c.b16 %v1089, %v1081
    %1346 = vmatpush.bf16.msra.mxu0 %v1146
    %1347 = vmatpush.bf16.msra.mxu0 %v1138
    %1348 = vmatpush.bf16.msra.mxu0 %v1130
    %1349 = vmatpush.bf16.msra.mxu0 %v1122
    %1350 = vmatpush.bf16.msra.mxu0 %v1114
    %1351 = vmatpush.bf16.msra.mxu0 %v1106
    %1352 = vmatpush.bf16.msra.mxu0 %v1098
    %1353 = vmatpush.bf16.msra.mxu0 %v1090
    %1354 = vmatmul.bf16.gmra.mxu0 %v704
    %v1355 = vpop.f32.mrf.mxu0
    %v1356 = vadd.f32 0.0, %v1355
    %v1357 = vpop.f32.mrf.mxu0
    %1358 = vdwg.mxu0
    %1359 = vmatpush.bf16.msra.mxu0 %v1210
    %1360 = vmatpush.bf16.msra.mxu0 %v1202
    %1361 = vmatpush.bf16.msra.mxu0 %v1194
    %1362 = vmatpush.bf16.msra.mxu0 %v1186
    %1363 = vmatpush.bf16.msra.mxu0 %v1178
    %1364 = vmatpush.bf16.msra.mxu0 %v1170
    %1365 = vmatpush.bf16.msra.mxu0 %v1162
    %1366 = vmatpush.bf16.msra.mxu0 %v1154
    %1367 = vmatmul.bf16.gmra.mxu0 %v705
    %v1368 = vpop.f32.mrf.mxu0
    %v1369 = vadd.f32 %v1356, %v1368
    %v1370 = vpop.f32.mrf.mxu0
    %1371 = vdwg.mxu0
    %1372 = vmatpush.bf16.msra.mxu0 %v1147
    %1373 = vmatpush.bf16.msra.mxu0 %v1139
    %1374 = vmatpush.bf16.msra.mxu0 %v1131
    %1375 = vmatpush.bf16.msra.mxu0 %v1123
    %1376 = vmatpush.bf16.msra.mxu0 %v1115
    %1377 = vmatpush.bf16.msra.mxu0 %v1107
    %1378 = vmatpush.bf16.msra.mxu0 %v1099
    %1379 = vmatpush.bf16.msra.mxu0 %v1091
    %1380 = vmatmul.bf16.gmra.mxu0 %v704
    %v1381 = vpop.f32.mrf.mxu0
    %v1382 = vadd.f32 0.0, %v1381
    %v1383 = vpop.f32.mrf.mxu0
    %1384 = vdwg.mxu0
    %1385 = vmatpush.bf16.msra.mxu0 %v1211
    %1386 = vmatpush.bf16.msra.mxu0 %v1203
    %1387 = vmatpush.bf16.msra.mxu0 %v1195
    %1388 = vmatpush.bf16.msra.mxu0 %v1187
    %1389 = vmatpush.bf16.msra.mxu0 %v1179
    %1390 = vmatpush.bf16.msra.mxu0 %v1171
    %1391 = vmatpush.bf16.msra.mxu0 %v1163
    %1392 = vmatpush.bf16.msra.mxu0 %v1155
    %1393 = vmatmul.bf16.gmra.mxu0 %v705
    %v1394 = vpop.f32.mrf.mxu0
    %v1395 = vadd.f32 %v1382, %v1394
    %v1396 = vpop.f32.mrf.mxu0
    %1397 = vdwg.mxu0
    %1398 = vmatpush.bf16.msra.mxu0 %v1148
    %1399 = vmatpush.bf16.msra.mxu0 %v1140
    %1400 = vmatpush.bf16.msra.mxu0 %v1132
    %1401 = vmatpush.bf16.msra.mxu0 %v1124
    %1402 = vmatpush.bf16.msra.mxu0 %v1116
    %1403 = vmatpush.bf16.msra.mxu0 %v1108
    %1404 = vmatpush.bf16.msra.mxu0 %v1100
    %1405 = vmatpush.bf16.msra.mxu0 %v1092
    %1406 = vmatmul.bf16.gmra.mxu0 %v704
    %v1407 = vpop.f32.mrf.mxu0
    %v1408 = vadd.f32 0.0, %v1407
    %v1409 = vpop.f32.mrf.mxu0
    %1410 = vdwg.mxu0
    %1411 = vmatpush.bf16.msra.mxu0 %v1212
    %1412 = vmatpush.bf16.msra.mxu0 %v1204
    %1413 = vmatpush.bf16.msra.mxu0 %v1196
    %1414 = vmatpush.bf16.msra.mxu0 %v1188
    %1415 = vmatpush.bf16.msra.mxu0 %v1180
    %1416 = vmatpush.bf16.msra.mxu0 %v1172
    %1417 = vmatpush.bf16.msra.mxu0 %v1164
    %1418 = vmatpush.bf16.msra.mxu0 %v1156
    %1419 = vmatmul.bf16.gmra.mxu0 %v705
    %v1420 = vpop.f32.mrf.mxu0
    %v1421 = vadd.f32 %v1408, %v1420
    %v1422 = vpop.f32.mrf.mxu0
    %1423 = vdwg.mxu0
    %1424 = vmatpush.bf16.msra.mxu0 %v1149
    %1425 = vmatpush.bf16.msra.mxu0 %v1141
    %1426 = vmatpush.bf16.msra.mxu0 %v1133
    %1427 = vmatpush.bf16.msra.mxu0 %v1125
    %1428 = vmatpush.bf16.msra.mxu0 %v1117
    %1429 = vmatpush.bf16.msra.mxu0 %v1109
    %1430 = vmatpush.bf16.msra.mxu0 %v1101
    %1431 = vmatpush.bf16.msra.mxu0 %v1093
    %1432 = vmatmul.bf16.gmra.mxu0 %v704
    %v1433 = vpop.f32.mrf.mxu0
    %v1434 = vadd.f32 0.0, %v1433
    %v1435 = vpop.f32.mrf.mxu0
    %1436 = vdwg.mxu0
    %1437 = vmatpush.bf16.msra.mxu0 %v1213
    %1438 = vmatpush.bf16.msra.mxu0 %v1205
    %1439 = vmatpush.bf16.msra.mxu0 %v1197
    %1440 = vmatpush.bf16.msra.mxu0 %v1189
    %1441 = vmatpush.bf16.msra.mxu0 %v1181
    %1442 = vmatpush.bf16.msra.mxu0 %v1173
    %1443 = vmatpush.bf16.msra.mxu0 %v1165
    %1444 = vmatpush.bf16.msra.mxu0 %v1157
    %1445 = vmatmul.bf16.gmra.mxu0 %v705
    %v1446 = vpop.f32.mrf.mxu0
    %v1447 = vadd.f32 %v1434, %v1446
    %v1448 = vpop.f32.mrf.mxu0
    %1449 = vdwg.mxu0
    %1450 = vmatpush.bf16.msra.mxu0 %v1150
    %1451 = vmatpush.bf16.msra.mxu0 %v1142
    %1452 = vmatpush.bf16.msra.mxu0 %v1134
    %1453 = vmatpush.bf16.msra.mxu0 %v1126
    %1454 = vmatpush.bf16.msra.mxu0 %v1118
    %1455 = vmatpush.bf16.msra.mxu0 %v1110
    %1456 = vmatpush.bf16.msra.mxu0 %v1102
    %1457 = vmatpush.bf16.msra.mxu0 %v1094
    %1458 = vmatmul.bf16.gmra.mxu0 %v704
    %v1459 = vpop.f32.mrf.mxu0
    %v1460 = vadd.f32 0.0, %v1459
    %v1461 = vpop.f32.mrf.mxu0
    %1462 = vdwg.mxu0
    %1463 = vmatpush.bf16.msra.mxu0 %v1214
    %1464 = vmatpush.bf16.msra.mxu0 %v1206
    %1465 = vmatpush.bf16.msra.mxu0 %v1198
    %1466 = vmatpush.bf16.msra.mxu0 %v1190
    %1467 = vmatpush.bf16.msra.mxu0 %v1182
    %1468 = vmatpush.bf16.msra.mxu0 %v1174
    %1469 = vmatpush.bf16.msra.mxu0 %v1166
    %1470 = vmatpush.bf16.msra.mxu0 %v1158
    %1471 = vmatmul.bf16.gmra.mxu0 %v705
    %v1472 = vpop.f32.mrf.mxu0
    %v1473 = vadd.f32 %v1460, %v1472
    %v1474 = vpop.f32.mrf.mxu0
    %1475 = vdwg.mxu0
    %1476 = vmatpush.bf16.msra.mxu0 %v1151
    %1477 = vmatpush.bf16.msra.mxu0 %v1143
    %1478 = vmatpush.bf16.msra.mxu0 %v1135
    %1479 = vmatpush.bf16.msra.mxu0 %v1127
    %1480 = vmatpush.bf16.msra.mxu0 %v1119
    %1481 = vmatpush.bf16.msra.mxu0 %v1111
    %1482 = vmatpush.bf16.msra.mxu0 %v1103
    %1483 = vmatpush.bf16.msra.mxu0 %v1095
    %1484 = vmatmul.bf16.gmra.mxu0 %v704
    %v1485 = vpop.f32.mrf.mxu0
    %v1486 = vadd.f32 0.0, %v1485
    %v1487 = vpop.f32.mrf.mxu0
    %1488 = vdwg.mxu0
    %1489 = vmatpush.bf16.msra.mxu0 %v1215
    %1490 = vmatpush.bf16.msra.mxu0 %v1207
    %1491 = vmatpush.bf16.msra.mxu0 %v1199
    %1492 = vmatpush.bf16.msra.mxu0 %v1191
    %1493 = vmatpush.bf16.msra.mxu0 %v1183
    %1494 = vmatpush.bf16.msra.mxu0 %v1175
    %1495 = vmatpush.bf16.msra.mxu0 %v1167
    %1496 = vmatpush.bf16.msra.mxu0 %v1159
    %1497 = vmatmul.bf16.gmra.mxu0 %v705
    %v1498 = vpop.f32.mrf.mxu0
    %v1499 = vadd.f32 %v1486, %v1498
    %v1500 = vpop.f32.mrf.mxu0
    %1501 = vdwg.mxu0
    %1502 = vmatpush.bf16.msra.mxu0 %v1152
    %1503 = vmatpush.bf16.msra.mxu0 %v1144
    %1504 = vmatpush.bf16.msra.mxu0 %v1136
    %1505 = vmatpush.bf16.msra.mxu0 %v1128
    %1506 = vmatpush.bf16.msra.mxu0 %v1120
    %1507 = vmatpush.bf16.msra.mxu0 %v1112
    %1508 = vmatpush.bf16.msra.mxu0 %v1104
    %1509 = vmatpush.bf16.msra.mxu0 %v1096
    %1510 = vmatmul.bf16.gmra.mxu0 %v704
    %v1511 = vpop.f32.mrf.mxu0
    %v1512 = vadd.f32 0.0, %v1511
    %v1513 = vpop.f32.mrf.mxu0
    %1514 = vdwg.mxu0
    %1515 = vmatpush.bf16.msra.mxu0 %v1216
    %1516 = vmatpush.bf16.msra.mxu0 %v1208
    %1517 = vmatpush.bf16.msra.mxu0 %v1200
    %1518 = vmatpush.bf16.msra.mxu0 %v1192
    %1519 = vmatpush.bf16.msra.mxu0 %v1184
    %1520 = vmatpush.bf16.msra.mxu0 %v1176
    %1521 = vmatpush.bf16.msra.mxu0 %v1168
    %1522 = vmatpush.bf16.msra.mxu0 %v1160
    %1523 = vmatmul.bf16.gmra.mxu0 %v705
    %v1524 = vpop.f32.mrf.mxu0
    %v1525 = vadd.f32 %v1512, %v1524
    %v1526 = vpop.f32.mrf.mxu0
    %1527 = vdwg.mxu0
    %1528 = vmatpush.bf16.msra.mxu0 %v1153
    %1529 = vmatpush.bf16.msra.mxu0 %v1145
    %1530 = vmatpush.bf16.msra.mxu0 %v1137
    %1531 = vmatpush.bf16.msra.mxu0 %v1129
    %1532 = vmatpush.bf16.msra.mxu0 %v1121
    %1533 = vmatpush.bf16.msra.mxu0 %v1113
    %1534 = vmatpush.bf16.msra.mxu0 %v1105
    %1535 = vmatpush.bf16.msra.mxu0 %v1097
    %1536 = vmatmul.bf16.gmra.mxu0 %v704
    %v1537 = vpop.f32.mrf.mxu0
    %v1538 = vadd.f32 0.0, %v1537
    %v1539 = vpop.f32.mrf.mxu0
    %1540 = vdwg.mxu0
    %1541 = vmatpush.bf16.msra.mxu0 %v1217
    %1542 = vmatpush.bf16.msra.mxu0 %v1209
    %1543 = vmatpush.bf16.msra.mxu0 %v1201
    %1544 = vmatpush.bf16.msra.mxu0 %v1193
    %1545 = vmatpush.bf16.msra.mxu0 %v1185
    %1546 = vmatpush.bf16.msra.mxu0 %v1177
    %1547 = vmatpush.bf16.msra.mxu0 %v1169
    %1548 = vmatpush.bf16.msra.mxu0 %v1161
    %1549 = vmatmul.bf16.gmra.mxu0 %v705
    %v1550 = vpop.f32.mrf.mxu0
    %v1551 = vadd.f32 %v1538, %v1550
    %v1552 = vpop.f32.mrf.mxu0
    %1553 = vdwg.mxu0
    %v1554 = vadd.f32 %v694, %v1369
    %v1555 = vadd.f32 %v695, %v1395
    %v1556 = vadd.f32 %v696, %v1421
    %v1557 = vadd.f32 %v697, %v1447
    %v1558 = vadd.f32 %v698, %v1473
    %v1559 = vadd.f32 %v699, %v1499
    %v1560 = vadd.f32 %v700, %v1525
    %v1561 = vadd.f32 %v701, %v1551
    %v1562 = vxor.u32 %v1554, 2147483648
    %v1563 = vxor.u32 %v1555, 2147483648
    %v1564 = vmul.f32 %v1562, 1.442695
    %v1565 = vpow.pop %v1564
    %v1566 = vmul.f32 %v1563, 1.442695
    %v1567 = vpow.pop %v1566
    %v1568 = vadd.f32 %v1565, 1.0
    %v1569 = vadd.f32 %v1567, 1.0
    %v1570 = vrcp.pop %v1568
    %v1571 = vmul.f32 %v1568, %v1570
    %v1572 = vsub.f32 1.0, %v1571
    %v1573 = vmul.f32 %v1570, %v1572
    %v1574 = vadd.f32 %v1570, %v1573
    %vm1575 = vweird.f32 %v1568
    %vm1576 = vweird.f32 %v1570
    %vm1577 = vmor %vm1575, %vm1576
    %v1578 = vsel %vm1577, %v1570, %v1574
    %v1579 = vand.u32 2147483647, %v1568
    %vm1580 = vcmp.eq.f32.partialorder %v1579, 8.507059e+37
    %v1581 = vand.u32 %v1568, 2147483648
    %v1582 = vor.u32 1.1754944e-38, %v1581
    %v1583 = vsel %vm1580, %v1582, %v1578
    %v1584 = vmul.f32 1.0, %v1583
    %v1585 = vrcp.pop %v1569
    %v1586 = vmul.f32 %v1569, %v1585
    %v1587 = vsub.f32 1.0, %v1586
    %v1588 = vmul.f32 %v1585, %v1587
    %v1589 = vadd.f32 %v1585, %v1588
    %vm1590 = vweird.f32 %v1569
    %vm1591 = vweird.f32 %v1585
    %vm1592 = vmor %vm1590, %vm1591
    %v1593 = vsel %vm1592, %v1585, %v1589
    %v1594 = vand.u32 2147483647, %v1569
    %vm1595 = vcmp.eq.f32.partialorder %v1594, 8.507059e+37
    %v1596 = vand.u32 %v1569, 2147483648
    %v1597 = vor.u32 1.1754944e-38, %v1596
    %v1598 = vsel %vm1595, %v1597, %v1593
    %v1599 = vmul.f32 1.0, %v1598
    %v1600 = vxor.u32 %v1556, 2147483648
    %v1601 = vxor.u32 %v1557, 2147483648
    %v1602 = vmul.f32 %v1600, 1.442695
    %v1603 = vpow.pop %v1602
    %v1604 = vmul.f32 %v1601, 1.442695
    %v1605 = vpow.pop %v1604
    %v1606 = vadd.f32 %v1603, 1.0
    %v1607 = vadd.f32 %v1605, 1.0
    %v1608 = vrcp.pop %v1606
    %v1609 = vmul.f32 %v1606, %v1608
    %v1610 = vsub.f32 1.0, %v1609
    %v1611 = vmul.f32 %v1608, %v1610
    %v1612 = vadd.f32 %v1608, %v1611
    %vm1613 = vweird.f32 %v1606
    %vm1614 = vweird.f32 %v1608
    %vm1615 = vmor %vm1613, %vm1614
    %v1616 = vsel %vm1615, %v1608, %v1612
    %v1617 = vand.u32 2147483647, %v1606
    %vm1618 = vcmp.eq.f32.partialorder %v1617, 8.507059e+37
    %v1619 = vand.u32 %v1606, 2147483648
    %v1620 = vor.u32 1.1754944e-38, %v1619
    %v1621 = vsel %vm1618, %v1620, %v1616
    %v1622 = vmul.f32 1.0, %v1621
    %v1623 = vrcp.pop %v1607
    %v1624 = vmul.f32 %v1607, %v1623
    %v1625 = vsub.f32 1.0, %v1624
    %v1626 = vmul.f32 %v1623, %v1625
    %v1627 = vadd.f32 %v1623, %v1626
    %vm1628 = vweird.f32 %v1607
    %vm1629 = vweird.f32 %v1623
    %vm1630 = vmor %vm1628, %vm1629
    %v1631 = vsel %vm1630, %v1623, %v1627
    %v1632 = vand.u32 2147483647, %v1607
    %vm1633 = vcmp.eq.f32.partialorder %v1632, 8.507059e+37
    %v1634 = vand.u32 %v1607, 2147483648
    %v1635 = vor.u32 1.1754944e-38, %v1634
    %v1636 = vsel %vm1633, %v1635, %v1631
    %v1637 = vmul.f32 1.0, %v1636
    %v1638 = vtanh.pop %v1558
    %v1639 = vtanh.pop %v1559
    %v1640 = vxor.u32 %v1560, 2147483648
    %v1641 = vxor.u32 %v1561, 2147483648
    %v1642 = vmul.f32 %v1640, 1.442695
    %v1643 = vpow.pop %v1642
    %v1644 = vmul.f32 %v1641, 1.442695
    %v1645 = vpow.pop %v1644
    %v1646 = vadd.f32 %v1643, 1.0
    %v1647 = vadd.f32 %v1645, 1.0
    %v1648 = vrcp.pop %v1646
    %v1649 = vmul.f32 %v1646, %v1648
    %v1650 = vsub.f32 1.0, %v1649
    %v1651 = vmul.f32 %v1648, %v1650
    %v1652 = vadd.f32 %v1648, %v1651
    %vm1653 = vweird.f32 %v1646
    %vm1654 = vweird.f32 %v1648
    %vm1655 = vmor %vm1653, %vm1654
    %v1656 = vsel %vm1655, %v1648, %v1652
    %v1657 = vand.u32 2147483647, %v1646
    %vm1658 = vcmp.eq.f32.partialorder %v1657, 8.507059e+37
    %v1659 = vand.u32 %v1646, 2147483648
    %v1660 = vor.u32 1.1754944e-38, %v1659
    %v1661 = vsel %vm1658, %v1660, %v1656
    %v1662 = vmul.f32 1.0, %v1661
    %v1663 = vrcp.pop %v1647
    %v1664 = vmul.f32 %v1647, %v1663
    %v1665 = vsub.f32 1.0, %v1664
    %v1666 = vmul.f32 %v1663, %v1665
    %v1667 = vadd.f32 %v1663, %v1666
    %vm1668 = vweird.f32 %v1647
    %vm1669 = vweird.f32 %v1663
    %vm1670 = vmor %vm1668, %vm1669
    %v1671 = vsel %vm1670, %v1663, %v1667
    %v1672 = vand.u32 2147483647, %v1647
    %vm1673 = vcmp.eq.f32.partialorder %v1672, 8.507059e+37
    %v1674 = vand.u32 %v1647, 2147483648
    %v1675 = vor.u32 1.1754944e-38, %v1674
    %v1676 = vsel %vm1673, %v1675, %v1671
    %v1677 = vmul.f32 1.0, %v1676
    %v1678 = vld [vmem:[#allocation5] sm:$0xff]
    %v1679 = vld [vmem:[#allocation5 + $0x8] sm:$0xff]
    %v1680 = vmul.f32 %v1622, %v1678
    %v1681 = vmul.f32 %v1637, %v1679
    %v1682 = vmul.f32 %v1584, %v1638
    %v1683 = vmul.f32 %v1599, %v1639
    %v1684 = vadd.f32 %v1680, %v1682
    %v1685 = vadd.f32 %v1681, %v1683
    %v1686 = vtanh.pop %v1684
    %v1687 = vtanh.pop %v1685
    %v1688 = vmul.f32 %v1662, %v1686
    %v1689 = vmul.f32 %v1677, %v1687
    %1690 = vst [vmem:[#allocation5] sm:$0xff] %v1684
    %1691 = vst [vmem:[#allocation5 + $0x8] sm:$0xff] %v1685
    %1692 = vst [vmem:[#allocation4] sm:$0xff] %v1688
    %1693 = vst [vmem:[#allocation4 + $0x8] sm:$0xff] %v1689
    %1694 = vst [vmem:[#allocation3] sm:$0xff] %v1688
    %1695 = vst [vmem:[#allocation3 + $0x8] sm:$0xff] %v1689
    %s1696 = scalar_lea.vmem [#allocation2], 64
    %v1697 = vld [vmem:[%s1696] sm:$0xff]
    %v1698 = vld [vmem:[%s1696 + $0x8] sm:$0xff]
    %v1699 = vld [vmem:[%s1696 + $0x10] sm:$0xff]
    %v1700 = vld [vmem:[%s1696 + $0x18] sm:$0xff]
    %v1701 = vld [vmem:[%s1696 + $0x20] sm:$0xff]
    %v1702 = vld [vmem:[%s1696 + $0x28] sm:$0xff]
    %v1703 = vld [vmem:[%s1696 + $0x30] sm:$0xff]
    %v1704 = vld [vmem:[%s1696 + $0x38] sm:$0xff]
    %v1705 = vld [vmem:[#allocation4] sm:$0xff]
    %v1706 = vld [vmem:[#allocation4 + $0x8] sm:$0xff]
    %v1707 = vpack.c.bf16 %v1705, %v1705
    %v1708 = vpack.c.bf16 %v1706, %v1706
    %1709 = vmatpush.bf16.msra.mxu0 %v1146
    %1710 = vmatpush.bf16.msra.mxu0 %v1138
    %1711 = vmatpush.bf16.msra.mxu0 %v1130
    %1712 = vmatpush.bf16.msra.mxu0 %v1122
    %1713 = vmatpush.bf16.msra.mxu0 %v1114
    %1714 = vmatpush.bf16.msra.mxu0 %v1106
    %1715 = vmatpush.bf16.msra.mxu0 %v1098
    %1716 = vmatpush.bf16.msra.mxu0 %v1090
    %1717 = vmatmul.bf16.gmra.mxu0 %v1707
    %v1718 = vpop.f32.mrf.mxu0
    %v1719 = vadd.f32 0.0, %v1718
    %v1720 = vpop.f32.mrf.mxu0
    %1721 = vdwg.mxu0
    %1722 = vmatpush.bf16.msra.mxu0 %v1210
    %1723 = vmatpush.bf16.msra.mxu0 %v1202
    %1724 = vmatpush.bf16.msra.mxu0 %v1194
    %1725 = vmatpush.bf16.msra.mxu0 %v1186
    %1726 = vmatpush.bf16.msra.mxu0 %v1178
    %1727 = vmatpush.bf16.msra.mxu0 %v1170
    %1728 = vmatpush.bf16.msra.mxu0 %v1162
    %1729 = vmatpush.bf16.msra.mxu0 %v1154
    %1730 = vmatmul.bf16.gmra.mxu0 %v1708
    %v1731 = vpop.f32.mrf.mxu0
    %v1732 = vadd.f32 %v1719, %v1731
    %v1733 = vpop.f32.mrf.mxu0
    %1734 = vdwg.mxu0
    %1735 = vmatpush.bf16.msra.mxu0 %v1147
    %1736 = vmatpush.bf16.msra.mxu0 %v1139
    %1737 = vmatpush.bf16.msra.mxu0 %v1131
    %1738 = vmatpush.bf16.msra.mxu0 %v1123
    %1739 = vmatpush.bf16.msra.mxu0 %v1115
    %1740 = vmatpush.bf16.msra.mxu0 %v1107
    %1741 = vmatpush.bf16.msra.mxu0 %v1099
    %1742 = vmatpush.bf16.msra.mxu0 %v1091
    %1743 = vmatmul.bf16.gmra.mxu0 %v1707
    %v1744 = vpop.f32.mrf.mxu0
    %v1745 = vadd.f32 0.0, %v1744
    %v1746 = vpop.f32.mrf.mxu0
    %1747 = vdwg.mxu0
    %1748 = vmatpush.bf16.msra.mxu0 %v1211
    %1749 = vmatpush.bf16.msra.mxu0 %v1203
    %1750 = vmatpush.bf16.msra.mxu0 %v1195
    %1751 = vmatpush.bf16.msra.mxu0 %v1187
    %1752 = vmatpush.bf16.msra.mxu0 %v1179
    %1753 = vmatpush.bf16.msra.mxu0 %v1171
    %1754 = vmatpush.bf16.msra.mxu0 %v1163
    %1755 = vmatpush.bf16.msra.mxu0 %v1155
    %1756 = vmatmul.bf16.gmra.mxu0 %v1708
    %v1757 = vpop.f32.mrf.mxu0
    %v1758 = vadd.f32 %v1745, %v1757
    %v1759 = vpop.f32.mrf.mxu0
    %1760 = vdwg.mxu0
    %1761 = vmatpush.bf16.msra.mxu0 %v1148
    %1762 = vmatpush.bf16.msra.mxu0 %v1140
    %1763 = vmatpush.bf16.msra.mxu0 %v1132
    %1764 = vmatpush.bf16.msra.mxu0 %v1124
    %1765 = vmatpush.bf16.msra.mxu0 %v1116
    %1766 = vmatpush.bf16.msra.mxu0 %v1108
    %1767 = vmatpush.bf16.msra.mxu0 %v1100
    %1768 = vmatpush.bf16.msra.mxu0 %v1092
    %1769 = vmatmul.bf16.gmra.mxu0 %v1707
    %v1770 = vpop.f32.mrf.mxu0
    %v1771 = vadd.f32 0.0, %v1770
    %v1772 = vpop.f32.mrf.mxu0
    %1773 = vdwg.mxu0
    %1774 = vmatpush.bf16.msra.mxu0 %v1212
    %1775 = vmatpush.bf16.msra.mxu0 %v1204
    %1776 = vmatpush.bf16.msra.mxu0 %v1196
    %1777 = vmatpush.bf16.msra.mxu0 %v1188
    %1778 = vmatpush.bf16.msra.mxu0 %v1180
    %1779 = vmatpush.bf16.msra.mxu0 %v1172
    %1780 = vmatpush.bf16.msra.mxu0 %v1164
    %1781 = vmatpush.bf16.msra.mxu0 %v1156
    %1782 = vmatmul.bf16.gmra.mxu0 %v1708
    %v1783 = vpop.f32.mrf.mxu0
    %v1784 = vadd.f32 %v1771, %v1783
    %v1785 = vpop.f32.mrf.mxu0
    %1786 = vdwg.mxu0
    %1787 = vmatpush.bf16.msra.mxu0 %v1149
    %1788 = vmatpush.bf16.msra.mxu0 %v1141
    %1789 = vmatpush.bf16.msra.mxu0 %v1133
    %1790 = vmatpush.bf16.msra.mxu0 %v1125
    %1791 = vmatpush.bf16.msra.mxu0 %v1117
    %1792 = vmatpush.bf16.msra.mxu0 %v1109
    %1793 = vmatpush.bf16.msra.mxu0 %v1101
    %1794 = vmatpush.bf16.msra.mxu0 %v1093
    %1795 = vmatmul.bf16.gmra.mxu0 %v1707
    %v1796 = vpop.f32.mrf.mxu0
    %v1797 = vadd.f32 0.0, %v1796
    %v1798 = vpop.f32.mrf.mxu0
    %1799 = vdwg.mxu0
    %1800 = vmatpush.bf16.msra.mxu0 %v1213
    %1801 = vmatpush.bf16.msra.mxu0 %v1205
    %1802 = vmatpush.bf16.msra.mxu0 %v1197
    %1803 = vmatpush.bf16.msra.mxu0 %v1189
    %1804 = vmatpush.bf16.msra.mxu0 %v1181
    %1805 = vmatpush.bf16.msra.mxu0 %v1173
    %1806 = vmatpush.bf16.msra.mxu0 %v1165
    %1807 = vmatpush.bf16.msra.mxu0 %v1157
    %1808 = vmatmul.bf16.gmra.mxu0 %v1708
    %v1809 = vpop.f32.mrf.mxu0
    %v1810 = vadd.f32 %v1797, %v1809
    %v1811 = vpop.f32.mrf.mxu0
    %1812 = vdwg.mxu0
    %1813 = vmatpush.bf16.msra.mxu0 %v1150
    %1814 = vmatpush.bf16.msra.mxu0 %v1142
    %1815 = vmatpush.bf16.msra.mxu0 %v1134
    %1816 = vmatpush.bf16.msra.mxu0 %v1126
    %1817 = vmatpush.bf16.msra.mxu0 %v1118
    %1818 = vmatpush.bf16.msra.mxu0 %v1110
    %1819 = vmatpush.bf16.msra.mxu0 %v1102
    %1820 = vmatpush.bf16.msra.mxu0 %v1094
    %1821 = vmatmul.bf16.gmra.mxu0 %v1707
    %v1822 = vpop.f32.mrf.mxu0
    %v1823 = vadd.f32 0.0, %v1822
    %v1824 = vpop.f32.mrf.mxu0
    %1825 = vdwg.mxu0
    %1826 = vmatpush.bf16.msra.mxu0 %v1214
    %1827 = vmatpush.bf16.msra.mxu0 %v1206
    %1828 = vmatpush.bf16.msra.mxu0 %v1198
    %1829 = vmatpush.bf16.msra.mxu0 %v1190
    %1830 = vmatpush.bf16.msra.mxu0 %v1182
    %1831 = vmatpush.bf16.msra.mxu0 %v1174
    %1832 = vmatpush.bf16.msra.mxu0 %v1166
    %1833 = vmatpush.bf16.msra.mxu0 %v1158
    %1834 = vmatmul.bf16.gmra.mxu0 %v1708
    %v1835 = vpop.f32.mrf.mxu0
    %v1836 = vadd.f32 %v1823, %v1835
    %v1837 = vpop.f32.mrf.mxu0
    %1838 = vdwg.mxu0
    %1839 = vmatpush.bf16.msra.mxu0 %v1151
    %1840 = vmatpush.bf16.msra.mxu0 %v1143
    %1841 = vmatpush.bf16.msra.mxu0 %v1135
    %1842 = vmatpush.bf16.msra.mxu0 %v1127
    %1843 = vmatpush.bf16.msra.mxu0 %v1119
    %1844 = vmatpush.bf16.msra.mxu0 %v1111
    %1845 = vmatpush.bf16.msra.mxu0 %v1103
    %1846 = vmatpush.bf16.msra.mxu0 %v1095
    %1847 = vmatmul.bf16.gmra.mxu0 %v1707
    %v1848 = vpop.f32.mrf.mxu0
    %v1849 = vadd.f32 0.0, %v1848
    %v1850 = vpop.f32.mrf.mxu0
    %1851 = vdwg.mxu0
    %1852 = vmatpush.bf16.msra.mxu0 %v1215
    %1853 = vmatpush.bf16.msra.mxu0 %v1207
    %1854 = vmatpush.bf16.msra.mxu0 %v1199
    %1855 = vmatpush.bf16.msra.mxu0 %v1191
    %1856 = vmatpush.bf16.msra.mxu0 %v1183
    %1857 = vmatpush.bf16.msra.mxu0 %v1175
    %1858 = vmatpush.bf16.msra.mxu0 %v1167
    %1859 = vmatpush.bf16.msra.mxu0 %v1159
    %1860 = vmatmul.bf16.gmra.mxu0 %v1708
    %v1861 = vpop.f32.mrf.mxu0
    %v1862 = vadd.f32 %v1849, %v1861
    %v1863 = vpop.f32.mrf.mxu0
    %1864 = vdwg.mxu0
    %1865 = vmatpush.bf16.msra.mxu0 %v1152
    %1866 = vmatpush.bf16.msra.mxu0 %v1144
    %1867 = vmatpush.bf16.msra.mxu0 %v1136
    %1868 = vmatpush.bf16.msra.mxu0 %v1128
    %1869 = vmatpush.bf16.msra.mxu0 %v1120
    %1870 = vmatpush.bf16.msra.mxu0 %v1112
    %1871 = vmatpush.bf16.msra.mxu0 %v1104
    %1872 = vmatpush.bf16.msra.mxu0 %v1096
    %1873 = vmatmul.bf16.gmra.mxu0 %v1707
    %v1874 = vpop.f32.mrf.mxu0
    %v1875 = vadd.f32 0.0, %v1874
    %v1876 = vpop.f32.mrf.mxu0
    %1877 = vdwg.mxu0
    %1878 = vmatpush.bf16.msra.mxu0 %v1216
    %1879 = vmatpush.bf16.msra.mxu0 %v1208
    %1880 = vmatpush.bf16.msra.mxu0 %v1200
    %1881 = vmatpush.bf16.msra.mxu0 %v1192
    %1882 = vmatpush.bf16.msra.mxu0 %v1184
    %1883 = vmatpush.bf16.msra.mxu0 %v1176
    %1884 = vmatpush.bf16.msra.mxu0 %v1168
    %1885 = vmatpush.bf16.msra.mxu0 %v1160
    %1886 = vmatmul.bf16.gmra.mxu0 %v1708
    %v1887 = vpop.f32.mrf.mxu0
    %v1888 = vadd.f32 %v1875, %v1887
    %v1889 = vpop.f32.mrf.mxu0
    %1890 = vdwg.mxu0
    %1891 = vmatpush.bf16.msra.mxu0 %v1153
    %1892 = vmatpush.bf16.msra.mxu0 %v1145
    %1893 = vmatpush.bf16.msra.mxu0 %v1137
    %1894 = vmatpush.bf16.msra.mxu0 %v1129
    %1895 = vmatpush.bf16.msra.mxu0 %v1121
    %1896 = vmatpush.bf16.msra.mxu0 %v1113
    %1897 = vmatpush.bf16.msra.mxu0 %v1105
    %1898 = vmatpush.bf16.msra.mxu0 %v1097
    %1899 = vmatmul.bf16.gmra.mxu0 %v1707
    %v1900 = vpop.f32.mrf.mxu0
    %v1901 = vadd.f32 0.0, %v1900
    %v1902 = vpop.f32.mrf.mxu0
    %1903 = vdwg.mxu0
    %1904 = vmatpush.bf16.msra.mxu0 %v1217
    %1905 = vmatpush.bf16.msra.mxu0 %v1209
    %1906 = vmatpush.bf16.msra.mxu0 %v1201
    %1907 = vmatpush.bf16.msra.mxu0 %v1193
    %1908 = vmatpush.bf16.msra.mxu0 %v1185
    %1909 = vmatpush.bf16.msra.mxu0 %v1177
    %1910 = vmatpush.bf16.msra.mxu0 %v1169
    %1911 = vmatpush.bf16.msra.mxu0 %v1161
    %1912 = vmatmul.bf16.gmra.mxu0 %v1708
    %v1913 = vpop.f32.mrf.mxu0
    %v1914 = vadd.f32 %v1901, %v1913
    %v1915 = vpop.f32.mrf.mxu0
    %1916 = vdwg.mxu0
    %v1917 = vadd.f32 %v1697, %v1732
    %v1918 = vadd.f32 %v1698, %v1758
    %v1919 = vadd.f32 %v1699, %v1784
    %v1920 = vadd.f32 %v1700, %v1810
    %v1921 = vadd.f32 %v1701, %v1836
    %v1922 = vadd.f32 %v1702, %v1862
    %v1923 = vadd.f32 %v1703, %v1888
    %v1924 = vadd.f32 %v1704, %v1914
    %v1925 = vxor.u32 %v1917, 2147483648
    %v1926 = vxor.u32 %v1918, 2147483648
    %v1927 = vmul.f32 %v1925, 1.442695
    %v1928 = vpow.pop %v1927
    %v1929 = vmul.f32 %v1926, 1.442695
    %v1930 = vpow.pop %v1929
    %v1931 = vadd.f32 %v1928, 1.0
    %v1932 = vadd.f32 %v1930, 1.0
    %v1933 = vrcp.pop %v1931
    %v1934 = vmul.f32 %v1931, %v1933
    %v1935 = vsub.f32 1.0, %v1934
    %v1936 = vmul.f32 %v1933, %v1935
    %v1937 = vadd.f32 %v1933, %v1936
    %vm1938 = vweird.f32 %v1931
    %vm1939 = vweird.f32 %v1933
    %vm1940 = vmor %vm1938, %vm1939
    %v1941 = vsel %vm1940, %v1933, %v1937
    %v1942 = vand.u32 2147483647, %v1931
    %vm1943 = vcmp.eq.f32.partialorder %v1942, 8.507059e+37
    %v1944 = vand.u32 %v1931, 2147483648
    %v1945 = vor.u32 1.1754944e-38, %v1944
    %v1946 = vsel %vm1943, %v1945, %v1941
    %v1947 = vmul.f32 1.0, %v1946
    %v1948 = vrcp.pop %v1932
    %v1949 = vmul.f32 %v1932, %v1948
    %v1950 = vsub.f32 1.0, %v1949
    %v1951 = vmul.f32 %v1948, %v1950
    %v1952 = vadd.f32 %v1948, %v1951
    %vm1953 = vweird.f32 %v1932
    %vm1954 = vweird.f32 %v1948
    %vm1955 = vmor %vm1953, %vm1954
    %v1956 = vsel %vm1955, %v1948, %v1952
    %v1957 = vand.u32 2147483647, %v1932
    %vm1958 = vcmp.eq.f32.partialorder %v1957, 8.507059e+37
    %v1959 = vand.u32 %v1932, 2147483648
    %v1960 = vor.u32 1.1754944e-38, %v1959
    %v1961 = vsel %vm1958, %v1960, %v1956
    %v1962 = vmul.f32 1.0, %v1961
    %v1963 = vxor.u32 %v1919, 2147483648
    %v1964 = vxor.u32 %v1920, 2147483648
    %v1965 = vmul.f32 %v1963, 1.442695
    %v1966 = vpow.pop %v1965
    %v1967 = vmul.f32 %v1964, 1.442695
    %v1968 = vpow.pop %v1967
    %v1969 = vadd.f32 %v1966, 1.0
    %v1970 = vadd.f32 %v1968, 1.0
    %v1971 = vrcp.pop %v1969
    %v1972 = vmul.f32 %v1969, %v1971
    %v1973 = vsub.f32 1.0, %v1972
    %v1974 = vmul.f32 %v1971, %v1973
    %v1975 = vadd.f32 %v1971, %v1974
    %vm1976 = vweird.f32 %v1969
    %vm1977 = vweird.f32 %v1971
    %vm1978 = vmor %vm1976, %vm1977
    %v1979 = vsel %vm1978, %v1971, %v1975
    %v1980 = vand.u32 2147483647, %v1969
    %vm1981 = vcmp.eq.f32.partialorder %v1980, 8.507059e+37
    %v1982 = vand.u32 %v1969, 2147483648
    %v1983 = vor.u32 1.1754944e-38, %v1982
    %v1984 = vsel %vm1981, %v1983, %v1979
    %v1985 = vmul.f32 1.0, %v1984
    %v1986 = vrcp.pop %v1970
    %v1987 = vmul.f32 %v1970, %v1986
    %v1988 = vsub.f32 1.0, %v1987
    %v1989 = vmul.f32 %v1986, %v1988
    %v1990 = vadd.f32 %v1986, %v1989
    %vm1991 = vweird.f32 %v1970
    %vm1992 = vweird.f32 %v1986
    %vm1993 = vmor %vm1991, %vm1992
    %v1994 = vsel %vm1993, %v1986, %v1990
    %v1995 = vand.u32 2147483647, %v1970
    %vm1996 = vcmp.eq.f32.partialorder %v1995, 8.507059e+37
    %v1997 = vand.u32 %v1970, 2147483648
    %v1998 = vor.u32 1.1754944e-38, %v1997
    %v1999 = vsel %vm1996, %v1998, %v1994
    %v2000 = vmul.f32 1.0, %v1999
    %v2001 = vtanh.pop %v1921
    %v2002 = vtanh.pop %v1922
    %v2003 = vxor.u32 %v1923, 2147483648
    %v2004 = vxor.u32 %v1924, 2147483648
    %v2005 = vmul.f32 %v2003, 1.442695
    %v2006 = vpow.pop %v2005
    %v2007 = vmul.f32 %v2004, 1.442695
    %v2008 = vpow.pop %v2007
    %v2009 = vadd.f32 %v2006, 1.0
    %v2010 = vadd.f32 %v2008, 1.0
    %v2011 = vrcp.pop %v2009
    %v2012 = vmul.f32 %v2009, %v2011
    %v2013 = vsub.f32 1.0, %v2012
    %v2014 = vmul.f32 %v2011, %v2013
    %v2015 = vadd.f32 %v2011, %v2014
    %vm2016 = vweird.f32 %v2009
    %vm2017 = vweird.f32 %v2011
    %vm2018 = vmor %vm2016, %vm2017
    %v2019 = vsel %vm2018, %v2011, %v2015
    %v2020 = vand.u32 2147483647, %v2009
    %vm2021 = vcmp.eq.f32.partialorder %v2020, 8.507059e+37
    %v2022 = vand.u32 %v2009, 2147483648
    %v2023 = vor.u32 1.1754944e-38, %v2022
    %v2024 = vsel %vm2021, %v2023, %v2019
    %v2025 = vmul.f32 1.0, %v2024
    %v2026 = vrcp.pop %v2010
    %v2027 = vmul.f32 %v2010, %v2026
    %v2028 = vsub.f32 1.0, %v2027
    %v2029 = vmul.f32 %v2026, %v2028
    %v2030 = vadd.f32 %v2026, %v2029
    %vm2031 = vweird.f32 %v2010
    %vm2032 = vweird.f32 %v2026
    %vm2033 = vmor %vm2031, %vm2032
    %v2034 = vsel %vm2033, %v2026, %v2030
    %v2035 = vand.u32 2147483647, %v2010
    %vm2036 = vcmp.eq.f32.partialorder %v2035, 8.507059e+37
    %v2037 = vand.u32 %v2010, 2147483648
    %v2038 = vor.u32 1.1754944e-38, %v2037
    %v2039 = vsel %vm2036, %v2038, %v2034
    %v2040 = vmul.f32 1.0, %v2039
    %v2041 = vld [vmem:[#allocation5] sm:$0xff]
    %v2042 = vld [vmem:[#allocation5 + $0x8] sm:$0xff]
    %v2043 = vmul.f32 %v1985, %v2041
    %v2044 = vmul.f32 %v2000, %v2042
    %v2045 = vmul.f32 %v1947, %v2001
    %v2046 = vmul.f32 %v1962, %v2002
    %v2047 = vadd.f32 %v2043, %v2045
    %v2048 = vadd.f32 %v2044, %v2046
    %v2049 = vtanh.pop %v2047
    %v2050 = vtanh.pop %v2048
    %v2051 = vmul.f32 %v2025, %v2049
    %v2052 = vmul.f32 %v2040, %v2050
    %2053 = vst [vmem:[#allocation5] sm:$0xff] %v2047
    %2054 = vst [vmem:[#allocation5 + $0x8] sm:$0xff] %v2048
    %2055 = vst [vmem:[#allocation4] sm:$0xff] %v2051
    %2056 = vst [vmem:[#allocation4 + $0x8] sm:$0xff] %v2052
    %s2057 = scalar_lea.vmem [#allocation3], 16
    %2058 = vst [vmem:[%s2057] sm:$0xff] %v2051
    %2059 = vst [vmem:[%s2057 + $0x8] sm:$0xff] %v2052
    %s2060 = scalar_lea.vmem [#allocation2], 128
    %v2061 = vld [vmem:[%s2060] sm:$0xff]
    %v2062 = vld [vmem:[%s2060 + $0x8] sm:$0xff]
    %v2063 = vld [vmem:[%s2060 + $0x10] sm:$0xff]
    %v2064 = vld [vmem:[%s2060 + $0x18] sm:$0xff]
    %v2065 = vld [vmem:[%s2060 + $0x20] sm:$0xff]
    %v2066 = vld [vmem:[%s2060 + $0x28] sm:$0xff]
    %v2067 = vld [vmem:[%s2060 + $0x30] sm:$0xff]
    %v2068 = vld [vmem:[%s2060 + $0x38] sm:$0xff]
    %v2069 = vld [vmem:[#allocation4] sm:$0xff]
    %v2070 = vld [vmem:[#allocation4 + $0x8] sm:$0xff]
    %v2071 = vpack.c.bf16 %v2069, %v2069
    %v2072 = vpack.c.bf16 %v2070, %v2070
    %2073 = vmatpush.bf16.msra.mxu0 %v1146
    %2074 = vmatpush.bf16.msra.mxu0 %v1138
    %2075 = vmatpush.bf16.msra.mxu0 %v1130
    %2076 = vmatpush.bf16.msra.mxu0 %v1122
    %2077 = vmatpush.bf16.msra.mxu0 %v1114
    %2078 = vmatpush.bf16.msra.mxu0 %v1106
    %2079 = vmatpush.bf16.msra.mxu0 %v1098
    %2080 = vmatpush.bf16.msra.mxu0 %v1090
    %2081 = vmatmul.bf16.gmra.mxu0 %v2071
    %v2082 = vpop.f32.mrf.mxu0
    %v2083 = vadd.f32 0.0, %v2082
    %v2084 = vpop.f32.mrf.mxu0
    %2085 = vdwg.mxu0
    %2086 = vmatpush.bf16.msra.mxu0 %v1210
    %2087 = vmatpush.bf16.msra.mxu0 %v1202
    %2088 = vmatpush.bf16.msra.mxu0 %v1194
    %2089 = vmatpush.bf16.msra.mxu0 %v1186
    %2090 = vmatpush.bf16.msra.mxu0 %v1178
    %2091 = vmatpush.bf16.msra.mxu0 %v1170
    %2092 = vmatpush.bf16.msra.mxu0 %v1162
    %2093 = vmatpush.bf16.msra.mxu0 %v1154
    %2094 = vmatmul.bf16.gmra.mxu0 %v2072
    %v2095 = vpop.f32.mrf.mxu0
    %v2096 = vadd.f32 %v2083, %v2095
    %v2097 = vpop.f32.mrf.mxu0
    %2098 = vdwg.mxu0
    %2099 = vmatpush.bf16.msra.mxu0 %v1147
    %2100 = vmatpush.bf16.msra.mxu0 %v1139
    %2101 = vmatpush.bf16.msra.mxu0 %v1131
    %2102 = vmatpush.bf16.msra.mxu0 %v1123
    %2103 = vmatpush.bf16.msra.mxu0 %v1115
    %2104 = vmatpush.bf16.msra.mxu0 %v1107
    %2105 = vmatpush.bf16.msra.mxu0 %v1099
    %2106 = vmatpush.bf16.msra.mxu0 %v1091
    %2107 = vmatmul.bf16.gmra.mxu0 %v2071
    %v2108 = vpop.f32.mrf.mxu0
    %v2109 = vadd.f32 0.0, %v2108
    %v2110 = vpop.f32.mrf.mxu0
    %2111 = vdwg.mxu0
    %2112 = vmatpush.bf16.msra.mxu0 %v1211
    %2113 = vmatpush.bf16.msra.mxu0 %v1203
    %2114 = vmatpush.bf16.msra.mxu0 %v1195
    %2115 = vmatpush.bf16.msra.mxu0 %v1187
    %2116 = vmatpush.bf16.msra.mxu0 %v1179
    %2117 = vmatpush.bf16.msra.mxu0 %v1171
    %2118 = vmatpush.bf16.msra.mxu0 %v1163
    %2119 = vmatpush.bf16.msra.mxu0 %v1155
    %2120 = vmatmul.bf16.gmra.mxu0 %v2072
    %v2121 = vpop.f32.mrf.mxu0
    %v2122 = vadd.f32 %v2109, %v2121
    %v2123 = vpop.f32.mrf.mxu0
    %2124 = vdwg.mxu0
    %2125 = vmatpush.bf16.msra.mxu0 %v1148
    %2126 = vmatpush.bf16.msra.mxu0 %v1140
    %2127 = vmatpush.bf16.msra.mxu0 %v1132
    %2128 = vmatpush.bf16.msra.mxu0 %v1124
    %2129 = vmatpush.bf16.msra.mxu0 %v1116
    %2130 = vmatpush.bf16.msra.mxu0 %v1108
    %2131 = vmatpush.bf16.msra.mxu0 %v1100
    %2132 = vmatpush.bf16.msra.mxu0 %v1092
    %2133 = vmatmul.bf16.gmra.mxu0 %v2071
    %v2134 = vpop.f32.mrf.mxu0
    %v2135 = vadd.f32 0.0, %v2134
    %v2136 = vpop.f32.mrf.mxu0
    %2137 = vdwg.mxu0
    %2138 = vmatpush.bf16.msra.mxu0 %v1212
    %2139 = vmatpush.bf16.msra.mxu0 %v1204
    %2140 = vmatpush.bf16.msra.mxu0 %v1196
    %2141 = vmatpush.bf16.msra.mxu0 %v1188
    %2142 = vmatpush.bf16.msra.mxu0 %v1180
    %2143 = vmatpush.bf16.msra.mxu0 %v1172
    %2144 = vmatpush.bf16.msra.mxu0 %v1164
    %2145 = vmatpush.bf16.msra.mxu0 %v1156
    %2146 = vmatmul.bf16.gmra.mxu0 %v2072
    %v2147 = vpop.f32.mrf.mxu0
    %v2148 = vadd.f32 %v2135, %v2147
    %v2149 = vpop.f32.mrf.mxu0
    %2150 = vdwg.mxu0
    %2151 = vmatpush.bf16.msra.mxu0 %v1149
    %2152 = vmatpush.bf16.msra.mxu0 %v1141
    %2153 = vmatpush.bf16.msra.mxu0 %v1133
    %2154 = vmatpush.bf16.msra.mxu0 %v1125
    %2155 = vmatpush.bf16.msra.mxu0 %v1117
    %2156 = vmatpush.bf16.msra.mxu0 %v1109
    %2157 = vmatpush.bf16.msra.mxu0 %v1101
    %2158 = vmatpush.bf16.msra.mxu0 %v1093
    %2159 = vmatmul.bf16.gmra.mxu0 %v2071
    %v2160 = vpop.f32.mrf.mxu0
    %v2161 = vadd.f32 0.0, %v2160
    %v2162 = vpop.f32.mrf.mxu0
    %2163 = vdwg.mxu0
    %2164 = vmatpush.bf16.msra.mxu0 %v1213
    %2165 = vmatpush.bf16.msra.mxu0 %v1205
    %2166 = vmatpush.bf16.msra.mxu0 %v1197
    %2167 = vmatpush.bf16.msra.mxu0 %v1189
    %2168 = vmatpush.bf16.msra.mxu0 %v1181
    %2169 = vmatpush.bf16.msra.mxu0 %v1173
    %2170 = vmatpush.bf16.msra.mxu0 %v1165
    %2171 = vmatpush.bf16.msra.mxu0 %v1157
    %2172 = vmatmul.bf16.gmra.mxu0 %v2072
    %v2173 = vpop.f32.mrf.mxu0
    %v2174 = vadd.f32 %v2161, %v2173
    %v2175 = vpop.f32.mrf.mxu0
    %2176 = vdwg.mxu0
    %2177 = vmatpush.bf16.msra.mxu0 %v1150
    %2178 = vmatpush.bf16.msra.mxu0 %v1142
    %2179 = vmatpush.bf16.msra.mxu0 %v1134
    %2180 = vmatpush.bf16.msra.mxu0 %v1126
    %2181 = vmatpush.bf16.msra.mxu0 %v1118
    %2182 = vmatpush.bf16.msra.mxu0 %v1110
    %2183 = vmatpush.bf16.msra.mxu0 %v1102
    %2184 = vmatpush.bf16.msra.mxu0 %v1094
    %2185 = vmatmul.bf16.gmra.mxu0 %v2071
    %v2186 = vpop.f32.mrf.mxu0
    %v2187 = vadd.f32 0.0, %v2186
    %v2188 = vpop.f32.mrf.mxu0
    %2189 = vdwg.mxu0
    %2190 = vmatpush.bf16.msra.mxu0 %v1214
    %2191 = vmatpush.bf16.msra.mxu0 %v1206
    %2192 = vmatpush.bf16.msra.mxu0 %v1198
    %2193 = vmatpush.bf16.msra.mxu0 %v1190
    %2194 = vmatpush.bf16.msra.mxu0 %v1182
    %2195 = vmatpush.bf16.msra.mxu0 %v1174
    %2196 = vmatpush.bf16.msra.mxu0 %v1166
    %2197 = vmatpush.bf16.msra.mxu0 %v1158
    %2198 = vmatmul.bf16.gmra.mxu0 %v2072
    %v2199 = vpop.f32.mrf.mxu0
    %v2200 = vadd.f32 %v2187, %v2199
    %v2201 = vpop.f32.mrf.mxu0
    %2202 = vdwg.mxu0
    %2203 = vmatpush.bf16.msra.mxu0 %v1151
    %2204 = vmatpush.bf16.msra.mxu0 %v1143
    %2205 = vmatpush.bf16.msra.mxu0 %v1135
    %2206 = vmatpush.bf16.msra.mxu0 %v1127
    %2207 = vmatpush.bf16.msra.mxu0 %v1119
    %2208 = vmatpush.bf16.msra.mxu0 %v1111
    %2209 = vmatpush.bf16.msra.mxu0 %v1103
    %2210 = vmatpush.bf16.msra.mxu0 %v1095
    %2211 = vmatmul.bf16.gmra.mxu0 %v2071
    %v2212 = vpop.f32.mrf.mxu0
    %v2213 = vadd.f32 0.0, %v2212
    %v2214 = vpop.f32.mrf.mxu0
    %2215 = vdwg.mxu0
    %2216 = vmatpush.bf16.msra.mxu0 %v1215
    %2217 = vmatpush.bf16.msra.mxu0 %v1207
    %2218 = vmatpush.bf16.msra.mxu0 %v1199
    %2219 = vmatpush.bf16.msra.mxu0 %v1191
    %2220 = vmatpush.bf16.msra.mxu0 %v1183
    %2221 = vmatpush.bf16.msra.mxu0 %v1175
    %2222 = vmatpush.bf16.msra.mxu0 %v1167
    %2223 = vmatpush.bf16.msra.mxu0 %v1159
    %2224 = vmatmul.bf16.gmra.mxu0 %v2072
    %v2225 = vpop.f32.mrf.mxu0
    %v2226 = vadd.f32 %v2213, %v2225
    %v2227 = vpop.f32.mrf.mxu0
    %2228 = vdwg.mxu0
    %2229 = vmatpush.bf16.msra.mxu0 %v1152
    %2230 = vmatpush.bf16.msra.mxu0 %v1144
    %2231 = vmatpush.bf16.msra.mxu0 %v1136
    %2232 = vmatpush.bf16.msra.mxu0 %v1128
    %2233 = vmatpush.bf16.msra.mxu0 %v1120
    %2234 = vmatpush.bf16.msra.mxu0 %v1112
    %2235 = vmatpush.bf16.msra.mxu0 %v1104
    %2236 = vmatpush.bf16.msra.mxu0 %v1096
    %2237 = vmatmul.bf16.gmra.mxu0 %v2071
    %v2238 = vpop.f32.mrf.mxu0
    %v2239 = vadd.f32 0.0, %v2238
    %v2240 = vpop.f32.mrf.mxu0
    %2241 = vdwg.mxu0
    %2242 = vmatpush.bf16.msra.mxu0 %v1216
    %2243 = vmatpush.bf16.msra.mxu0 %v1208
    %2244 = vmatpush.bf16.msra.mxu0 %v1200
    %2245 = vmatpush.bf16.msra.mxu0 %v1192
    %2246 = vmatpush.bf16.msra.mxu0 %v1184
    %2247 = vmatpush.bf16.msra.mxu0 %v1176
    %2248 = vmatpush.bf16.msra.mxu0 %v1168
    %2249 = vmatpush.bf16.msra.mxu0 %v1160
    %2250 = vmatmul.bf16.gmra.mxu0 %v2072
    %v2251 = vpop.f32.mrf.mxu0
    %v2252 = vadd.f32 %v2239, %v2251
    %v2253 = vpop.f32.mrf.mxu0
    %2254 = vdwg.mxu0
    %2255 = vmatpush.bf16.msra.mxu0 %v1153
    %2256 = vmatpush.bf16.msra.mxu0 %v1145
    %2257 = vmatpush.bf16.msra.mxu0 %v1137
    %2258 = vmatpush.bf16.msra.mxu0 %v1129
    %2259 = vmatpush.bf16.msra.mxu0 %v1121
    %2260 = vmatpush.bf16.msra.mxu0 %v1113
    %2261 = vmatpush.bf16.msra.mxu0 %v1105
    %2262 = vmatpush.bf16.msra.mxu0 %v1097
    %2263 = vmatmul.bf16.gmra.mxu0 %v2071
    %v2264 = vpop.f32.mrf.mxu0
    %v2265 = vadd.f32 0.0, %v2264
    %v2266 = vpop.f32.mrf.mxu0
    %2267 = vdwg.mxu0
    %2268 = vmatpush.bf16.msra.mxu0 %v1217
    %2269 = vmatpush.bf16.msra.mxu0 %v1209
    %2270 = vmatpush.bf16.msra.mxu0 %v1201
    %2271 = vmatpush.bf16.msra.mxu0 %v1193
    %2272 = vmatpush.bf16.msra.mxu0 %v1185
    %2273 = vmatpush.bf16.msra.mxu0 %v1177
    %2274 = vmatpush.bf16.msra.mxu0 %v1169
    %2275 = vmatpush.bf16.msra.mxu0 %v1161
    %2276 = vmatmul.bf16.gmra.mxu0 %v2072
    %v2277 = vpop.f32.mrf.mxu0
    %v2278 = vadd.f32 %v2265, %v2277
    %v2279 = vpop.f32.mrf.mxu0
    %2280 = vdwg.mxu0
    %v2281 = vadd.f32 %v2061, %v2096
    %v2282 = vadd.f32 %v2062, %v2122
    %v2283 = vadd.f32 %v2063, %v2148
    %v2284 = vadd.f32 %v2064, %v2174
    %v2285 = vadd.f32 %v2065, %v2200
    %v2286 = vadd.f32 %v2066, %v2226
    %v2287 = vadd.f32 %v2067, %v2252
    %v2288 = vadd.f32 %v2068, %v2278
    %v2289 = vxor.u32 %v2281, 2147483648
    %v2290 = vxor.u32 %v2282, 2147483648
    %v2291 = vmul.f32 %v2289, 1.442695
    %v2292 = vpow.pop %v2291
    %v2293 = vmul.f32 %v2290, 1.442695
    %v2294 = vpow.pop %v2293
    %v2295 = vadd.f32 %v2292, 1.0
    %v2296 = vadd.f32 %v2294, 1.0
    %v2297 = vrcp.pop %v2295
    %v2298 = vmul.f32 %v2295, %v2297
    %v2299 = vsub.f32 1.0, %v2298
    %v2300 = vmul.f32 %v2297, %v2299
    %v2301 = vadd.f32 %v2297, %v2300
    %vm2302 = vweird.f32 %v2295
    %vm2303 = vweird.f32 %v2297
    %vm2304 = vmor %vm2302, %vm2303
    %v2305 = vsel %vm2304, %v2297, %v2301
    %v2306 = vand.u32 2147483647, %v2295
    %vm2307 = vcmp.eq.f32.partialorder %v2306, 8.507059e+37
    %v2308 = vand.u32 %v2295, 2147483648
    %v2309 = vor.u32 1.1754944e-38, %v2308
    %v2310 = vsel %vm2307, %v2309, %v2305
    %v2311 = vmul.f32 1.0, %v2310
    %v2312 = vrcp.pop %v2296
    %v2313 = vmul.f32 %v2296, %v2312
    %v2314 = vsub.f32 1.0, %v2313
    %v2315 = vmul.f32 %v2312, %v2314
    %v2316 = vadd.f32 %v2312, %v2315
    %vm2317 = vweird.f32 %v2296
    %vm2318 = vweird.f32 %v2312
    %vm2319 = vmor %vm2317, %vm2318
    %v2320 = vsel %vm2319, %v2312, %v2316
    %v2321 = vand.u32 2147483647, %v2296
    %vm2322 = vcmp.eq.f32.partialorder %v2321, 8.507059e+37
    %v2323 = vand.u32 %v2296, 2147483648
    %v2324 = vor.u32 1.1754944e-38, %v2323
    %v2325 = vsel %vm2322, %v2324, %v2320
    %v2326 = vmul.f32 1.0, %v2325
    %v2327 = vxor.u32 %v2283, 2147483648
    %v2328 = vxor.u32 %v2284, 2147483648
    %v2329 = vmul.f32 %v2327, 1.442695
    %v2330 = vpow.pop %v2329
    %v2331 = vmul.f32 %v2328, 1.442695
    %v2332 = vpow.pop %v2331
    %v2333 = vadd.f32 %v2330, 1.0
    %v2334 = vadd.f32 %v2332, 1.0
    %v2335 = vrcp.pop %v2333
    %v2336 = vmul.f32 %v2333, %v2335
    %v2337 = vsub.f32 1.0, %v2336
    %v2338 = vmul.f32 %v2335, %v2337
    %v2339 = vadd.f32 %v2335, %v2338
    %vm2340 = vweird.f32 %v2333
    %vm2341 = vweird.f32 %v2335
    %vm2342 = vmor %vm2340, %vm2341
    %v2343 = vsel %vm2342, %v2335, %v2339
    %v2344 = vand.u32 2147483647, %v2333
    %vm2345 = vcmp.eq.f32.partialorder %v2344, 8.507059e+37
    %v2346 = vand.u32 %v2333, 2147483648
    %v2347 = vor.u32 1.1754944e-38, %v2346
    %v2348 = vsel %vm2345, %v2347, %v2343
    %v2349 = vmul.f32 1.0, %v2348
    %v2350 = vrcp.pop %v2334
    %v2351 = vmul.f32 %v2334, %v2350
    %v2352 = vsub.f32 1.0, %v2351
    %v2353 = vmul.f32 %v2350, %v2352
    %v2354 = vadd.f32 %v2350, %v2353
    %vm2355 = vweird.f32 %v2334
    %vm2356 = vweird.f32 %v2350
    %vm2357 = vmor %vm2355, %vm2356
    %v2358 = vsel %vm2357, %v2350, %v2354
    %v2359 = vand.u32 2147483647, %v2334
    %vm2360 = vcmp.eq.f32.partialorder %v2359, 8.507059e+37
    %v2361 = vand.u32 %v2334, 2147483648
    %v2362 = vor.u32 1.1754944e-38, %v2361
    %v2363 = vsel %vm2360, %v2362, %v2358
    %v2364 = vmul.f32 1.0, %v2363
    %v2365 = vtanh.pop %v2285
    %v2366 = vtanh.pop %v2286
    %v2367 = vxor.u32 %v2287, 2147483648
    %v2368 = vxor.u32 %v2288, 2147483648
    %v2369 = vmul.f32 %v2367, 1.442695
    %v2370 = vpow.pop %v2369
    %v2371 = vmul.f32 %v2368, 1.442695
    %v2372 = vpow.pop %v2371
    %v2373 = vadd.f32 %v2370, 1.0
    %v2374 = vadd.f32 %v2372, 1.0
    %v2375 = vrcp.pop %v2373
    %v2376 = vmul.f32 %v2373, %v2375
    %v2377 = vsub.f32 1.0, %v2376
    %v2378 = vmul.f32 %v2375, %v2377
    %v2379 = vadd.f32 %v2375, %v2378
    %vm2380 = vweird.f32 %v2373
    %vm2381 = vweird.f32 %v2375
    %vm2382 = vmor %vm2380, %vm2381
    %v2383 = vsel %vm2382, %v2375, %v2379
    %v2384 = vand.u32 2147483647, %v2373
    %vm2385 = vcmp.eq.f32.partialorder %v2384, 8.507059e+37
    %v2386 = vand.u32 %v2373, 2147483648
    %v2387 = vor.u32 1.1754944e-38, %v2386
    %v2388 = vsel %vm2385, %v2387, %v2383
    %v2389 = vmul.f32 1.0, %v2388
    %v2390 = vrcp.pop %v2374
    %v2391 = vmul.f32 %v2374, %v2390
    %v2392 = vsub.f32 1.0, %v2391
    %v2393 = vmul.f32 %v2390, %v2392
    %v2394 = vadd.f32 %v2390, %v2393
    %vm2395 = vweird.f32 %v2374
    %vm2396 = vweird.f32 %v2390
    %vm2397 = vmor %vm2395, %vm2396
    %v2398 = vsel %vm2397, %v2390, %v2394
    %v2399 = vand.u32 2147483647, %v2374
    %vm2400 = vcmp.eq.f32.partialorder %v2399, 8.507059e+37
    %v2401 = vand.u32 %v2374, 2147483648
    %v2402 = vor.u32 1.1754944e-38, %v2401
    %v2403 = vsel %vm2400, %v2402, %v2398
    %v2404 = vmul.f32 1.0, %v2403
    %v2405 = vld [vmem:[#allocation5] sm:$0xff]
    %v2406 = vld [vmem:[#allocation5 + $0x8] sm:$0xff]
    %v2407 = vmul.f32 %v2349, %v2405
    %v2408 = vmul.f32 %v2364, %v2406
    %v2409 = vmul.f32 %v2311, %v2365
    %v2410 = vmul.f32 %v2326, %v2366
    %v2411 = vadd.f32 %v2407, %v2409
    %v2412 = vadd.f32 %v2408, %v2410
    %v2413 = vtanh.pop %v2411
    %v2414 = vtanh.pop %v2412
    %v2415 = vmul.f32 %v2389, %v2413
    %v2416 = vmul.f32 %v2404, %v2414
    %2417 = vst [vmem:[#allocation5] sm:$0xff] %v2411
    %2418 = vst [vmem:[#allocation5 + $0x8] sm:$0xff] %v2412
    %2419 = vst [vmem:[#allocation4] sm:$0xff] %v2415
    %2420 = vst [vmem:[#allocation4 + $0x8] sm:$0xff] %v2416
    %s2421 = scalar_lea.vmem [#allocation3], 32
    %2422 = vst [vmem:[%s2421] sm:$0xff] %v2415
    %2423 = vst [vmem:[%s2421 + $0x8] sm:$0xff] %v2416
    %s2424 = scalar_lea.vmem [#allocation2], 192
    %v2425 = vld [vmem:[%s2424] sm:$0xff]
    %v2426 = vld [vmem:[%s2424 + $0x8] sm:$0xff]
    %v2427 = vld [vmem:[%s2424 + $0x10] sm:$0xff]
    %v2428 = vld [vmem:[%s2424 + $0x18] sm:$0xff]
    %v2429 = vld [vmem:[%s2424 + $0x20] sm:$0xff]
    %v2430 = vld [vmem:[%s2424 + $0x28] sm:$0xff]
    %v2431 = vld [vmem:[%s2424 + $0x30] sm:$0xff]
    %v2432 = vld [vmem:[%s2424 + $0x38] sm:$0xff]
    %v2433 = vld [vmem:[#allocation4] sm:$0xff]
    %v2434 = vld [vmem:[#allocation4 + $0x8] sm:$0xff]
    %v2435 = vpack.c.bf16 %v2433, %v2433
    %v2436 = vpack.c.bf16 %v2434, %v2434
    %2437 = vmatpush.bf16.msra.mxu0 %v1146
    %2438 = vmatpush.bf16.msra.mxu0 %v1138
    %2439 = vmatpush.bf16.msra.mxu0 %v1130
    %2440 = vmatpush.bf16.msra.mxu0 %v1122
    %2441 = vmatpush.bf16.msra.mxu0 %v1114
    %2442 = vmatpush.bf16.msra.mxu0 %v1106
    %2443 = vmatpush.bf16.msra.mxu0 %v1098
    %2444 = vmatpush.bf16.msra.mxu0 %v1090
    %2445 = vmatmul.bf16.gmra.mxu0 %v2435
    %v2446 = vpop.f32.mrf.mxu0
    %v2447 = vadd.f32 0.0, %v2446
    %v2448 = vpop.f32.mrf.mxu0
    %2449 = vdwg.mxu0
    %2450 = vmatpush.bf16.msra.mxu0 %v1210
    %2451 = vmatpush.bf16.msra.mxu0 %v1202
    %2452 = vmatpush.bf16.msra.mxu0 %v1194
    %2453 = vmatpush.bf16.msra.mxu0 %v1186
    %2454 = vmatpush.bf16.msra.mxu0 %v1178
    %2455 = vmatpush.bf16.msra.mxu0 %v1170
    %2456 = vmatpush.bf16.msra.mxu0 %v1162
    %2457 = vmatpush.bf16.msra.mxu0 %v1154
    %2458 = vmatmul.bf16.gmra.mxu0 %v2436
    %v2459 = vpop.f32.mrf.mxu0
    %v2460 = vadd.f32 %v2447, %v2459
    %v2461 = vpop.f32.mrf.mxu0
    %2462 = vdwg.mxu0
    %2463 = vmatpush.bf16.msra.mxu0 %v1147
    %2464 = vmatpush.bf16.msra.mxu0 %v1139
    %2465 = vmatpush.bf16.msra.mxu0 %v1131
    %2466 = vmatpush.bf16.msra.mxu0 %v1123
    %2467 = vmatpush.bf16.msra.mxu0 %v1115
    %2468 = vmatpush.bf16.msra.mxu0 %v1107
    %2469 = vmatpush.bf16.msra.mxu0 %v1099
    %2470 = vmatpush.bf16.msra.mxu0 %v1091
    %2471 = vmatmul.bf16.gmra.mxu0 %v2435
    %v2472 = vpop.f32.mrf.mxu0
    %v2473 = vadd.f32 0.0, %v2472
    %v2474 = vpop.f32.mrf.mxu0
    %2475 = vdwg.mxu0
    %2476 = vmatpush.bf16.msra.mxu0 %v1211
    %2477 = vmatpush.bf16.msra.mxu0 %v1203
    %2478 = vmatpush.bf16.msra.mxu0 %v1195
    %2479 = vmatpush.bf16.msra.mxu0 %v1187
    %2480 = vmatpush.bf16.msra.mxu0 %v1179
    %2481 = vmatpush.bf16.msra.mxu0 %v1171
    %2482 = vmatpush.bf16.msra.mxu0 %v1163
    %2483 = vmatpush.bf16.msra.mxu0 %v1155
    %2484 = vmatmul.bf16.gmra.mxu0 %v2436
    %v2485 = vpop.f32.mrf.mxu0
    %v2486 = vadd.f32 %v2473, %v2485
    %v2487 = vpop.f32.mrf.mxu0
    %2488 = vdwg.mxu0
    %2489 = vmatpush.bf16.msra.mxu0 %v1148
    %2490 = vmatpush.bf16.msra.mxu0 %v1140
    %2491 = vmatpush.bf16.msra.mxu0 %v1132
    %2492 = vmatpush.bf16.msra.mxu0 %v1124
    %2493 = vmatpush.bf16.msra.mxu0 %v1116
    %2494 = vmatpush.bf16.msra.mxu0 %v1108
    %2495 = vmatpush.bf16.msra.mxu0 %v1100
    %2496 = vmatpush.bf16.msra.mxu0 %v1092
    %2497 = vmatmul.bf16.gmra.mxu0 %v2435
    %v2498 = vpop.f32.mrf.mxu0
    %v2499 = vadd.f32 0.0, %v2498
    %v2500 = vpop.f32.mrf.mxu0
    %2501 = vdwg.mxu0
    %2502 = vmatpush.bf16.msra.mxu0 %v1212
    %2503 = vmatpush.bf16.msra.mxu0 %v1204
    %2504 = vmatpush.bf16.msra.mxu0 %v1196
    %2505 = vmatpush.bf16.msra.mxu0 %v1188
    %2506 = vmatpush.bf16.msra.mxu0 %v1180
    %2507 = vmatpush.bf16.msra.mxu0 %v1172
    %2508 = vmatpush.bf16.msra.mxu0 %v1164
    %2509 = vmatpush.bf16.msra.mxu0 %v1156
    %2510 = vmatmul.bf16.gmra.mxu0 %v2436
    %v2511 = vpop.f32.mrf.mxu0
    %v2512 = vadd.f32 %v2499, %v2511
    %v2513 = vpop.f32.mrf.mxu0
    %2514 = vdwg.mxu0
    %2515 = vmatpush.bf16.msra.mxu0 %v1149
    %2516 = vmatpush.bf16.msra.mxu0 %v1141
    %2517 = vmatpush.bf16.msra.mxu0 %v1133
    %2518 = vmatpush.bf16.msra.mxu0 %v1125
    %2519 = vmatpush.bf16.msra.mxu0 %v1117
    %2520 = vmatpush.bf16.msra.mxu0 %v1109
    %2521 = vmatpush.bf16.msra.mxu0 %v1101
    %2522 = vmatpush.bf16.msra.mxu0 %v1093
    %2523 = vmatmul.bf16.gmra.mxu0 %v2435
    %v2524 = vpop.f32.mrf.mxu0
    %v2525 = vadd.f32 0.0, %v2524
    %v2526 = vpop.f32.mrf.mxu0
    %2527 = vdwg.mxu0
    %2528 = vmatpush.bf16.msra.mxu0 %v1213
    %2529 = vmatpush.bf16.msra.mxu0 %v1205
    %2530 = vmatpush.bf16.msra.mxu0 %v1197
    %2531 = vmatpush.bf16.msra.mxu0 %v1189
    %2532 = vmatpush.bf16.msra.mxu0 %v1181
    %2533 = vmatpush.bf16.msra.mxu0 %v1173
    %2534 = vmatpush.bf16.msra.mxu0 %v1165
    %2535 = vmatpush.bf16.msra.mxu0 %v1157
    %2536 = vmatmul.bf16.gmra.mxu0 %v2436
    %v2537 = vpop.f32.mrf.mxu0
    %v2538 = vadd.f32 %v2525, %v2537
    %v2539 = vpop.f32.mrf.mxu0
    %2540 = vdwg.mxu0
    %2541 = vmatpush.bf16.msra.mxu0 %v1150
    %2542 = vmatpush.bf16.msra.mxu0 %v1142
    %2543 = vmatpush.bf16.msra.mxu0 %v1134
    %2544 = vmatpush.bf16.msra.mxu0 %v1126
    %2545 = vmatpush.bf16.msra.mxu0 %v1118
    %2546 = vmatpush.bf16.msra.mxu0 %v1110
    %2547 = vmatpush.bf16.msra.mxu0 %v1102
    %2548 = vmatpush.bf16.msra.mxu0 %v1094
    %2549 = vmatmul.bf16.gmra.mxu0 %v2435
    %v2550 = vpop.f32.mrf.mxu0
    %v2551 = vadd.f32 0.0, %v2550
    %v2552 = vpop.f32.mrf.mxu0
    %2553 = vdwg.mxu0
    %2554 = vmatpush.bf16.msra.mxu0 %v1214
    %2555 = vmatpush.bf16.msra.mxu0 %v1206
    %2556 = vmatpush.bf16.msra.mxu0 %v1198
    %2557 = vmatpush.bf16.msra.mxu0 %v1190
    %2558 = vmatpush.bf16.msra.mxu0 %v1182
    %2559 = vmatpush.bf16.msra.mxu0 %v1174
    %2560 = vmatpush.bf16.msra.mxu0 %v1166
    %2561 = vmatpush.bf16.msra.mxu0 %v1158
    %2562 = vmatmul.bf16.gmra.mxu0 %v2436
    %v2563 = vpop.f32.mrf.mxu0
    %v2564 = vadd.f32 %v2551, %v2563
    %v2565 = vpop.f32.mrf.mxu0
    %2566 = vdwg.mxu0
    %2567 = vmatpush.bf16.msra.mxu0 %v1151
    %2568 = vmatpush.bf16.msra.mxu0 %v1143
    %2569 = vmatpush.bf16.msra.mxu0 %v1135
    %2570 = vmatpush.bf16.msra.mxu0 %v1127
    %2571 = vmatpush.bf16.msra.mxu0 %v1119
    %2572 = vmatpush.bf16.msra.mxu0 %v1111
    %2573 = vmatpush.bf16.msra.mxu0 %v1103
    %2574 = vmatpush.bf16.msra.mxu0 %v1095
    %2575 = vmatmul.bf16.gmra.mxu0 %v2435
    %v2576 = vpop.f32.mrf.mxu0
    %v2577 = vadd.f32 0.0, %v2576
    %v2578 = vpop.f32.mrf.mxu0
    %2579 = vdwg.mxu0
    %2580 = vmatpush.bf16.msra.mxu0 %v1215
    %2581 = vmatpush.bf16.msra.mxu0 %v1207
    %2582 = vmatpush.bf16.msra.mxu0 %v1199
    %2583 = vmatpush.bf16.msra.mxu0 %v1191
    %2584 = vmatpush.bf16.msra.mxu0 %v1183
    %2585 = vmatpush.bf16.msra.mxu0 %v1175
    %2586 = vmatpush.bf16.msra.mxu0 %v1167
    %2587 = vmatpush.bf16.msra.mxu0 %v1159
    %2588 = vmatmul.bf16.gmra.mxu0 %v2436
    %v2589 = vpop.f32.mrf.mxu0
    %v2590 = vadd.f32 %v2577, %v2589
    %v2591 = vpop.f32.mrf.mxu0
    %2592 = vdwg.mxu0
    %2593 = vmatpush.bf16.msra.mxu0 %v1152
    %2594 = vmatpush.bf16.msra.mxu0 %v1144
    %2595 = vmatpush.bf16.msra.mxu0 %v1136
    %2596 = vmatpush.bf16.msra.mxu0 %v1128
    %2597 = vmatpush.bf16.msra.mxu0 %v1120
    %2598 = vmatpush.bf16.msra.mxu0 %v1112
    %2599 = vmatpush.bf16.msra.mxu0 %v1104
    %2600 = vmatpush.bf16.msra.mxu0 %v1096
    %2601 = vmatmul.bf16.gmra.mxu0 %v2435
    %v2602 = vpop.f32.mrf.mxu0
    %v2603 = vadd.f32 0.0, %v2602
    %v2604 = vpop.f32.mrf.mxu0
    %2605 = vdwg.mxu0
    %2606 = vmatpush.bf16.msra.mxu0 %v1216
    %2607 = vmatpush.bf16.msra.mxu0 %v1208
    %2608 = vmatpush.bf16.msra.mxu0 %v1200
    %2609 = vmatpush.bf16.msra.mxu0 %v1192
    %2610 = vmatpush.bf16.msra.mxu0 %v1184
    %2611 = vmatpush.bf16.msra.mxu0 %v1176
    %2612 = vmatpush.bf16.msra.mxu0 %v1168
    %2613 = vmatpush.bf16.msra.mxu0 %v1160
    %2614 = vmatmul.bf16.gmra.mxu0 %v2436
    %v2615 = vpop.f32.mrf.mxu0
    %v2616 = vadd.f32 %v2603, %v2615
    %v2617 = vpop.f32.mrf.mxu0
    %2618 = vdwg.mxu0
    %2619 = vmatpush.bf16.msra.mxu0 %v1153
    %2620 = vmatpush.bf16.msra.mxu0 %v1145
    %2621 = vmatpush.bf16.msra.mxu0 %v1137
    %2622 = vmatpush.bf16.msra.mxu0 %v1129
    %2623 = vmatpush.bf16.msra.mxu0 %v1121
    %2624 = vmatpush.bf16.msra.mxu0 %v1113
    %2625 = vmatpush.bf16.msra.mxu0 %v1105
    %2626 = vmatpush.bf16.msra.mxu0 %v1097
    %2627 = vmatmul.bf16.gmra.mxu0 %v2435
    %v2628 = vpop.f32.mrf.mxu0
    %v2629 = vadd.f32 0.0, %v2628
    %v2630 = vpop.f32.mrf.mxu0
    %2631 = vdwg.mxu0
    %2632 = vmatpush.bf16.msra.mxu0 %v1217
    %2633 = vmatpush.bf16.msra.mxu0 %v1209
    %2634 = vmatpush.bf16.msra.mxu0 %v1201
    %2635 = vmatpush.bf16.msra.mxu0 %v1193
    %2636 = vmatpush.bf16.msra.mxu0 %v1185
    %2637 = vmatpush.bf16.msra.mxu0 %v1177
    %2638 = vmatpush.bf16.msra.mxu0 %v1169
    %2639 = vmatpush.bf16.msra.mxu0 %v1161
    %2640 = vmatmul.bf16.gmra.mxu0 %v2436
    %v2641 = vpop.f32.mrf.mxu0
    %v2642 = vadd.f32 %v2629, %v2641
    %v2643 = vpop.f32.mrf.mxu0
    %2644 = vdwg.mxu0
    %v2645 = vadd.f32 %v2425, %v2460
    %v2646 = vadd.f32 %v2426, %v2486
    %v2647 = vadd.f32 %v2427, %v2512
    %v2648 = vadd.f32 %v2428, %v2538
    %v2649 = vadd.f32 %v2429, %v2564
    %v2650 = vadd.f32 %v2430, %v2590
    %v2651 = vadd.f32 %v2431, %v2616
    %v2652 = vadd.f32 %v2432, %v2642
    %v2653 = vxor.u32 %v2645, 2147483648
    %v2654 = vxor.u32 %v2646, 2147483648
    %v2655 = vmul.f32 %v2653, 1.442695
    %v2656 = vpow.pop %v2655
    %v2657 = vmul.f32 %v2654, 1.442695
    %v2658 = vpow.pop %v2657
    %v2659 = vadd.f32 %v2656, 1.0
    %v2660 = vadd.f32 %v2658, 1.0
    %v2661 = vrcp.pop %v2659
    %v2662 = vmul.f32 %v2659, %v2661
    %v2663 = vsub.f32 1.0, %v2662
    %v2664 = vmul.f32 %v2661, %v2663
    %v2665 = vadd.f32 %v2661, %v2664
    %vm2666 = vweird.f32 %v2659
    %vm2667 = vweird.f32 %v2661
    %vm2668 = vmor %vm2666, %vm2667
    %v2669 = vsel %vm2668, %v2661, %v2665
    %v2670 = vand.u32 2147483647, %v2659
    %vm2671 = vcmp.eq.f32.partialorder %v2670, 8.507059e+37
    %v2672 = vand.u32 %v2659, 2147483648
    %v2673 = vor.u32 1.1754944e-38, %v2672
    %v2674 = vsel %vm2671, %v2673, %v2669
    %v2675 = vmul.f32 1.0, %v2674
    %v2676 = vrcp.pop %v2660
    %v2677 = vmul.f32 %v2660, %v2676
    %v2678 = vsub.f32 1.0, %v2677
    %v2679 = vmul.f32 %v2676, %v2678
    %v2680 = vadd.f32 %v2676, %v2679
    %vm2681 = vweird.f32 %v2660
    %vm2682 = vweird.f32 %v2676
    %vm2683 = vmor %vm2681, %vm2682
    %v2684 = vsel %vm2683, %v2676, %v2680
    %v2685 = vand.u32 2147483647, %v2660
    %vm2686 = vcmp.eq.f32.partialorder %v2685, 8.507059e+37
    %v2687 = vand.u32 %v2660, 2147483648
    %v2688 = vor.u32 1.1754944e-38, %v2687
    %v2689 = vsel %vm2686, %v2688, %v2684
    %v2690 = vmul.f32 1.0, %v2689
    %v2691 = vxor.u32 %v2647, 2147483648
    %v2692 = vxor.u32 %v2648, 2147483648
    %v2693 = vmul.f32 %v2691, 1.442695
    %v2694 = vpow.pop %v2693
    %v2695 = vmul.f32 %v2692, 1.442695
    %v2696 = vpow.pop %v2695
    %v2697 = vadd.f32 %v2694, 1.0
    %v2698 = vadd.f32 %v2696, 1.0
    %v2699 = vrcp.pop %v2697
    %v2700 = vmul.f32 %v2697, %v2699
    %v2701 = vsub.f32 1.0, %v2700
    %v2702 = vmul.f32 %v2699, %v2701
    %v2703 = vadd.f32 %v2699, %v2702
    %vm2704 = vweird.f32 %v2697
    %vm2705 = vweird.f32 %v2699
    %vm2706 = vmor %vm2704, %vm2705
    %v2707 = vsel %vm2706, %v2699, %v2703
    %v2708 = vand.u32 2147483647, %v2697
    %vm2709 = vcmp.eq.f32.partialorder %v2708, 8.507059e+37
    %v2710 = vand.u32 %v2697, 2147483648
    %v2711 = vor.u32 1.1754944e-38, %v2710
    %v2712 = vsel %vm2709, %v2711, %v2707
    %v2713 = vmul.f32 1.0, %v2712
    %v2714 = vrcp.pop %v2698
    %v2715 = vmul.f32 %v2698, %v2714
    %v2716 = vsub.f32 1.0, %v2715
    %v2717 = vmul.f32 %v2714, %v2716
    %v2718 = vadd.f32 %v2714, %v2717
    %vm2719 = vweird.f32 %v2698
    %vm2720 = vweird.f32 %v2714
    %vm2721 = vmor %vm2719, %vm2720
    %v2722 = vsel %vm2721, %v2714, %v2718
    %v2723 = vand.u32 2147483647, %v2698
    %vm2724 = vcmp.eq.f32.partialorder %v2723, 8.507059e+37
    %v2725 = vand.u32 %v2698, 2147483648
    %v2726 = vor.u32 1.1754944e-38, %v2725
    %v2727 = vsel %vm2724, %v2726, %v2722
    %v2728 = vmul.f32 1.0, %v2727
    %v2729 = vtanh.pop %v2649
    %v2730 = vtanh.pop %v2650
    %v2731 = vxor.u32 %v2651, 2147483648
    %v2732 = vxor.u32 %v2652, 2147483648
    %v2733 = vmul.f32 %v2731, 1.442695
    %v2734 = vpow.pop %v2733
    %v2735 = vmul.f32 %v2732, 1.442695
    %v2736 = vpow.pop %v2735
    %v2737 = vadd.f32 %v2734, 1.0
    %v2738 = vadd.f32 %v2736, 1.0
    %v2739 = vrcp.pop %v2737
    %v2740 = vmul.f32 %v2737, %v2739
    %v2741 = vsub.f32 1.0, %v2740
    %v2742 = vmul.f32 %v2739, %v2741
    %v2743 = vadd.f32 %v2739, %v2742
    %vm2744 = vweird.f32 %v2737
    %vm2745 = vweird.f32 %v2739
    %vm2746 = vmor %vm2744, %vm2745
    %v2747 = vsel %vm2746, %v2739, %v2743
    %v2748 = vand.u32 2147483647, %v2737
    %vm2749 = vcmp.eq.f32.partialorder %v2748, 8.507059e+37
    %v2750 = vand.u32 %v2737, 2147483648
    %v2751 = vor.u32 1.1754944e-38, %v2750
    %v2752 = vsel %vm2749, %v2751, %v2747
    %v2753 = vmul.f32 1.0, %v2752
    %v2754 = vrcp.pop %v2738
    %v2755 = vmul.f32 %v2738, %v2754
    %v2756 = vsub.f32 1.0, %v2755
    %v2757 = vmul.f32 %v2754, %v2756
    %v2758 = vadd.f32 %v2754, %v2757
    %vm2759 = vweird.f32 %v2738
    %vm2760 = vweird.f32 %v2754
    %vm2761 = vmor %vm2759, %vm2760
    %v2762 = vsel %vm2761, %v2754, %v2758
    %v2763 = vand.u32 2147483647, %v2738
    %vm2764 = vcmp.eq.f32.partialorder %v2763, 8.507059e+37
    %v2765 = vand.u32 %v2738, 2147483648
    %v2766 = vor.u32 1.1754944e-38, %v2765
    %v2767 = vsel %vm2764, %v2766, %v2762
    %v2768 = vmul.f32 1.0, %v2767
    %v2769 = vld [vmem:[#allocation5] sm:$0xff]
    %v2770 = vld [vmem:[#allocation5 + $0x8] sm:$0xff]
    %v2771 = vmul.f32 %v2713, %v2769
    %v2772 = vmul.f32 %v2728, %v2770
    %v2773 = vmul.f32 %v2675, %v2729
    %v2774 = vmul.f32 %v2690, %v2730
    %v2775 = vadd.f32 %v2771, %v2773
    %v2776 = vadd.f32 %v2772, %v2774
    %v2777 = vtanh.pop %v2775
    %v2778 = vtanh.pop %v2776
    %v2779 = vmul.f32 %v2753, %v2777
    %v2780 = vmul.f32 %v2768, %v2778
    %2781 = vst [vmem:[#allocation5] sm:$0xff] %v2775
    %2782 = vst [vmem:[#allocation5 + $0x8] sm:$0xff] %v2776
    %2783 = vst [vmem:[#allocation4] sm:$0xff] %v2779
    %2784 = vst [vmem:[#allocation4 + $0x8] sm:$0xff] %v2780
    %s2785 = scalar_lea.vmem [#allocation3], 48
    %2786 = vst [vmem:[%s2785] sm:$0xff] %v2779
    %2787 = vst [vmem:[%s2785 + $0x8] sm:$0xff] %v2780
    %s2788 = scalar_lea.vmem [#allocation2], 256
    %v2789 = vld [vmem:[%s2788] sm:$0xff]
    %v2790 = vld [vmem:[%s2788 + $0x8] sm:$0xff]
    %v2791 = vld [vmem:[%s2788 + $0x10] sm:$0xff]
    %v2792 = vld [vmem:[%s2788 + $0x18] sm:$0xff]
    %v2793 = vld [vmem:[%s2788 + $0x20] sm:$0xff]
    %v2794 = vld [vmem:[%s2788 + $0x28] sm:$0xff]
    %v2795 = vld [vmem:[%s2788 + $0x30] sm:$0xff]
    %v2796 = vld [vmem:[%s2788 + $0x38] sm:$0xff]
    %v2797 = vld [vmem:[#allocation4] sm:$0xff]
    %v2798 = vld [vmem:[#allocation4 + $0x8] sm:$0xff]
    %v2799 = vpack.c.bf16 %v2797, %v2797
    %v2800 = vpack.c.bf16 %v2798, %v2798
    %2801 = vmatpush.bf16.msra.mxu0 %v1146
    %2802 = vmatpush.bf16.msra.mxu0 %v1138
    %2803 = vmatpush.bf16.msra.mxu0 %v1130
    %2804 = vmatpush.bf16.msra.mxu0 %v1122
    %2805 = vmatpush.bf16.msra.mxu0 %v1114
    %2806 = vmatpush.bf16.msra.mxu0 %v1106
    %2807 = vmatpush.bf16.msra.mxu0 %v1098
    %2808 = vmatpush.bf16.msra.mxu0 %v1090
    %2809 = vmatmul.bf16.gmra.mxu0 %v2799
    %v2810 = vpop.f32.mrf.mxu0
    %v2811 = vadd.f32 0.0, %v2810
    %v2812 = vpop.f32.mrf.mxu0
    %2813 = vdwg.mxu0
    %2814 = vmatpush.bf16.msra.mxu0 %v1210
    %2815 = vmatpush.bf16.msra.mxu0 %v1202
    %2816 = vmatpush.bf16.msra.mxu0 %v1194
    %2817 = vmatpush.bf16.msra.mxu0 %v1186
    %2818 = vmatpush.bf16.msra.mxu0 %v1178
    %2819 = vmatpush.bf16.msra.mxu0 %v1170
    %2820 = vmatpush.bf16.msra.mxu0 %v1162
    %2821 = vmatpush.bf16.msra.mxu0 %v1154
    %2822 = vmatmul.bf16.gmra.mxu0 %v2800
    %v2823 = vpop.f32.mrf.mxu0
    %v2824 = vadd.f32 %v2811, %v2823
    %v2825 = vpop.f32.mrf.mxu0
    %2826 = vdwg.mxu0
    %2827 = vmatpush.bf16.msra.mxu0 %v1147
    %2828 = vmatpush.bf16.msra.mxu0 %v1139
    %2829 = vmatpush.bf16.msra.mxu0 %v1131
    %2830 = vmatpush.bf16.msra.mxu0 %v1123
    %2831 = vmatpush.bf16.msra.mxu0 %v1115
    %2832 = vmatpush.bf16.msra.mxu0 %v1107
    %2833 = vmatpush.bf16.msra.mxu0 %v1099
    %2834 = vmatpush.bf16.msra.mxu0 %v1091
    %2835 = vmatmul.bf16.gmra.mxu0 %v2799
    %v2836 = vpop.f32.mrf.mxu0
    %v2837 = vadd.f32 0.0, %v2836
    %v2838 = vpop.f32.mrf.mxu0
    %2839 = vdwg.mxu0
    %2840 = vmatpush.bf16.msra.mxu0 %v1211
    %2841 = vmatpush.bf16.msra.mxu0 %v1203
    %2842 = vmatpush.bf16.msra.mxu0 %v1195
    %2843 = vmatpush.bf16.msra.mxu0 %v1187
    %2844 = vmatpush.bf16.msra.mxu0 %v1179
    %2845 = vmatpush.bf16.msra.mxu0 %v1171
    %2846 = vmatpush.bf16.msra.mxu0 %v1163
    %2847 = vmatpush.bf16.msra.mxu0 %v1155
    %2848 = vmatmul.bf16.gmra.mxu0 %v2800
    %v2849 = vpop.f32.mrf.mxu0
    %v2850 = vadd.f32 %v2837, %v2849
    %v2851 = vpop.f32.mrf.mxu0
    %2852 = vdwg.mxu0
    %2853 = vmatpush.bf16.msra.mxu0 %v1148
    %2854 = vmatpush.bf16.msra.mxu0 %v1140
    %2855 = vmatpush.bf16.msra.mxu0 %v1132
    %2856 = vmatpush.bf16.msra.mxu0 %v1124
    %2857 = vmatpush.bf16.msra.mxu0 %v1116
    %2858 = vmatpush.bf16.msra.mxu0 %v1108
    %2859 = vmatpush.bf16.msra.mxu0 %v1100
    %2860 = vmatpush.bf16.msra.mxu0 %v1092
    %2861 = vmatmul.bf16.gmra.mxu0 %v2799
    %v2862 = vpop.f32.mrf.mxu0
    %v2863 = vadd.f32 0.0, %v2862
    %v2864 = vpop.f32.mrf.mxu0
    %2865 = vdwg.mxu0
    %2866 = vmatpush.bf16.msra.mxu0 %v1212
    %2867 = vmatpush.bf16.msra.mxu0 %v1204
    %2868 = vmatpush.bf16.msra.mxu0 %v1196
    %2869 = vmatpush.bf16.msra.mxu0 %v1188
    %2870 = vmatpush.bf16.msra.mxu0 %v1180
    %2871 = vmatpush.bf16.msra.mxu0 %v1172
    %2872 = vmatpush.bf16.msra.mxu0 %v1164
    %2873 = vmatpush.bf16.msra.mxu0 %v1156
    %2874 = vmatmul.bf16.gmra.mxu0 %v2800
    %v2875 = vpop.f32.mrf.mxu0
    %v2876 = vadd.f32 %v2863, %v2875
    %v2877 = vpop.f32.mrf.mxu0
    %2878 = vdwg.mxu0
    %2879 = vmatpush.bf16.msra.mxu0 %v1149
    %2880 = vmatpush.bf16.msra.mxu0 %v1141
    %2881 = vmatpush.bf16.msra.mxu0 %v1133
    %2882 = vmatpush.bf16.msra.mxu0 %v1125
    %2883 = vmatpush.bf16.msra.mxu0 %v1117
    %2884 = vmatpush.bf16.msra.mxu0 %v1109
    %2885 = vmatpush.bf16.msra.mxu0 %v1101
    %2886 = vmatpush.bf16.msra.mxu0 %v1093
    %2887 = vmatmul.bf16.gmra.mxu0 %v2799
    %v2888 = vpop.f32.mrf.mxu0
    %v2889 = vadd.f32 0.0, %v2888
    %v2890 = vpop.f32.mrf.mxu0
    %2891 = vdwg.mxu0
    %2892 = vmatpush.bf16.msra.mxu0 %v1213
    %2893 = vmatpush.bf16.msra.mxu0 %v1205
    %2894 = vmatpush.bf16.msra.mxu0 %v1197
    %2895 = vmatpush.bf16.msra.mxu0 %v1189
    %2896 = vmatpush.bf16.msra.mxu0 %v1181
    %2897 = vmatpush.bf16.msra.mxu0 %v1173
    %2898 = vmatpush.bf16.msra.mxu0 %v1165
    %2899 = vmatpush.bf16.msra.mxu0 %v1157
    %2900 = vmatmul.bf16.gmra.mxu0 %v2800
    %v2901 = vpop.f32.mrf.mxu0
    %v2902 = vadd.f32 %v2889, %v2901
    %v2903 = vpop.f32.mrf.mxu0
    %2904 = vdwg.mxu0
    %2905 = vmatpush.bf16.msra.mxu0 %v1150
    %2906 = vmatpush.bf16.msra.mxu0 %v1142
    %2907 = vmatpush.bf16.msra.mxu0 %v1134
    %2908 = vmatpush.bf16.msra.mxu0 %v1126
    %2909 = vmatpush.bf16.msra.mxu0 %v1118
    %2910 = vmatpush.bf16.msra.mxu0 %v1110
    %2911 = vmatpush.bf16.msra.mxu0 %v1102
    %2912 = vmatpush.bf16.msra.mxu0 %v1094
    %2913 = vmatmul.bf16.gmra.mxu0 %v2799
    %v2914 = vpop.f32.mrf.mxu0
    %v2915 = vadd.f32 0.0, %v2914
    %v2916 = vpop.f32.mrf.mxu0
    %2917 = vdwg.mxu0
    %2918 = vmatpush.bf16.msra.mxu0 %v1214
    %2919 = vmatpush.bf16.msra.mxu0 %v1206
    %2920 = vmatpush.bf16.msra.mxu0 %v1198
    %2921 = vmatpush.bf16.msra.mxu0 %v1190
    %2922 = vmatpush.bf16.msra.mxu0 %v1182
    %2923 = vmatpush.bf16.msra.mxu0 %v1174
    %2924 = vmatpush.bf16.msra.mxu0 %v1166
    %2925 = vmatpush.bf16.msra.mxu0 %v1158
    %2926 = vmatmul.bf16.gmra.mxu0 %v2800
    %v2927 = vpop.f32.mrf.mxu0
    %v2928 = vadd.f32 %v2915, %v2927
    %v2929 = vpop.f32.mrf.mxu0
    %2930 = vdwg.mxu0
    %2931 = vmatpush.bf16.msra.mxu0 %v1151
    %2932 = vmatpush.bf16.msra.mxu0 %v1143
    %2933 = vmatpush.bf16.msra.mxu0 %v1135
    %2934 = vmatpush.bf16.msra.mxu0 %v1127
    %2935 = vmatpush.bf16.msra.mxu0 %v1119
    %2936 = vmatpush.bf16.msra.mxu0 %v1111
    %2937 = vmatpush.bf16.msra.mxu0 %v1103
    %2938 = vmatpush.bf16.msra.mxu0 %v1095
    %2939 = vmatmul.bf16.gmra.mxu0 %v2799
    %v2940 = vpop.f32.mrf.mxu0
    %v2941 = vadd.f32 0.0, %v2940
    %v2942 = vpop.f32.mrf.mxu0
    %2943 = vdwg.mxu0
    %2944 = vmatpush.bf16.msra.mxu0 %v1215
    %2945 = vmatpush.bf16.msra.mxu0 %v1207
    %2946 = vmatpush.bf16.msra.mxu0 %v1199
    %2947 = vmatpush.bf16.msra.mxu0 %v1191
    %2948 = vmatpush.bf16.msra.mxu0 %v1183
    %2949 = vmatpush.bf16.msra.mxu0 %v1175
    %2950 = vmatpush.bf16.msra.mxu0 %v1167
    %2951 = vmatpush.bf16.msra.mxu0 %v1159
    %2952 = vmatmul.bf16.gmra.mxu0 %v2800
    %v2953 = vpop.f32.mrf.mxu0
    %v2954 = vadd.f32 %v2941, %v2953
    %v2955 = vpop.f32.mrf.mxu0
    %2956 = vdwg.mxu0
    %2957 = vmatpush.bf16.msra.mxu0 %v1152
    %2958 = vmatpush.bf16.msra.mxu0 %v1144
    %2959 = vmatpush.bf16.msra.mxu0 %v1136
    %2960 = vmatpush.bf16.msra.mxu0 %v1128
    %2961 = vmatpush.bf16.msra.mxu0 %v1120
    %2962 = vmatpush.bf16.msra.mxu0 %v1112
    %2963 = vmatpush.bf16.msra.mxu0 %v1104
    %2964 = vmatpush.bf16.msra.mxu0 %v1096
    %2965 = vmatmul.bf16.gmra.mxu0 %v2799
    %v2966 = vpop.f32.mrf.mxu0
    %v2967 = vadd.f32 0.0, %v2966
    %v2968 = vpop.f32.mrf.mxu0
    %2969 = vdwg.mxu0
    %2970 = vmatpush.bf16.msra.mxu0 %v1216
    %2971 = vmatpush.bf16.msra.mxu0 %v1208
    %2972 = vmatpush.bf16.msra.mxu0 %v1200
    %2973 = vmatpush.bf16.msra.mxu0 %v1192
    %2974 = vmatpush.bf16.msra.mxu0 %v1184
    %2975 = vmatpush.bf16.msra.mxu0 %v1176
    %2976 = vmatpush.bf16.msra.mxu0 %v1168
    %2977 = vmatpush.bf16.msra.mxu0 %v1160
    %2978 = vmatmul.bf16.gmra.mxu0 %v2800
    %v2979 = vpop.f32.mrf.mxu0
    %v2980 = vadd.f32 %v2967, %v2979
    %v2981 = vpop.f32.mrf.mxu0
    %2982 = vdwg.mxu0
    %2983 = vmatpush.bf16.msra.mxu0 %v1153
    %2984 = vmatpush.bf16.msra.mxu0 %v1145
    %2985 = vmatpush.bf16.msra.mxu0 %v1137
    %2986 = vmatpush.bf16.msra.mxu0 %v1129
    %2987 = vmatpush.bf16.msra.mxu0 %v1121
    %2988 = vmatpush.bf16.msra.mxu0 %v1113
    %2989 = vmatpush.bf16.msra.mxu0 %v1105
    %2990 = vmatpush.bf16.msra.mxu0 %v1097
    %2991 = vmatmul.bf16.gmra.mxu0 %v2799
    %v2992 = vpop.f32.mrf.mxu0
    %v2993 = vadd.f32 0.0, %v2992
    %v2994 = vpop.f32.mrf.mxu0
    %2995 = vdwg.mxu0
    %2996 = vmatpush.bf16.msra.mxu0 %v1217
    %2997 = vmatpush.bf16.msra.mxu0 %v1209
    %2998 = vmatpush.bf16.msra.mxu0 %v1201
    %2999 = vmatpush.bf16.msra.mxu0 %v1193
    %3000 = vmatpush.bf16.msra.mxu0 %v1185
    %3001 = vmatpush.bf16.msra.mxu0 %v1177
    %3002 = vmatpush.bf16.msra.mxu0 %v1169
    %3003 = vmatpush.bf16.msra.mxu0 %v1161
    %3004 = vmatmul.bf16.gmra.mxu0 %v2800
    %v3005 = vpop.f32.mrf.mxu0
    %v3006 = vadd.f32 %v2993, %v3005
    %v3007 = vpop.f32.mrf.mxu0
    %3008 = vdwg.mxu0
    %v3009 = vadd.f32 %v2789, %v2824
    %v3010 = vadd.f32 %v2790, %v2850
    %v3011 = vadd.f32 %v2791, %v2876
    %v3012 = vadd.f32 %v2792, %v2902
    %v3013 = vadd.f32 %v2793, %v2928
    %v3014 = vadd.f32 %v2794, %v2954
    %v3015 = vadd.f32 %v2795, %v2980
    %v3016 = vadd.f32 %v2796, %v3006
    %v3017 = vxor.u32 %v3009, 2147483648
    %v3018 = vxor.u32 %v3010, 2147483648
    %v3019 = vmul.f32 %v3017, 1.442695
    %v3020 = vpow.pop %v3019
    %v3021 = vmul.f32 %v3018, 1.442695
    %v3022 = vpow.pop %v3021
    %v3023 = vadd.f32 %v3020, 1.0
    %v3024 = vadd.f32 %v3022, 1.0
    %v3025 = vrcp.pop %v3023
    %v3026 = vmul.f32 %v3023, %v3025
    %v3027 = vsub.f32 1.0, %v3026
    %v3028 = vmul.f32 %v3025, %v3027
    %v3029 = vadd.f32 %v3025, %v3028
    %vm3030 = vweird.f32 %v3023
    %vm3031 = vweird.f32 %v3025
    %vm3032 = vmor %vm3030, %vm3031
    %v3033 = vsel %vm3032, %v3025, %v3029
    %v3034 = vand.u32 2147483647, %v3023
    %vm3035 = vcmp.eq.f32.partialorder %v3034, 8.507059e+37
    %v3036 = vand.u32 %v3023, 2147483648
    %v3037 = vor.u32 1.1754944e-38, %v3036
    %v3038 = vsel %vm3035, %v3037, %v3033
    %v3039 = vmul.f32 1.0, %v3038
    %v3040 = vrcp.pop %v3024
    %v3041 = vmul.f32 %v3024, %v3040
    %v3042 = vsub.f32 1.0, %v3041
    %v3043 = vmul.f32 %v3040, %v3042
    %v3044 = vadd.f32 %v3040, %v3043
    %vm3045 = vweird.f32 %v3024
    %vm3046 = vweird.f32 %v3040
    %vm3047 = vmor %vm3045, %vm3046
    %v3048 = vsel %vm3047, %v3040, %v3044
    %v3049 = vand.u32 2147483647, %v3024
    %vm3050 = vcmp.eq.f32.partialorder %v3049, 8.507059e+37
    %v3051 = vand.u32 %v3024, 2147483648
    %v3052 = vor.u32 1.1754944e-38, %v3051
    %v3053 = vsel %vm3050, %v3052, %v3048
    %v3054 = vmul.f32 1.0, %v3053
    %v3055 = vxor.u32 %v3011, 2147483648
    %v3056 = vxor.u32 %v3012, 2147483648
    %v3057 = vmul.f32 %v3055, 1.442695
    %v3058 = vpow.pop %v3057
    %v3059 = vmul.f32 %v3056, 1.442695
    %v3060 = vpow.pop %v3059
    %v3061 = vadd.f32 %v3058, 1.0
    %v3062 = vadd.f32 %v3060, 1.0
    %v3063 = vrcp.pop %v3061
    %v3064 = vmul.f32 %v3061, %v3063
    %v3065 = vsub.f32 1.0, %v3064
    %v3066 = vmul.f32 %v3063, %v3065
    %v3067 = vadd.f32 %v3063, %v3066
    %vm3068 = vweird.f32 %v3061
    %vm3069 = vweird.f32 %v3063
    %vm3070 = vmor %vm3068, %vm3069
    %v3071 = vsel %vm3070, %v3063, %v3067
    %v3072 = vand.u32 2147483647, %v3061
    %vm3073 = vcmp.eq.f32.partialorder %v3072, 8.507059e+37
    %v3074 = vand.u32 %v3061, 2147483648
    %v3075 = vor.u32 1.1754944e-38, %v3074
    %v3076 = vsel %vm3073, %v3075, %v3071
    %v3077 = vmul.f32 1.0, %v3076
    %v3078 = vrcp.pop %v3062
    %v3079 = vmul.f32 %v3062, %v3078
    %v3080 = vsub.f32 1.0, %v3079
    %v3081 = vmul.f32 %v3078, %v3080
    %v3082 = vadd.f32 %v3078, %v3081
    %vm3083 = vweird.f32 %v3062
    %vm3084 = vweird.f32 %v3078
    %vm3085 = vmor %vm3083, %vm3084
    %v3086 = vsel %vm3085, %v3078, %v3082
    %v3087 = vand.u32 2147483647, %v3062
    %vm3088 = vcmp.eq.f32.partialorder %v3087, 8.507059e+37
    %v3089 = vand.u32 %v3062, 2147483648
    %v3090 = vor.u32 1.1754944e-38, %v3089
    %v3091 = vsel %vm3088, %v3090, %v3086
    %v3092 = vmul.f32 1.0, %v3091
    %v3093 = vtanh.pop %v3013
    %v3094 = vtanh.pop %v3014
    %v3095 = vxor.u32 %v3015, 2147483648
    %v3096 = vxor.u32 %v3016, 2147483648
    %v3097 = vmul.f32 %v3095, 1.442695
    %v3098 = vpow.pop %v3097
    %v3099 = vmul.f32 %v3096, 1.442695
    %v3100 = vpow.pop %v3099
    %v3101 = vadd.f32 %v3098, 1.0
    %v3102 = vadd.f32 %v3100, 1.0
    %v3103 = vrcp.pop %v3101
    %v3104 = vmul.f32 %v3101, %v3103
    %v3105 = vsub.f32 1.0, %v3104
    %v3106 = vmul.f32 %v3103, %v3105
    %v3107 = vadd.f32 %v3103, %v3106
    %vm3108 = vweird.f32 %v3101
    %vm3109 = vweird.f32 %v3103
    %vm3110 = vmor %vm3108, %vm3109
    %v3111 = vsel %vm3110, %v3103, %v3107
    %v3112 = vand.u32 2147483647, %v3101
    %vm3113 = vcmp.eq.f32.partialorder %v3112, 8.507059e+37
    %v3114 = vand.u32 %v3101, 2147483648
    %v3115 = vor.u32 1.1754944e-38, %v3114
    %v3116 = vsel %vm3113, %v3115, %v3111
    %v3117 = vmul.f32 1.0, %v3116
    %v3118 = vrcp.pop %v3102
    %v3119 = vmul.f32 %v3102, %v3118
    %v3120 = vsub.f32 1.0, %v3119
    %v3121 = vmul.f32 %v3118, %v3120
    %v3122 = vadd.f32 %v3118, %v3121
    %vm3123 = vweird.f32 %v3102
    %vm3124 = vweird.f32 %v3118
    %vm3125 = vmor %vm3123, %vm3124
    %v3126 = vsel %vm3125, %v3118, %v3122
    %v3127 = vand.u32 2147483647, %v3102
    %vm3128 = vcmp.eq.f32.partialorder %v3127, 8.507059e+37
    %v3129 = vand.u32 %v3102, 2147483648
    %v3130 = vor.u32 1.1754944e-38, %v3129
    %v3131 = vsel %vm3128, %v3130, %v3126
    %v3132 = vmul.f32 1.0, %v3131
    %v3133 = vld [vmem:[#allocation5] sm:$0xff]
    %v3134 = vld [vmem:[#allocation5 + $0x8] sm:$0xff]
    %v3135 = vmul.f32 %v3077, %v3133
    %v3136 = vmul.f32 %v3092, %v3134
    %v3137 = vmul.f32 %v3039, %v3093
    %v3138 = vmul.f32 %v3054, %v3094
    %v3139 = vadd.f32 %v3135, %v3137
    %v3140 = vadd.f32 %v3136, %v3138
    %v3141 = vtanh.pop %v3139
    %v3142 = vtanh.pop %v3140
    %v3143 = vmul.f32 %v3117, %v3141
    %v3144 = vmul.f32 %v3132, %v3142
    %3145 = vst [vmem:[#allocation5] sm:$0xff] %v3139
    %3146 = vst [vmem:[#allocation5 + $0x8] sm:$0xff] %v3140
    %3147 = vst [vmem:[#allocation4] sm:$0xff] %v3143
    %3148 = vst [vmem:[#allocation4 + $0x8] sm:$0xff] %v3144
    %s3149 = scalar_lea.vmem [#allocation3], 64
    %3150 = vst [vmem:[%s3149] sm:$0xff] %v3143
    %3151 = vst [vmem:[%s3149 + $0x8] sm:$0xff] %v3144
    %s3152 = scalar_lea.vmem [#allocation2], 320
    %v3153 = vld [vmem:[%s3152] sm:$0xff]
    %v3154 = vld [vmem:[%s3152 + $0x8] sm:$0xff]
    %v3155 = vld [vmem:[%s3152 + $0x10] sm:$0xff]
    %v3156 = vld [vmem:[%s3152 + $0x18] sm:$0xff]
    %v3157 = vld [vmem:[%s3152 + $0x20] sm:$0xff]
    %v3158 = vld [vmem:[%s3152 + $0x28] sm:$0xff]
    %v3159 = vld [vmem:[%s3152 + $0x30] sm:$0xff]
    %v3160 = vld [vmem:[%s3152 + $0x38] sm:$0xff]
    %v3161 = vld [vmem:[#allocation4] sm:$0xff]
    %v3162 = vld [vmem:[#allocation4 + $0x8] sm:$0xff]
    %v3163 = vpack.c.bf16 %v3161, %v3161
    %v3164 = vpack.c.bf16 %v3162, %v3162
    %3165 = vmatpush.bf16.msra.mxu0 %v1146
    %3166 = vmatpush.bf16.msra.mxu0 %v1138
    %3167 = vmatpush.bf16.msra.mxu0 %v1130
    %3168 = vmatpush.bf16.msra.mxu0 %v1122
    %3169 = vmatpush.bf16.msra.mxu0 %v1114
    %3170 = vmatpush.bf16.msra.mxu0 %v1106
    %3171 = vmatpush.bf16.msra.mxu0 %v1098
    %3172 = vmatpush.bf16.msra.mxu0 %v1090
    %3173 = vmatmul.bf16.gmra.mxu0 %v3163
    %v3174 = vpop.f32.mrf.mxu0
    %v3175 = vadd.f32 0.0, %v3174
    %v3176 = vpop.f32.mrf.mxu0
    %3177 = vdwg.mxu0
    %3178 = vmatpush.bf16.msra.mxu0 %v1210
    %3179 = vmatpush.bf16.msra.mxu0 %v1202
    %3180 = vmatpush.bf16.msra.mxu0 %v1194
    %3181 = vmatpush.bf16.msra.mxu0 %v1186
    %3182 = vmatpush.bf16.msra.mxu0 %v1178
    %3183 = vmatpush.bf16.msra.mxu0 %v1170
    %3184 = vmatpush.bf16.msra.mxu0 %v1162
    %3185 = vmatpush.bf16.msra.mxu0 %v1154
    %3186 = vmatmul.bf16.gmra.mxu0 %v3164
    %v3187 = vpop.f32.mrf.mxu0
    %v3188 = vadd.f32 %v3175, %v3187
    %v3189 = vpop.f32.mrf.mxu0
    %3190 = vdwg.mxu0
    %3191 = vmatpush.bf16.msra.mxu0 %v1147
    %3192 = vmatpush.bf16.msra.mxu0 %v1139
    %3193 = vmatpush.bf16.msra.mxu0 %v1131
    %3194 = vmatpush.bf16.msra.mxu0 %v1123
    %3195 = vmatpush.bf16.msra.mxu0 %v1115
    %3196 = vmatpush.bf16.msra.mxu0 %v1107
    %3197 = vmatpush.bf16.msra.mxu0 %v1099
    %3198 = vmatpush.bf16.msra.mxu0 %v1091
    %3199 = vmatmul.bf16.gmra.mxu0 %v3163
    %v3200 = vpop.f32.mrf.mxu0
    %v3201 = vadd.f32 0.0, %v3200
    %v3202 = vpop.f32.mrf.mxu0
    %3203 = vdwg.mxu0
    %3204 = vmatpush.bf16.msra.mxu0 %v1211
    %3205 = vmatpush.bf16.msra.mxu0 %v1203
    %3206 = vmatpush.bf16.msra.mxu0 %v1195
    %3207 = vmatpush.bf16.msra.mxu0 %v1187
    %3208 = vmatpush.bf16.msra.mxu0 %v1179
    %3209 = vmatpush.bf16.msra.mxu0 %v1171
    %3210 = vmatpush.bf16.msra.mxu0 %v1163
    %3211 = vmatpush.bf16.msra.mxu0 %v1155
    %3212 = vmatmul.bf16.gmra.mxu0 %v3164
    %v3213 = vpop.f32.mrf.mxu0
    %v3214 = vadd.f32 %v3201, %v3213
    %v3215 = vpop.f32.mrf.mxu0
    %3216 = vdwg.mxu0
    %3217 = vmatpush.bf16.msra.mxu0 %v1148
    %3218 = vmatpush.bf16.msra.mxu0 %v1140
    %3219 = vmatpush.bf16.msra.mxu0 %v1132
    %3220 = vmatpush.bf16.msra.mxu0 %v1124
    %3221 = vmatpush.bf16.msra.mxu0 %v1116
    %3222 = vmatpush.bf16.msra.mxu0 %v1108
    %3223 = vmatpush.bf16.msra.mxu0 %v1100
    %3224 = vmatpush.bf16.msra.mxu0 %v1092
    %3225 = vmatmul.bf16.gmra.mxu0 %v3163
    %v3226 = vpop.f32.mrf.mxu0
    %v3227 = vadd.f32 0.0, %v3226
    %v3228 = vpop.f32.mrf.mxu0
    %3229 = vdwg.mxu0
    %3230 = vmatpush.bf16.msra.mxu0 %v1212
    %3231 = vmatpush.bf16.msra.mxu0 %v1204
    %3232 = vmatpush.bf16.msra.mxu0 %v1196
    %3233 = vmatpush.bf16.msra.mxu0 %v1188
    %3234 = vmatpush.bf16.msra.mxu0 %v1180
    %3235 = vmatpush.bf16.msra.mxu0 %v1172
    %3236 = vmatpush.bf16.msra.mxu0 %v1164
    %3237 = vmatpush.bf16.msra.mxu0 %v1156
    %3238 = vmatmul.bf16.gmra.mxu0 %v3164
    %v3239 = vpop.f32.mrf.mxu0
    %v3240 = vadd.f32 %v3227, %v3239
    %v3241 = vpop.f32.mrf.mxu0
    %3242 = vdwg.mxu0
    %3243 = vmatpush.bf16.msra.mxu0 %v1149
    %3244 = vmatpush.bf16.msra.mxu0 %v1141
    %3245 = vmatpush.bf16.msra.mxu0 %v1133
    %3246 = vmatpush.bf16.msra.mxu0 %v1125
    %3247 = vmatpush.bf16.msra.mxu0 %v1117
    %3248 = vmatpush.bf16.msra.mxu0 %v1109
    %3249 = vmatpush.bf16.msra.mxu0 %v1101
    %3250 = vmatpush.bf16.msra.mxu0 %v1093
    %3251 = vmatmul.bf16.gmra.mxu0 %v3163
    %v3252 = vpop.f32.mrf.mxu0
    %v3253 = vadd.f32 0.0, %v3252
    %v3254 = vpop.f32.mrf.mxu0
    %3255 = vdwg.mxu0
    %3256 = vmatpush.bf16.msra.mxu0 %v1213
    %3257 = vmatpush.bf16.msra.mxu0 %v1205
    %3258 = vmatpush.bf16.msra.mxu0 %v1197
    %3259 = vmatpush.bf16.msra.mxu0 %v1189
    %3260 = vmatpush.bf16.msra.mxu0 %v1181
    %3261 = vmatpush.bf16.msra.mxu0 %v1173
    %3262 = vmatpush.bf16.msra.mxu0 %v1165
    %3263 = vmatpush.bf16.msra.mxu0 %v1157
    %3264 = vmatmul.bf16.gmra.mxu0 %v3164
    %v3265 = vpop.f32.mrf.mxu0
    %v3266 = vadd.f32 %v3253, %v3265
    %v3267 = vpop.f32.mrf.mxu0
    %3268 = vdwg.mxu0
    %3269 = vmatpush.bf16.msra.mxu0 %v1150
    %3270 = vmatpush.bf16.msra.mxu0 %v1142
    %3271 = vmatpush.bf16.msra.mxu0 %v1134
    %3272 = vmatpush.bf16.msra.mxu0 %v1126
    %3273 = vmatpush.bf16.msra.mxu0 %v1118
    %3274 = vmatpush.bf16.msra.mxu0 %v1110
    %3275 = vmatpush.bf16.msra.mxu0 %v1102
    %3276 = vmatpush.bf16.msra.mxu0 %v1094
    %3277 = vmatmul.bf16.gmra.mxu0 %v3163
    %v3278 = vpop.f32.mrf.mxu0
    %v3279 = vadd.f32 0.0, %v3278
    %v3280 = vpop.f32.mrf.mxu0
    %3281 = vdwg.mxu0
    %3282 = vmatpush.bf16.msra.mxu0 %v1214
    %3283 = vmatpush.bf16.msra.mxu0 %v1206
    %3284 = vmatpush.bf16.msra.mxu0 %v1198
    %3285 = vmatpush.bf16.msra.mxu0 %v1190
    %3286 = vmatpush.bf16.msra.mxu0 %v1182
    %3287 = vmatpush.bf16.msra.mxu0 %v1174
    %3288 = vmatpush.bf16.msra.mxu0 %v1166
    %3289 = vmatpush.bf16.msra.mxu0 %v1158
    %3290 = vmatmul.bf16.gmra.mxu0 %v3164
    %v3291 = vpop.f32.mrf.mxu0
    %v3292 = vadd.f32 %v3279, %v3291
    %v3293 = vpop.f32.mrf.mxu0
    %3294 = vdwg.mxu0
    %3295 = vmatpush.bf16.msra.mxu0 %v1151
    %3296 = vmatpush.bf16.msra.mxu0 %v1143
    %3297 = vmatpush.bf16.msra.mxu0 %v1135
    %3298 = vmatpush.bf16.msra.mxu0 %v1127
    %3299 = vmatpush.bf16.msra.mxu0 %v1119
    %3300 = vmatpush.bf16.msra.mxu0 %v1111
    %3301 = vmatpush.bf16.msra.mxu0 %v1103
    %3302 = vmatpush.bf16.msra.mxu0 %v1095
    %3303 = vmatmul.bf16.gmra.mxu0 %v3163
    %v3304 = vpop.f32.mrf.mxu0
    %v3305 = vadd.f32 0.0, %v3304
    %v3306 = vpop.f32.mrf.mxu0
    %3307 = vdwg.mxu0
    %3308 = vmatpush.bf16.msra.mxu0 %v1215
    %3309 = vmatpush.bf16.msra.mxu0 %v1207
    %3310 = vmatpush.bf16.msra.mxu0 %v1199
    %3311 = vmatpush.bf16.msra.mxu0 %v1191
    %3312 = vmatpush.bf16.msra.mxu0 %v1183
    %3313 = vmatpush.bf16.msra.mxu0 %v1175
    %3314 = vmatpush.bf16.msra.mxu0 %v1167
    %3315 = vmatpush.bf16.msra.mxu0 %v1159
    %3316 = vmatmul.bf16.gmra.mxu0 %v3164
    %v3317 = vpop.f32.mrf.mxu0
    %v3318 = vadd.f32 %v3305, %v3317
    %v3319 = vpop.f32.mrf.mxu0
    %3320 = vdwg.mxu0
    %3321 = vmatpush.bf16.msra.mxu0 %v1152
    %3322 = vmatpush.bf16.msra.mxu0 %v1144
    %3323 = vmatpush.bf16.msra.mxu0 %v1136
    %3324 = vmatpush.bf16.msra.mxu0 %v1128
    %3325 = vmatpush.bf16.msra.mxu0 %v1120
    %3326 = vmatpush.bf16.msra.mxu0 %v1112
    %3327 = vmatpush.bf16.msra.mxu0 %v1104
    %3328 = vmatpush.bf16.msra.mxu0 %v1096
    %3329 = vmatmul.bf16.gmra.mxu0 %v3163
    %v3330 = vpop.f32.mrf.mxu0
    %v3331 = vadd.f32 0.0, %v3330
    %v3332 = vpop.f32.mrf.mxu0
    %3333 = vdwg.mxu0
    %3334 = vmatpush.bf16.msra.mxu0 %v1216
    %3335 = vmatpush.bf16.msra.mxu0 %v1208
    %3336 = vmatpush.bf16.msra.mxu0 %v1200
    %3337 = vmatpush.bf16.msra.mxu0 %v1192
    %3338 = vmatpush.bf16.msra.mxu0 %v1184
    %3339 = vmatpush.bf16.msra.mxu0 %v1176
    %3340 = vmatpush.bf16.msra.mxu0 %v1168
    %3341 = vmatpush.bf16.msra.mxu0 %v1160
    %3342 = vmatmul.bf16.gmra.mxu0 %v3164
    %v3343 = vpop.f32.mrf.mxu0
    %v3344 = vadd.f32 %v3331, %v3343
    %v3345 = vpop.f32.mrf.mxu0
    %3346 = vdwg.mxu0
    %3347 = vmatpush.bf16.msra.mxu0 %v1153
    %3348 = vmatpush.bf16.msra.mxu0 %v1145
    %3349 = vmatpush.bf16.msra.mxu0 %v1137
    %3350 = vmatpush.bf16.msra.mxu0 %v1129
    %3351 = vmatpush.bf16.msra.mxu0 %v1121
    %3352 = vmatpush.bf16.msra.mxu0 %v1113
    %3353 = vmatpush.bf16.msra.mxu0 %v1105
    %3354 = vmatpush.bf16.msra.mxu0 %v1097
    %3355 = vmatmul.bf16.gmra.mxu0 %v3163
    %v3356 = vpop.f32.mrf.mxu0
    %v3357 = vadd.f32 0.0, %v3356
    %v3358 = vpop.f32.mrf.mxu0
    %3359 = vdwg.mxu0
    %3360 = vmatpush.bf16.msra.mxu0 %v1217
    %3361 = vmatpush.bf16.msra.mxu0 %v1209
    %3362 = vmatpush.bf16.msra.mxu0 %v1201
    %3363 = vmatpush.bf16.msra.mxu0 %v1193
    %3364 = vmatpush.bf16.msra.mxu0 %v1185
    %3365 = vmatpush.bf16.msra.mxu0 %v1177
    %3366 = vmatpush.bf16.msra.mxu0 %v1169
    %3367 = vmatpush.bf16.msra.mxu0 %v1161
    %3368 = vmatmul.bf16.gmra.mxu0 %v3164
    %v3369 = vpop.f32.mrf.mxu0
    %v3370 = vadd.f32 %v3357, %v3369
    %v3371 = vpop.f32.mrf.mxu0
    %3372 = vdwg.mxu0
    %v3373 = vadd.f32 %v3153, %v3188
    %v3374 = vadd.f32 %v3154, %v3214
    %v3375 = vadd.f32 %v3155, %v3240
    %v3376 = vadd.f32 %v3156, %v3266
    %v3377 = vadd.f32 %v3157, %v3292
    %v3378 = vadd.f32 %v3158, %v3318
    %v3379 = vadd.f32 %v3159, %v3344
    %v3380 = vadd.f32 %v3160, %v3370
    %v3381 = vxor.u32 %v3373, 2147483648
    %v3382 = vxor.u32 %v3374, 2147483648
    %v3383 = vmul.f32 %v3381, 1.442695
    %v3384 = vpow.pop %v3383
    %v3385 = vmul.f32 %v3382, 1.442695
    %v3386 = vpow.pop %v3385
    %v3387 = vadd.f32 %v3384, 1.0
    %v3388 = vadd.f32 %v3386, 1.0
    %v3389 = vrcp.pop %v3387
    %v3390 = vmul.f32 %v3387, %v3389
    %v3391 = vsub.f32 1.0, %v3390
    %v3392 = vmul.f32 %v3389, %v3391
    %v3393 = vadd.f32 %v3389, %v3392
    %vm3394 = vweird.f32 %v3387
    %vm3395 = vweird.f32 %v3389
    %vm3396 = vmor %vm3394, %vm3395
    %v3397 = vsel %vm3396, %v3389, %v3393
    %v3398 = vand.u32 2147483647, %v3387
    %vm3399 = vcmp.eq.f32.partialorder %v3398, 8.507059e+37
    %v3400 = vand.u32 %v3387, 2147483648
    %v3401 = vor.u32 1.1754944e-38, %v3400
    %v3402 = vsel %vm3399, %v3401, %v3397
    %v3403 = vmul.f32 1.0, %v3402
    %v3404 = vrcp.pop %v3388
    %v3405 = vmul.f32 %v3388, %v3404
    %v3406 = vsub.f32 1.0, %v3405
    %v3407 = vmul.f32 %v3404, %v3406
    %v3408 = vadd.f32 %v3404, %v3407
    %vm3409 = vweird.f32 %v3388
    %vm3410 = vweird.f32 %v3404
    %vm3411 = vmor %vm3409, %vm3410
    %v3412 = vsel %vm3411, %v3404, %v3408
    %v3413 = vand.u32 2147483647, %v3388
    %vm3414 = vcmp.eq.f32.partialorder %v3413, 8.507059e+37
    %v3415 = vand.u32 %v3388, 2147483648
    %v3416 = vor.u32 1.1754944e-38, %v3415
    %v3417 = vsel %vm3414, %v3416, %v3412
    %v3418 = vmul.f32 1.0, %v3417
    %v3419 = vxor.u32 %v3375, 2147483648
    %v3420 = vxor.u32 %v3376, 2147483648
    %v3421 = vmul.f32 %v3419, 1.442695
    %v3422 = vpow.pop %v3421
    %v3423 = vmul.f32 %v3420, 1.442695
    %v3424 = vpow.pop %v3423
    %v3425 = vadd.f32 %v3422, 1.0
    %v3426 = vadd.f32 %v3424, 1.0
    %v3427 = vrcp.pop %v3425
    %v3428 = vmul.f32 %v3425, %v3427
    %v3429 = vsub.f32 1.0, %v3428
    %v3430 = vmul.f32 %v3427, %v3429
    %v3431 = vadd.f32 %v3427, %v3430
    %vm3432 = vweird.f32 %v3425
    %vm3433 = vweird.f32 %v3427
    %vm3434 = vmor %vm3432, %vm3433
    %v3435 = vsel %vm3434, %v3427, %v3431
    %v3436 = vand.u32 2147483647, %v3425
    %vm3437 = vcmp.eq.f32.partialorder %v3436, 8.507059e+37
    %v3438 = vand.u32 %v3425, 2147483648
    %v3439 = vor.u32 1.1754944e-38, %v3438
    %v3440 = vsel %vm3437, %v3439, %v3435
    %v3441 = vmul.f32 1.0, %v3440
    %v3442 = vrcp.pop %v3426
    %v3443 = vmul.f32 %v3426, %v3442
    %v3444 = vsub.f32 1.0, %v3443
    %v3445 = vmul.f32 %v3442, %v3444
    %v3446 = vadd.f32 %v3442, %v3445
    %vm3447 = vweird.f32 %v3426
    %vm3448 = vweird.f32 %v3442
    %vm3449 = vmor %vm3447, %vm3448
    %v3450 = vsel %vm3449, %v3442, %v3446
    %v3451 = vand.u32 2147483647, %v3426
    %vm3452 = vcmp.eq.f32.partialorder %v3451, 8.507059e+37
    %v3453 = vand.u32 %v3426, 2147483648
    %v3454 = vor.u32 1.1754944e-38, %v3453
    %v3455 = vsel %vm3452, %v3454, %v3450
    %v3456 = vmul.f32 1.0, %v3455
    %v3457 = vtanh.pop %v3377
    %v3458 = vtanh.pop %v3378
    %v3459 = vxor.u32 %v3379, 2147483648
    %v3460 = vxor.u32 %v3380, 2147483648
    %v3461 = vmul.f32 %v3459, 1.442695
    %v3462 = vpow.pop %v3461
    %v3463 = vmul.f32 %v3460, 1.442695
    %v3464 = vpow.pop %v3463
    %v3465 = vadd.f32 %v3462, 1.0
    %v3466 = vadd.f32 %v3464, 1.0
    %v3467 = vrcp.pop %v3465
    %v3468 = vmul.f32 %v3465, %v3467
    %v3469 = vsub.f32 1.0, %v3468
    %v3470 = vmul.f32 %v3467, %v3469
    %v3471 = vadd.f32 %v3467, %v3470
    %vm3472 = vweird.f32 %v3465
    %vm3473 = vweird.f32 %v3467
    %vm3474 = vmor %vm3472, %vm3473
    %v3475 = vsel %vm3474, %v3467, %v3471
    %v3476 = vand.u32 2147483647, %v3465
    %vm3477 = vcmp.eq.f32.partialorder %v3476, 8.507059e+37
    %v3478 = vand.u32 %v3465, 2147483648
    %v3479 = vor.u32 1.1754944e-38, %v3478
    %v3480 = vsel %vm3477, %v3479, %v3475
    %v3481 = vmul.f32 1.0, %v3480
    %v3482 = vrcp.pop %v3466
    %v3483 = vmul.f32 %v3466, %v3482
    %v3484 = vsub.f32 1.0, %v3483
    %v3485 = vmul.f32 %v3482, %v3484
    %v3486 = vadd.f32 %v3482, %v3485
    %vm3487 = vweird.f32 %v3466
    %vm3488 = vweird.f32 %v3482
    %vm3489 = vmor %vm3487, %vm3488
    %v3490 = vsel %vm3489, %v3482, %v3486
    %v3491 = vand.u32 2147483647, %v3466
    %vm3492 = vcmp.eq.f32.partialorder %v3491, 8.507059e+37
    %v3493 = vand.u32 %v3466, 2147483648
    %v3494 = vor.u32 1.1754944e-38, %v3493
    %v3495 = vsel %vm3492, %v3494, %v3490
    %v3496 = vmul.f32 1.0, %v3495
    %v3497 = vld [vmem:[#allocation5] sm:$0xff]
    %v3498 = vld [vmem:[#allocation5 + $0x8] sm:$0xff]
    %v3499 = vmul.f32 %v3441, %v3497
    %v3500 = vmul.f32 %v3456, %v3498
    %v3501 = vmul.f32 %v3403, %v3457
    %v3502 = vmul.f32 %v3418, %v3458
    %v3503 = vadd.f32 %v3499, %v3501
    %v3504 = vadd.f32 %v3500, %v3502
    %v3505 = vtanh.pop %v3503
    %v3506 = vtanh.pop %v3504
    %v3507 = vmul.f32 %v3481, %v3505
    %v3508 = vmul.f32 %v3496, %v3506
    %3509 = vst [vmem:[#allocation5] sm:$0xff] %v3503
    %3510 = vst [vmem:[#allocation5 + $0x8] sm:$0xff] %v3504
    %3511 = vst [vmem:[#allocation4] sm:$0xff] %v3507
    %3512 = vst [vmem:[#allocation4 + $0x8] sm:$0xff] %v3508
    %s3513 = scalar_lea.vmem [#allocation3], 80
    %3514 = vst [vmem:[%s3513] sm:$0xff] %v3507
    %3515 = vst [vmem:[%s3513 + $0x8] sm:$0xff] %v3508
    %s3516 = scalar_lea.vmem [#allocation2], 384
    %v3517 = vld [vmem:[%s3516] sm:$0xff]
    %v3518 = vld [vmem:[%s3516 + $0x8] sm:$0xff]
    %v3519 = vld [vmem:[%s3516 + $0x10] sm:$0xff]
    %v3520 = vld [vmem:[%s3516 + $0x18] sm:$0xff]
    %v3521 = vld [vmem:[%s3516 + $0x20] sm:$0xff]
    %v3522 = vld [vmem:[%s3516 + $0x28] sm:$0xff]
    %v3523 = vld [vmem:[%s3516 + $0x30] sm:$0xff]
    %v3524 = vld [vmem:[%s3516 + $0x38] sm:$0xff]
    %v3525 = vld [vmem:[#allocation4] sm:$0xff]
    %v3526 = vld [vmem:[#allocation4 + $0x8] sm:$0xff]
    %v3527 = vpack.c.bf16 %v3525, %v3525
    %v3528 = vpack.c.bf16 %v3526, %v3526
    %3529 = vmatpush.bf16.msra.mxu0 %v1146
    %3530 = vmatpush.bf16.msra.mxu0 %v1138
    %3531 = vmatpush.bf16.msra.mxu0 %v1130
    %3532 = vmatpush.bf16.msra.mxu0 %v1122
    %3533 = vmatpush.bf16.msra.mxu0 %v1114
    %3534 = vmatpush.bf16.msra.mxu0 %v1106
    %3535 = vmatpush.bf16.msra.mxu0 %v1098
    %3536 = vmatpush.bf16.msra.mxu0 %v1090
    %3537 = vmatmul.bf16.gmra.mxu0 %v3527
    %v3538 = vpop.f32.mrf.mxu0
    %v3539 = vadd.f32 0.0, %v3538
    %v3540 = vpop.f32.mrf.mxu0
    %3541 = vdwg.mxu0
    %3542 = vmatpush.bf16.msra.mxu0 %v1210
    %3543 = vmatpush.bf16.msra.mxu0 %v1202
    %3544 = vmatpush.bf16.msra.mxu0 %v1194
    %3545 = vmatpush.bf16.msra.mxu0 %v1186
    %3546 = vmatpush.bf16.msra.mxu0 %v1178
    %3547 = vmatpush.bf16.msra.mxu0 %v1170
    %3548 = vmatpush.bf16.msra.mxu0 %v1162
    %3549 = vmatpush.bf16.msra.mxu0 %v1154
    %3550 = vmatmul.bf16.gmra.mxu0 %v3528
    %v3551 = vpop.f32.mrf.mxu0
    %v3552 = vadd.f32 %v3539, %v3551
    %v3553 = vpop.f32.mrf.mxu0
    %3554 = vdwg.mxu0
    %3555 = vmatpush.bf16.msra.mxu0 %v1147
    %3556 = vmatpush.bf16.msra.mxu0 %v1139
    %3557 = vmatpush.bf16.msra.mxu0 %v1131
    %3558 = vmatpush.bf16.msra.mxu0 %v1123
    %3559 = vmatpush.bf16.msra.mxu0 %v1115
    %3560 = vmatpush.bf16.msra.mxu0 %v1107
    %3561 = vmatpush.bf16.msra.mxu0 %v1099
    %3562 = vmatpush.bf16.msra.mxu0 %v1091
    %3563 = vmatmul.bf16.gmra.mxu0 %v3527
    %v3564 = vpop.f32.mrf.mxu0
    %v3565 = vadd.f32 0.0, %v3564
    %v3566 = vpop.f32.mrf.mxu0
    %3567 = vdwg.mxu0
    %3568 = vmatpush.bf16.msra.mxu0 %v1211
    %3569 = vmatpush.bf16.msra.mxu0 %v1203
    %3570 = vmatpush.bf16.msra.mxu0 %v1195
    %3571 = vmatpush.bf16.msra.mxu0 %v1187
    %3572 = vmatpush.bf16.msra.mxu0 %v1179
    %3573 = vmatpush.bf16.msra.mxu0 %v1171
    %3574 = vmatpush.bf16.msra.mxu0 %v1163
    %3575 = vmatpush.bf16.msra.mxu0 %v1155
    %3576 = vmatmul.bf16.gmra.mxu0 %v3528
    %v3577 = vpop.f32.mrf.mxu0
    %v3578 = vadd.f32 %v3565, %v3577
    %v3579 = vpop.f32.mrf.mxu0
    %3580 = vdwg.mxu0
    %3581 = vmatpush.bf16.msra.mxu0 %v1148
    %3582 = vmatpush.bf16.msra.mxu0 %v1140
    %3583 = vmatpush.bf16.msra.mxu0 %v1132
    %3584 = vmatpush.bf16.msra.mxu0 %v1124
    %3585 = vmatpush.bf16.msra.mxu0 %v1116
    %3586 = vmatpush.bf16.msra.mxu0 %v1108
    %3587 = vmatpush.bf16.msra.mxu0 %v1100
    %3588 = vmatpush.bf16.msra.mxu0 %v1092
    %3589 = vmatmul.bf16.gmra.mxu0 %v3527
    %v3590 = vpop.f32.mrf.mxu0
    %v3591 = vadd.f32 0.0, %v3590
    %v3592 = vpop.f32.mrf.mxu0
    %3593 = vdwg.mxu0
    %3594 = vmatpush.bf16.msra.mxu0 %v1212
    %3595 = vmatpush.bf16.msra.mxu0 %v1204
    %3596 = vmatpush.bf16.msra.mxu0 %v1196
    %3597 = vmatpush.bf16.msra.mxu0 %v1188
    %3598 = vmatpush.bf16.msra.mxu0 %v1180
    %3599 = vmatpush.bf16.msra.mxu0 %v1172
    %3600 = vmatpush.bf16.msra.mxu0 %v1164
    %3601 = vmatpush.bf16.msra.mxu0 %v1156
    %3602 = vmatmul.bf16.gmra.mxu0 %v3528
    %v3603 = vpop.f32.mrf.mxu0
    %v3604 = vadd.f32 %v3591, %v3603
    %v3605 = vpop.f32.mrf.mxu0
    %3606 = vdwg.mxu0
    %3607 = vmatpush.bf16.msra.mxu0 %v1149
    %3608 = vmatpush.bf16.msra.mxu0 %v1141
    %3609 = vmatpush.bf16.msra.mxu0 %v1133
    %3610 = vmatpush.bf16.msra.mxu0 %v1125
    %3611 = vmatpush.bf16.msra.mxu0 %v1117
    %3612 = vmatpush.bf16.msra.mxu0 %v1109
    %3613 = vmatpush.bf16.msra.mxu0 %v1101
    %3614 = vmatpush.bf16.msra.mxu0 %v1093
    %3615 = vmatmul.bf16.gmra.mxu0 %v3527
    %v3616 = vpop.f32.mrf.mxu0
    %v3617 = vadd.f32 0.0, %v3616
    %v3618 = vpop.f32.mrf.mxu0
    %3619 = vdwg.mxu0
    %3620 = vmatpush.bf16.msra.mxu0 %v1213
    %3621 = vmatpush.bf16.msra.mxu0 %v1205
    %3622 = vmatpush.bf16.msra.mxu0 %v1197
    %3623 = vmatpush.bf16.msra.mxu0 %v1189
    %3624 = vmatpush.bf16.msra.mxu0 %v1181
    %3625 = vmatpush.bf16.msra.mxu0 %v1173
    %3626 = vmatpush.bf16.msra.mxu0 %v1165
    %3627 = vmatpush.bf16.msra.mxu0 %v1157
    %3628 = vmatmul.bf16.gmra.mxu0 %v3528
    %v3629 = vpop.f32.mrf.mxu0
    %v3630 = vadd.f32 %v3617, %v3629
    %v3631 = vpop.f32.mrf.mxu0
    %3632 = vdwg.mxu0
    %3633 = vmatpush.bf16.msra.mxu0 %v1150
    %3634 = vmatpush.bf16.msra.mxu0 %v1142
    %3635 = vmatpush.bf16.msra.mxu0 %v1134
    %3636 = vmatpush.bf16.msra.mxu0 %v1126
    %3637 = vmatpush.bf16.msra.mxu0 %v1118
    %3638 = vmatpush.bf16.msra.mxu0 %v1110
    %3639 = vmatpush.bf16.msra.mxu0 %v1102
    %3640 = vmatpush.bf16.msra.mxu0 %v1094
    %3641 = vmatmul.bf16.gmra.mxu0 %v3527
    %v3642 = vpop.f32.mrf.mxu0
    %v3643 = vadd.f32 0.0, %v3642
    %v3644 = vpop.f32.mrf.mxu0
    %3645 = vdwg.mxu0
    %3646 = vmatpush.bf16.msra.mxu0 %v1214
    %3647 = vmatpush.bf16.msra.mxu0 %v1206
    %3648 = vmatpush.bf16.msra.mxu0 %v1198
    %3649 = vmatpush.bf16.msra.mxu0 %v1190
    %3650 = vmatpush.bf16.msra.mxu0 %v1182
    %3651 = vmatpush.bf16.msra.mxu0 %v1174
    %3652 = vmatpush.bf16.msra.mxu0 %v1166
    %3653 = vmatpush.bf16.msra.mxu0 %v1158
    %3654 = vmatmul.bf16.gmra.mxu0 %v3528
    %v3655 = vpop.f32.mrf.mxu0
    %v3656 = vadd.f32 %v3643, %v3655
    %v3657 = vpop.f32.mrf.mxu0
    %3658 = vdwg.mxu0
    %3659 = vmatpush.bf16.msra.mxu0 %v1151
    %3660 = vmatpush.bf16.msra.mxu0 %v1143
    %3661 = vmatpush.bf16.msra.mxu0 %v1135
    %3662 = vmatpush.bf16.msra.mxu0 %v1127
    %3663 = vmatpush.bf16.msra.mxu0 %v1119
    %3664 = vmatpush.bf16.msra.mxu0 %v1111
    %3665 = vmatpush.bf16.msra.mxu0 %v1103
    %3666 = vmatpush.bf16.msra.mxu0 %v1095
    %3667 = vmatmul.bf16.gmra.mxu0 %v3527
    %v3668 = vpop.f32.mrf.mxu0
    %v3669 = vadd.f32 0.0, %v3668
    %v3670 = vpop.f32.mrf.mxu0
    %3671 = vdwg.mxu0
    %3672 = vmatpush.bf16.msra.mxu0 %v1215
    %3673 = vmatpush.bf16.msra.mxu0 %v1207
    %3674 = vmatpush.bf16.msra.mxu0 %v1199
    %3675 = vmatpush.bf16.msra.mxu0 %v1191
    %3676 = vmatpush.bf16.msra.mxu0 %v1183
    %3677 = vmatpush.bf16.msra.mxu0 %v1175
    %3678 = vmatpush.bf16.msra.mxu0 %v1167
    %3679 = vmatpush.bf16.msra.mxu0 %v1159
    %3680 = vmatmul.bf16.gmra.mxu0 %v3528
    %v3681 = vpop.f32.mrf.mxu0
    %v3682 = vadd.f32 %v3669, %v3681
    %v3683 = vpop.f32.mrf.mxu0
    %3684 = vdwg.mxu0
    %3685 = vmatpush.bf16.msra.mxu0 %v1152
    %3686 = vmatpush.bf16.msra.mxu0 %v1144
    %3687 = vmatpush.bf16.msra.mxu0 %v1136
    %3688 = vmatpush.bf16.msra.mxu0 %v1128
    %3689 = vmatpush.bf16.msra.mxu0 %v1120
    %3690 = vmatpush.bf16.msra.mxu0 %v1112
    %3691 = vmatpush.bf16.msra.mxu0 %v1104
    %3692 = vmatpush.bf16.msra.mxu0 %v1096
    %3693 = vmatmul.bf16.gmra.mxu0 %v3527
    %v3694 = vpop.f32.mrf.mxu0
    %v3695 = vadd.f32 0.0, %v3694
    %v3696 = vpop.f32.mrf.mxu0
    %3697 = vdwg.mxu0
    %3698 = vmatpush.bf16.msra.mxu0 %v1216
    %3699 = vmatpush.bf16.msra.mxu0 %v1208
    %3700 = vmatpush.bf16.msra.mxu0 %v1200
    %3701 = vmatpush.bf16.msra.mxu0 %v1192
    %3702 = vmatpush.bf16.msra.mxu0 %v1184
    %3703 = vmatpush.bf16.msra.mxu0 %v1176
    %3704 = vmatpush.bf16.msra.mxu0 %v1168
    %3705 = vmatpush.bf16.msra.mxu0 %v1160
    %3706 = vmatmul.bf16.gmra.mxu0 %v3528
    %v3707 = vpop.f32.mrf.mxu0
    %v3708 = vadd.f32 %v3695, %v3707
    %v3709 = vpop.f32.mrf.mxu0
    %3710 = vdwg.mxu0
    %3711 = vmatpush.bf16.msra.mxu0 %v1153
    %3712 = vmatpush.bf16.msra.mxu0 %v1145
    %3713 = vmatpush.bf16.msra.mxu0 %v1137
    %3714 = vmatpush.bf16.msra.mxu0 %v1129
    %3715 = vmatpush.bf16.msra.mxu0 %v1121
    %3716 = vmatpush.bf16.msra.mxu0 %v1113
    %3717 = vmatpush.bf16.msra.mxu0 %v1105
    %3718 = vmatpush.bf16.msra.mxu0 %v1097
    %3719 = vmatmul.bf16.gmra.mxu0 %v3527
    %v3720 = vpop.f32.mrf.mxu0
    %v3721 = vadd.f32 0.0, %v3720
    %v3722 = vpop.f32.mrf.mxu0
    %3723 = vdwg.mxu0
    %3724 = vmatpush.bf16.msra.mxu0 %v1217
    %3725 = vmatpush.bf16.msra.mxu0 %v1209
    %3726 = vmatpush.bf16.msra.mxu0 %v1201
    %3727 = vmatpush.bf16.msra.mxu0 %v1193
    %3728 = vmatpush.bf16.msra.mxu0 %v1185
    %3729 = vmatpush.bf16.msra.mxu0 %v1177
    %3730 = vmatpush.bf16.msra.mxu0 %v1169
    %3731 = vmatpush.bf16.msra.mxu0 %v1161
    %3732 = vmatmul.bf16.gmra.mxu0 %v3528
    %v3733 = vpop.f32.mrf.mxu0
    %v3734 = vadd.f32 %v3721, %v3733
    %v3735 = vpop.f32.mrf.mxu0
    %3736 = vdwg.mxu0
    %v3737 = vadd.f32 %v3517, %v3552
    %v3738 = vadd.f32 %v3518, %v3578
    %v3739 = vadd.f32 %v3519, %v3604
    %v3740 = vadd.f32 %v3520, %v3630
    %v3741 = vadd.f32 %v3521, %v3656
    %v3742 = vadd.f32 %v3522, %v3682
    %v3743 = vadd.f32 %v3523, %v3708
    %v3744 = vadd.f32 %v3524, %v3734
    %v3745 = vxor.u32 %v3737, 2147483648
    %v3746 = vxor.u32 %v3738, 2147483648
    %v3747 = vmul.f32 %v3745, 1.442695
    %v3748 = vpow.pop %v3747
    %v3749 = vmul.f32 %v3746, 1.442695
    %v3750 = vpow.pop %v3749
    %v3751 = vadd.f32 %v3748, 1.0
    %v3752 = vadd.f32 %v3750, 1.0
    %v3753 = vrcp.pop %v3751
    %v3754 = vmul.f32 %v3751, %v3753
    %v3755 = vsub.f32 1.0, %v3754
    %v3756 = vmul.f32 %v3753, %v3755
    %v3757 = vadd.f32 %v3753, %v3756
    %vm3758 = vweird.f32 %v3751
    %vm3759 = vweird.f32 %v3753
    %vm3760 = vmor %vm3758, %vm3759
    %v3761 = vsel %vm3760, %v3753, %v3757
    %v3762 = vand.u32 2147483647, %v3751
    %vm3763 = vcmp.eq.f32.partialorder %v3762, 8.507059e+37
    %v3764 = vand.u32 %v3751, 2147483648
    %v3765 = vor.u32 1.1754944e-38, %v3764
    %v3766 = vsel %vm3763, %v3765, %v3761
    %v3767 = vmul.f32 1.0, %v3766
    %v3768 = vrcp.pop %v3752
    %v3769 = vmul.f32 %v3752, %v3768
    %v3770 = vsub.f32 1.0, %v3769
    %v3771 = vmul.f32 %v3768, %v3770
    %v3772 = vadd.f32 %v3768, %v3771
    %vm3773 = vweird.f32 %v3752
    %vm3774 = vweird.f32 %v3768
    %vm3775 = vmor %vm3773, %vm3774
    %v3776 = vsel %vm3775, %v3768, %v3772
    %v3777 = vand.u32 2147483647, %v3752
    %vm3778 = vcmp.eq.f32.partialorder %v3777, 8.507059e+37
    %v3779 = vand.u32 %v3752, 2147483648
    %v3780 = vor.u32 1.1754944e-38, %v3779
    %v3781 = vsel %vm3778, %v3780, %v3776
    %v3782 = vmul.f32 1.0, %v3781
    %v3783 = vxor.u32 %v3739, 2147483648
    %v3784 = vxor.u32 %v3740, 2147483648
    %v3785 = vmul.f32 %v3783, 1.442695
    %v3786 = vpow.pop %v3785
    %v3787 = vmul.f32 %v3784, 1.442695
    %v3788 = vpow.pop %v3787
    %v3789 = vadd.f32 %v3786, 1.0
    %v3790 = vadd.f32 %v3788, 1.0
    %v3791 = vrcp.pop %v3789
    %v3792 = vmul.f32 %v3789, %v3791
    %v3793 = vsub.f32 1.0, %v3792
    %v3794 = vmul.f32 %v3791, %v3793
    %v3795 = vadd.f32 %v3791, %v3794
    %vm3796 = vweird.f32 %v3789
    %vm3797 = vweird.f32 %v3791
    %vm3798 = vmor %vm3796, %vm3797
    %v3799 = vsel %vm3798, %v3791, %v3795
    %v3800 = vand.u32 2147483647, %v3789
    %vm3801 = vcmp.eq.f32.partialorder %v3800, 8.507059e+37
    %v3802 = vand.u32 %v3789, 2147483648
    %v3803 = vor.u32 1.1754944e-38, %v3802
    %v3804 = vsel %vm3801, %v3803, %v3799
    %v3805 = vmul.f32 1.0, %v3804
    %v3806 = vrcp.pop %v3790
    %v3807 = vmul.f32 %v3790, %v3806
    %v3808 = vsub.f32 1.0, %v3807
    %v3809 = vmul.f32 %v3806, %v3808
    %v3810 = vadd.f32 %v3806, %v3809
    %vm3811 = vweird.f32 %v3790
    %vm3812 = vweird.f32 %v3806
    %vm3813 = vmor %vm3811, %vm3812
    %v3814 = vsel %vm3813, %v3806, %v3810
    %v3815 = vand.u32 2147483647, %v3790
    %vm3816 = vcmp.eq.f32.partialorder %v3815, 8.507059e+37
    %v3817 = vand.u32 %v3790, 2147483648
    %v3818 = vor.u32 1.1754944e-38, %v3817
    %v3819 = vsel %vm3816, %v3818, %v3814
    %v3820 = vmul.f32 1.0, %v3819
    %v3821 = vtanh.pop %v3741
    %v3822 = vtanh.pop %v3742
    %v3823 = vxor.u32 %v3743, 2147483648
    %v3824 = vxor.u32 %v3744, 2147483648
    %v3825 = vmul.f32 %v3823, 1.442695
    %v3826 = vpow.pop %v3825
    %v3827 = vmul.f32 %v3824, 1.442695
    %v3828 = vpow.pop %v3827
    %v3829 = vadd.f32 %v3826, 1.0
    %v3830 = vadd.f32 %v3828, 1.0
    %v3831 = vrcp.pop %v3829
    %v3832 = vmul.f32 %v3829, %v3831
    %v3833 = vsub.f32 1.0, %v3832
    %v3834 = vmul.f32 %v3831, %v3833
    %v3835 = vadd.f32 %v3831, %v3834
    %vm3836 = vweird.f32 %v3829
    %vm3837 = vweird.f32 %v3831
    %vm3838 = vmor %vm3836, %vm3837
    %v3839 = vsel %vm3838, %v3831, %v3835
    %v3840 = vand.u32 2147483647, %v3829
    %vm3841 = vcmp.eq.f32.partialorder %v3840, 8.507059e+37
    %v3842 = vand.u32 %v3829, 2147483648
    %v3843 = vor.u32 1.1754944e-38, %v3842
    %v3844 = vsel %vm3841, %v3843, %v3839
    %v3845 = vmul.f32 1.0, %v3844
    %v3846 = vrcp.pop %v3830
    %v3847 = vmul.f32 %v3830, %v3846
    %v3848 = vsub.f32 1.0, %v3847
    %v3849 = vmul.f32 %v3846, %v3848
    %v3850 = vadd.f32 %v3846, %v3849
    %vm3851 = vweird.f32 %v3830
    %vm3852 = vweird.f32 %v3846
    %vm3853 = vmor %vm3851, %vm3852
    %v3854 = vsel %vm3853, %v3846, %v3850
    %v3855 = vand.u32 2147483647, %v3830
    %vm3856 = vcmp.eq.f32.partialorder %v3855, 8.507059e+37
    %v3857 = vand.u32 %v3830, 2147483648
    %v3858 = vor.u32 1.1754944e-38, %v3857
    %v3859 = vsel %vm3856, %v3858, %v3854
    %v3860 = vmul.f32 1.0, %v3859
    %v3861 = vld [vmem:[#allocation5] sm:$0xff]
    %v3862 = vld [vmem:[#allocation5 + $0x8] sm:$0xff]
    %v3863 = vmul.f32 %v3805, %v3861
    %v3864 = vmul.f32 %v3820, %v3862
    %v3865 = vmul.f32 %v3767, %v3821
    %v3866 = vmul.f32 %v3782, %v3822
    %v3867 = vadd.f32 %v3863, %v3865
    %v3868 = vadd.f32 %v3864, %v3866
    %v3869 = vtanh.pop %v3867
    %v3870 = vtanh.pop %v3868
    %v3871 = vmul.f32 %v3845, %v3869
    %v3872 = vmul.f32 %v3860, %v3870
    %3873 = vst [vmem:[#allocation5] sm:$0xff] %v3867
    %3874 = vst [vmem:[#allocation5 + $0x8] sm:$0xff] %v3868
    %3875 = vst [vmem:[#allocation4] sm:$0xff] %v3871
    %3876 = vst [vmem:[#allocation4 + $0x8] sm:$0xff] %v3872
    %s3877 = scalar_lea.vmem [#allocation3], 96
    %3878 = vst [vmem:[%s3877] sm:$0xff] %v3871
    %3879 = vst [vmem:[%s3877 + $0x8] sm:$0xff] %v3872
    %s3880 = scalar_lea.vmem [#allocation2], 448
    %v3881 = vld [vmem:[%s3880] sm:$0xff]
    %v3882 = vld [vmem:[%s3880 + $0x8] sm:$0xff]
    %v3883 = vld [vmem:[%s3880 + $0x10] sm:$0xff]
    %v3884 = vld [vmem:[%s3880 + $0x18] sm:$0xff]
    %v3885 = vld [vmem:[%s3880 + $0x20] sm:$0xff]
    %v3886 = vld [vmem:[%s3880 + $0x28] sm:$0xff]
    %v3887 = vld [vmem:[%s3880 + $0x30] sm:$0xff]
    %v3888 = vld [vmem:[%s3880 + $0x38] sm:$0xff]
    %v3889 = vld [vmem:[#allocation4] sm:$0xff]
    %v3890 = vld [vmem:[#allocation4 + $0x8] sm:$0xff]
    %v3891 = vpack.c.bf16 %v3889, %v3889
    %v3892 = vpack.c.bf16 %v3890, %v3890
    %3893 = vmatpush.bf16.msra.mxu0 %v1146
    %3894 = vmatpush.bf16.msra.mxu0 %v1138
    %3895 = vmatpush.bf16.msra.mxu0 %v1130
    %3896 = vmatpush.bf16.msra.mxu0 %v1122
    %3897 = vmatpush.bf16.msra.mxu0 %v1114
    %3898 = vmatpush.bf16.msra.mxu0 %v1106
    %3899 = vmatpush.bf16.msra.mxu0 %v1098
    %3900 = vmatpush.bf16.msra.mxu0 %v1090
    %3901 = vmatmul.bf16.gmra.mxu0 %v3891
    %v3902 = vpop.f32.mrf.mxu0
    %v3903 = vadd.f32 0.0, %v3902
    %v3904 = vpop.f32.mrf.mxu0
    %3905 = vdwg.mxu0
    %3906 = vmatpush.bf16.msra.mxu0 %v1210
    %3907 = vmatpush.bf16.msra.mxu0 %v1202
    %3908 = vmatpush.bf16.msra.mxu0 %v1194
    %3909 = vmatpush.bf16.msra.mxu0 %v1186
    %3910 = vmatpush.bf16.msra.mxu0 %v1178
    %3911 = vmatpush.bf16.msra.mxu0 %v1170
    %3912 = vmatpush.bf16.msra.mxu0 %v1162
    %3913 = vmatpush.bf16.msra.mxu0 %v1154
    %3914 = vmatmul.bf16.gmra.mxu0 %v3892
    %v3915 = vpop.f32.mrf.mxu0
    %v3916 = vadd.f32 %v3903, %v3915
    %v3917 = vpop.f32.mrf.mxu0
    %3918 = vdwg.mxu0
    %3919 = vmatpush.bf16.msra.mxu0 %v1147
    %3920 = vmatpush.bf16.msra.mxu0 %v1139
    %3921 = vmatpush.bf16.msra.mxu0 %v1131
    %3922 = vmatpush.bf16.msra.mxu0 %v1123
    %3923 = vmatpush.bf16.msra.mxu0 %v1115
    %3924 = vmatpush.bf16.msra.mxu0 %v1107
    %3925 = vmatpush.bf16.msra.mxu0 %v1099
    %3926 = vmatpush.bf16.msra.mxu0 %v1091
    %3927 = vmatmul.bf16.gmra.mxu0 %v3891
    %v3928 = vpop.f32.mrf.mxu0
    %v3929 = vadd.f32 0.0, %v3928
    %v3930 = vpop.f32.mrf.mxu0
    %3931 = vdwg.mxu0
    %3932 = vmatpush.bf16.msra.mxu0 %v1211
    %3933 = vmatpush.bf16.msra.mxu0 %v1203
    %3934 = vmatpush.bf16.msra.mxu0 %v1195
    %3935 = vmatpush.bf16.msra.mxu0 %v1187
    %3936 = vmatpush.bf16.msra.mxu0 %v1179
    %3937 = vmatpush.bf16.msra.mxu0 %v1171
    %3938 = vmatpush.bf16.msra.mxu0 %v1163
    %3939 = vmatpush.bf16.msra.mxu0 %v1155
    %3940 = vmatmul.bf16.gmra.mxu0 %v3892
    %v3941 = vpop.f32.mrf.mxu0
    %v3942 = vadd.f32 %v3929, %v3941
    %v3943 = vpop.f32.mrf.mxu0
    %3944 = vdwg.mxu0
    %3945 = vmatpush.bf16.msra.mxu0 %v1148
    %3946 = vmatpush.bf16.msra.mxu0 %v1140
    %3947 = vmatpush.bf16.msra.mxu0 %v1132
    %3948 = vmatpush.bf16.msra.mxu0 %v1124
    %3949 = vmatpush.bf16.msra.mxu0 %v1116
    %3950 = vmatpush.bf16.msra.mxu0 %v1108
    %3951 = vmatpush.bf16.msra.mxu0 %v1100
    %3952 = vmatpush.bf16.msra.mxu0 %v1092
    %3953 = vmatmul.bf16.gmra.mxu0 %v3891
    %v3954 = vpop.f32.mrf.mxu0
    %v3955 = vadd.f32 0.0, %v3954
    %v3956 = vpop.f32.mrf.mxu0
    %3957 = vdwg.mxu0
    %3958 = vmatpush.bf16.msra.mxu0 %v1212
    %3959 = vmatpush.bf16.msra.mxu0 %v1204
    %3960 = vmatpush.bf16.msra.mxu0 %v1196
    %3961 = vmatpush.bf16.msra.mxu0 %v1188
    %3962 = vmatpush.bf16.msra.mxu0 %v1180
    %3963 = vmatpush.bf16.msra.mxu0 %v1172
    %3964 = vmatpush.bf16.msra.mxu0 %v1164
    %3965 = vmatpush.bf16.msra.mxu0 %v1156
    %3966 = vmatmul.bf16.gmra.mxu0 %v3892
    %v3967 = vpop.f32.mrf.mxu0
    %v3968 = vadd.f32 %v3955, %v3967
    %v3969 = vpop.f32.mrf.mxu0
    %3970 = vdwg.mxu0
    %3971 = vmatpush.bf16.msra.mxu0 %v1149
    %3972 = vmatpush.bf16.msra.mxu0 %v1141
    %3973 = vmatpush.bf16.msra.mxu0 %v1133
    %3974 = vmatpush.bf16.msra.mxu0 %v1125
    %3975 = vmatpush.bf16.msra.mxu0 %v1117
    %3976 = vmatpush.bf16.msra.mxu0 %v1109
    %3977 = vmatpush.bf16.msra.mxu0 %v1101
    %3978 = vmatpush.bf16.msra.mxu0 %v1093
    %3979 = vmatmul.bf16.gmra.mxu0 %v3891
    %v3980 = vpop.f32.mrf.mxu0
    %v3981 = vadd.f32 0.0, %v3980
    %v3982 = vpop.f32.mrf.mxu0
    %3983 = vdwg.mxu0
    %3984 = vmatpush.bf16.msra.mxu0 %v1213
    %3985 = vmatpush.bf16.msra.mxu0 %v1205
    %3986 = vmatpush.bf16.msra.mxu0 %v1197
    %3987 = vmatpush.bf16.msra.mxu0 %v1189
    %3988 = vmatpush.bf16.msra.mxu0 %v1181
    %3989 = vmatpush.bf16.msra.mxu0 %v1173
    %3990 = vmatpush.bf16.msra.mxu0 %v1165
    %3991 = vmatpush.bf16.msra.mxu0 %v1157
    %3992 = vmatmul.bf16.gmra.mxu0 %v3892
    %v3993 = vpop.f32.mrf.mxu0
    %v3994 = vadd.f32 %v3981, %v3993
    %v3995 = vpop.f32.mrf.mxu0
    %3996 = vdwg.mxu0
    %3997 = vmatpush.bf16.msra.mxu0 %v1150
    %3998 = vmatpush.bf16.msra.mxu0 %v1142
    %3999 = vmatpush.bf16.msra.mxu0 %v1134
    %4000 = vmatpush.bf16.msra.mxu0 %v1126
    %4001 = vmatpush.bf16.msra.mxu0 %v1118
    %4002 = vmatpush.bf16.msra.mxu0 %v1110
    %4003 = vmatpush.bf16.msra.mxu0 %v1102
    %4004 = vmatpush.bf16.msra.mxu0 %v1094
    %4005 = vmatmul.bf16.gmra.mxu0 %v3891
    %v4006 = vpop.f32.mrf.mxu0
    %v4007 = vadd.f32 0.0, %v4006
    %v4008 = vpop.f32.mrf.mxu0
    %4009 = vdwg.mxu0
    %4010 = vmatpush.bf16.msra.mxu0 %v1214
    %4011 = vmatpush.bf16.msra.mxu0 %v1206
    %4012 = vmatpush.bf16.msra.mxu0 %v1198
    %4013 = vmatpush.bf16.msra.mxu0 %v1190
    %4014 = vmatpush.bf16.msra.mxu0 %v1182
    %4015 = vmatpush.bf16.msra.mxu0 %v1174
    %4016 = vmatpush.bf16.msra.mxu0 %v1166
    %4017 = vmatpush.bf16.msra.mxu0 %v1158
    %4018 = vmatmul.bf16.gmra.mxu0 %v3892
    %v4019 = vpop.f32.mrf.mxu0
    %v4020 = vadd.f32 %v4007, %v4019
    %v4021 = vpop.f32.mrf.mxu0
    %4022 = vdwg.mxu0
    %4023 = vmatpush.bf16.msra.mxu0 %v1151
    %4024 = vmatpush.bf16.msra.mxu0 %v1143
    %4025 = vmatpush.bf16.msra.mxu0 %v1135
    %4026 = vmatpush.bf16.msra.mxu0 %v1127
    %4027 = vmatpush.bf16.msra.mxu0 %v1119
    %4028 = vmatpush.bf16.msra.mxu0 %v1111
    %4029 = vmatpush.bf16.msra.mxu0 %v1103
    %4030 = vmatpush.bf16.msra.mxu0 %v1095
    %4031 = vmatmul.bf16.gmra.mxu0 %v3891
    %v4032 = vpop.f32.mrf.mxu0
    %v4033 = vadd.f32 0.0, %v4032
    %v4034 = vpop.f32.mrf.mxu0
    %4035 = vdwg.mxu0
    %4036 = vmatpush.bf16.msra.mxu0 %v1215
    %4037 = vmatpush.bf16.msra.mxu0 %v1207
    %4038 = vmatpush.bf16.msra.mxu0 %v1199
    %4039 = vmatpush.bf16.msra.mxu0 %v1191
    %4040 = vmatpush.bf16.msra.mxu0 %v1183
    %4041 = vmatpush.bf16.msra.mxu0 %v1175
    %4042 = vmatpush.bf16.msra.mxu0 %v1167
    %4043 = vmatpush.bf16.msra.mxu0 %v1159
    %4044 = vmatmul.bf16.gmra.mxu0 %v3892
    %v4045 = vpop.f32.mrf.mxu0
    %v4046 = vadd.f32 %v4033, %v4045
    %v4047 = vpop.f32.mrf.mxu0
    %4048 = vdwg.mxu0
    %4049 = vmatpush.bf16.msra.mxu0 %v1152
    %4050 = vmatpush.bf16.msra.mxu0 %v1144
    %4051 = vmatpush.bf16.msra.mxu0 %v1136
    %4052 = vmatpush.bf16.msra.mxu0 %v1128
    %4053 = vmatpush.bf16.msra.mxu0 %v1120
    %4054 = vmatpush.bf16.msra.mxu0 %v1112
    %4055 = vmatpush.bf16.msra.mxu0 %v1104
    %4056 = vmatpush.bf16.msra.mxu0 %v1096
    %4057 = vmatmul.bf16.gmra.mxu0 %v3891
    %v4058 = vpop.f32.mrf.mxu0
    %v4059 = vadd.f32 0.0, %v4058
    %v4060 = vpop.f32.mrf.mxu0
    %4061 = vdwg.mxu0
    %4062 = vmatpush.bf16.msra.mxu0 %v1216
    %4063 = vmatpush.bf16.msra.mxu0 %v1208
    %4064 = vmatpush.bf16.msra.mxu0 %v1200
    %4065 = vmatpush.bf16.msra.mxu0 %v1192
    %4066 = vmatpush.bf16.msra.mxu0 %v1184
    %4067 = vmatpush.bf16.msra.mxu0 %v1176
    %4068 = vmatpush.bf16.msra.mxu0 %v1168
    %4069 = vmatpush.bf16.msra.mxu0 %v1160
    %4070 = vmatmul.bf16.gmra.mxu0 %v3892
    %v4071 = vpop.f32.mrf.mxu0
    %v4072 = vadd.f32 %v4059, %v4071
    %v4073 = vpop.f32.mrf.mxu0
    %4074 = vdwg.mxu0
    %4075 = vmatpush.bf16.msra.mxu0 %v1153
    %4076 = vmatpush.bf16.msra.mxu0 %v1145
    %4077 = vmatpush.bf16.msra.mxu0 %v1137
    %4078 = vmatpush.bf16.msra.mxu0 %v1129
    %4079 = vmatpush.bf16.msra.mxu0 %v1121
    %4080 = vmatpush.bf16.msra.mxu0 %v1113
    %4081 = vmatpush.bf16.msra.mxu0 %v1105
    %4082 = vmatpush.bf16.msra.mxu0 %v1097
    %4083 = vmatmul.bf16.gmra.mxu0 %v3891
    %v4084 = vpop.f32.mrf.mxu0
    %v4085 = vadd.f32 0.0, %v4084
    %v4086 = vpop.f32.mrf.mxu0
    %4087 = vdwg.mxu0
    %4088 = vmatpush.bf16.msra.mxu0 %v1217
    %4089 = vmatpush.bf16.msra.mxu0 %v1209
    %4090 = vmatpush.bf16.msra.mxu0 %v1201
    %4091 = vmatpush.bf16.msra.mxu0 %v1193
    %4092 = vmatpush.bf16.msra.mxu0 %v1185
    %4093 = vmatpush.bf16.msra.mxu0 %v1177
    %4094 = vmatpush.bf16.msra.mxu0 %v1169
    %4095 = vmatpush.bf16.msra.mxu0 %v1161
    %4096 = vmatmul.bf16.gmra.mxu0 %v3892
    %v4097 = vpop.f32.mrf.mxu0
    %v4098 = vadd.f32 %v4085, %v4097
    %v4099 = vpop.f32.mrf.mxu0
    %4100 = vdwg.mxu0
    %v4101 = vadd.f32 %v3881, %v3916
    %v4102 = vadd.f32 %v3882, %v3942
    %v4103 = vadd.f32 %v3883, %v3968
    %v4104 = vadd.f32 %v3884, %v3994
    %v4105 = vadd.f32 %v3885, %v4020
    %v4106 = vadd.f32 %v3886, %v4046
    %v4107 = vadd.f32 %v3887, %v4072
    %v4108 = vadd.f32 %v3888, %v4098
    %v4109 = vxor.u32 %v4101, 2147483648
    %v4110 = vxor.u32 %v4102, 2147483648
    %v4111 = vmul.f32 %v4109, 1.442695
    %v4112 = vpow.pop %v4111
    %v4113 = vmul.f32 %v4110, 1.442695
    %v4114 = vpow.pop %v4113
    %v4115 = vadd.f32 %v4112, 1.0
    %v4116 = vadd.f32 %v4114, 1.0
    %v4117 = vrcp.pop %v4115
    %v4118 = vmul.f32 %v4115, %v4117
    %v4119 = vsub.f32 1.0, %v4118
    %v4120 = vmul.f32 %v4117, %v4119
    %v4121 = vadd.f32 %v4117, %v4120
    %vm4122 = vweird.f32 %v4115
    %vm4123 = vweird.f32 %v4117
    %vm4124 = vmor %vm4122, %vm4123
    %v4125 = vsel %vm4124, %v4117, %v4121
    %v4126 = vand.u32 2147483647, %v4115
    %vm4127 = vcmp.eq.f32.partialorder %v4126, 8.507059e+37
    %v4128 = vand.u32 %v4115, 2147483648
    %v4129 = vor.u32 1.1754944e-38, %v4128
    %v4130 = vsel %vm4127, %v4129, %v4125
    %v4131 = vmul.f32 1.0, %v4130
    %v4132 = vrcp.pop %v4116
    %v4133 = vmul.f32 %v4116, %v4132
    %v4134 = vsub.f32 1.0, %v4133
    %v4135 = vmul.f32 %v4132, %v4134
    %v4136 = vadd.f32 %v4132, %v4135
    %vm4137 = vweird.f32 %v4116
    %vm4138 = vweird.f32 %v4132
    %vm4139 = vmor %vm4137, %vm4138
    %v4140 = vsel %vm4139, %v4132, %v4136
    %v4141 = vand.u32 2147483647, %v4116
    %vm4142 = vcmp.eq.f32.partialorder %v4141, 8.507059e+37
    %v4143 = vand.u32 %v4116, 2147483648
    %v4144 = vor.u32 1.1754944e-38, %v4143
    %v4145 = vsel %vm4142, %v4144, %v4140
    %v4146 = vmul.f32 1.0, %v4145
    %v4147 = vxor.u32 %v4103, 2147483648
    %v4148 = vxor.u32 %v4104, 2147483648
    %v4149 = vmul.f32 %v4147, 1.442695
    %v4150 = vpow.pop %v4149
    %v4151 = vmul.f32 %v4148, 1.442695
    %v4152 = vpow.pop %v4151
    %v4153 = vadd.f32 %v4150, 1.0
    %v4154 = vadd.f32 %v4152, 1.0
    %v4155 = vrcp.pop %v4153
    %v4156 = vmul.f32 %v4153, %v4155
    %v4157 = vsub.f32 1.0, %v4156
    %v4158 = vmul.f32 %v4155, %v4157
    %v4159 = vadd.f32 %v4155, %v4158
    %vm4160 = vweird.f32 %v4153
    %vm4161 = vweird.f32 %v4155
    %vm4162 = vmor %vm4160, %vm4161
    %v4163 = vsel %vm4162, %v4155, %v4159
    %v4164 = vand.u32 2147483647, %v4153
    %vm4165 = vcmp.eq.f32.partialorder %v4164, 8.507059e+37
    %v4166 = vand.u32 %v4153, 2147483648
    %v4167 = vor.u32 1.1754944e-38, %v4166
    %v4168 = vsel %vm4165, %v4167, %v4163
    %v4169 = vmul.f32 1.0, %v4168
    %v4170 = vrcp.pop %v4154
    %v4171 = vmul.f32 %v4154, %v4170
    %v4172 = vsub.f32 1.0, %v4171
    %v4173 = vmul.f32 %v4170, %v4172
    %v4174 = vadd.f32 %v4170, %v4173
    %vm4175 = vweird.f32 %v4154
    %vm4176 = vweird.f32 %v4170
    %vm4177 = vmor %vm4175, %vm4176
    %v4178 = vsel %vm4177, %v4170, %v4174
    %v4179 = vand.u32 2147483647, %v4154
    %vm4180 = vcmp.eq.f32.partialorder %v4179, 8.507059e+37
    %v4181 = vand.u32 %v4154, 2147483648
    %v4182 = vor.u32 1.1754944e-38, %v4181
    %v4183 = vsel %vm4180, %v4182, %v4178
    %v4184 = vmul.f32 1.0, %v4183
    %v4185 = vtanh.pop %v4105
    %v4186 = vtanh.pop %v4106
    %v4187 = vxor.u32 %v4107, 2147483648
    %v4188 = vxor.u32 %v4108, 2147483648
    %v4189 = vmul.f32 %v4187, 1.442695
    %v4190 = vpow.pop %v4189
    %v4191 = vmul.f32 %v4188, 1.442695
    %v4192 = vpow.pop %v4191
    %v4193 = vadd.f32 %v4190, 1.0
    %v4194 = vadd.f32 %v4192, 1.0
    %v4195 = vrcp.pop %v4193
    %v4196 = vmul.f32 %v4193, %v4195
    %v4197 = vsub.f32 1.0, %v4196
    %v4198 = vmul.f32 %v4195, %v4197
    %v4199 = vadd.f32 %v4195, %v4198
    %vm4200 = vweird.f32 %v4193
    %vm4201 = vweird.f32 %v4195
    %vm4202 = vmor %vm4200, %vm4201
    %v4203 = vsel %vm4202, %v4195, %v4199
    %v4204 = vand.u32 2147483647, %v4193
    %vm4205 = vcmp.eq.f32.partialorder %v4204, 8.507059e+37
    %v4206 = vand.u32 %v4193, 2147483648
    %v4207 = vor.u32 1.1754944e-38, %v4206
    %v4208 = vsel %vm4205, %v4207, %v4203
    %v4209 = vmul.f32 1.0, %v4208
    %v4210 = vrcp.pop %v4194
    %v4211 = vmul.f32 %v4194, %v4210
    %v4212 = vsub.f32 1.0, %v4211
    %v4213 = vmul.f32 %v4210, %v4212
    %v4214 = vadd.f32 %v4210, %v4213
    %vm4215 = vweird.f32 %v4194
    %vm4216 = vweird.f32 %v4210
    %vm4217 = vmor %vm4215, %vm4216
    %v4218 = vsel %vm4217, %v4210, %v4214
    %v4219 = vand.u32 2147483647, %v4194
    %vm4220 = vcmp.eq.f32.partialorder %v4219, 8.507059e+37
    %v4221 = vand.u32 %v4194, 2147483648
    %v4222 = vor.u32 1.1754944e-38, %v4221
    %v4223 = vsel %vm4220, %v4222, %v4218
    %v4224 = vmul.f32 1.0, %v4223
    %v4225 = vld [vmem:[#allocation5] sm:$0xff]
    %v4226 = vld [vmem:[#allocation5 + $0x8] sm:$0xff]
    %v4227 = vmul.f32 %v4169, %v4225
    %v4228 = vmul.f32 %v4184, %v4226
    %v4229 = vmul.f32 %v4131, %v4185
    %v4230 = vmul.f32 %v4146, %v4186
    %v4231 = vadd.f32 %v4227, %v4229
    %v4232 = vadd.f32 %v4228, %v4230
    %v4233 = vtanh.pop %v4231
    %v4234 = vtanh.pop %v4232
    %v4235 = vmul.f32 %v4209, %v4233
    %v4236 = vmul.f32 %v4224, %v4234
    %4237 = vst [vmem:[#allocation5] sm:$0xff] %v4231
    %4238 = vst [vmem:[#allocation5 + $0x8] sm:$0xff] %v4232
    %4239 = vst [vmem:[#allocation4] sm:$0xff] %v4235
    %4240 = vst [vmem:[#allocation4 + $0x8] sm:$0xff] %v4236
    %s4241 = scalar_lea.vmem [#allocation3], 112
    %4242 = vst [vmem:[%s4241] sm:$0xff] %v4235
    %4243 = vst [vmem:[%s4241 + $0x8] sm:$0xff] %v4236
    %v4244 = vld [vmem:[#allocation3] sm:$0xff]
    %v4245 = vld [vmem:[#allocation3 + $0x8] sm:$0xff]
    %v4246 = vld [vmem:[#allocation3 + $0x10] sm:$0xff]
    %v4247 = vld [vmem:[#allocation3 + $0x18] sm:$0xff]
    %v4248 = vld [vmem:[#allocation3 + $0x20] sm:$0xff]
    %v4249 = vld [vmem:[#allocation3 + $0x28] sm:$0xff]
    %v4250 = vld [vmem:[#allocation3 + $0x30] sm:$0xff]
    %v4251 = vld [vmem:[#allocation3 + $0x38] sm:$0xff]
    %v4252 = vld [vmem:[#allocation3 + $0x40] sm:$0xff]
    %v4253 = vld [vmem:[#allocation3 + $0x48] sm:$0xff]
    %v4254 = vld [vmem:[#allocation3 + $0x50] sm:$0xff]
    %v4255 = vld [vmem:[#allocation3 + $0x58] sm:$0xff]
    %v4256 = vld [vmem:[#allocation3 + $0x60] sm:$0xff]
    %v4257 = vld [vmem:[#allocation3 + $0x68] sm:$0xff]
    %v4258 = vld [vmem:[#allocation3 + $0x70] sm:$0xff]
    %v4259 = vld [vmem:[#allocation3 + $0x78] sm:$0xff]
    %v4260 = vmax.f32 %v4244, 0.0
    %v4261 = vmax.f32 %v4245, 0.0
    %v4262 = vmax.f32 %v4246, 0.0
    %v4263 = vmax.f32 %v4247, 0.0
    %v4264 = vmax.f32 %v4248, 0.0
    %v4265 = vmax.f32 %v4249, 0.0
    %v4266 = vmax.f32 %v4250, 0.0
    %v4267 = vmax.f32 %v4251, 0.0
    %v4268 = vmax.f32 %v4252, 0.0
    %v4269 = vmax.f32 %v4253, 0.0
    %v4270 = vmax.f32 %v4254, 0.0
    %v4271 = vmax.f32 %v4255, 0.0
    %v4272 = vmax.f32 %v4256, 0.0
    %v4273 = vmax.f32 %v4257, 0.0
    %v4274 = vmax.f32 %v4258, 0.0
    %v4275 = vmax.f32 %v4259, 0.0
    %v4276 = vpack.c.bf16 %v4262, %v4260
    %v4277 = vpack.c.bf16 %v4263, %v4261
    %v4278 = vpack.c.bf16 %v4266, %v4264
    %v4279 = vpack.c.bf16 %v4267, %v4265
    %v4280 = vpack.c.bf16 %v4270, %v4268
    %v4281 = vpack.c.bf16 %v4271, %v4269
    %v4282 = vpack.c.bf16 %v4274, %v4272
    %v4283 = vpack.c.bf16 %v4275, %v4273
    %v4284 = vld [vmem:[#allocation14] sm:$0xf]
    %v4285 = vld [vmem:[#allocation14 + $0x4] sm:$0xf]
    %v4286 = vld [vmem:[#allocation14 + $0x8] sm:$0xf]
    %v4287 = vld [vmem:[#allocation14 + $0xc] sm:$0xf]
    %v4288 = vld [vmem:[#allocation14 + $0x10] sm:$0xf]
    %v4289 = vld [vmem:[#allocation14 + $0x14] sm:$0xf]
    %v4290 = vld [vmem:[#allocation14 + $0x18] sm:$0xf]
    %v4291 = vld [vmem:[#allocation14 + $0x1c] sm:$0xf]
    %v4292 = vld [vmem:[#allocation14 + $0x20] sm:$0xf]
    %v4293 = vld [vmem:[#allocation14 + $0x24] sm:$0xf]
    %v4294 = vld [vmem:[#allocation14 + $0x28] sm:$0xf]
    %v4295 = vld [vmem:[#allocation14 + $0x2c] sm:$0xf]
    %v4296 = vld [vmem:[#allocation14 + $0x30] sm:$0xf]
    %v4297 = vld [vmem:[#allocation14 + $0x34] sm:$0xf]
    %v4298 = vld [vmem:[#allocation14 + $0x38] sm:$0xf]
    %v4299 = vld [vmem:[#allocation14 + $0x3c] sm:$0xf]
    %v4300 = vld [vmem:[#allocation14 + $0x40] sm:$0xf]
    %v4301 = vld [vmem:[#allocation14 + $0x44] sm:$0xf]
    %v4302 = vld [vmem:[#allocation14 + $0x48] sm:$0xf]
    %v4303 = vld [vmem:[#allocation14 + $0x4c] sm:$0xf]
    %v4304 = vld [vmem:[#allocation14 + $0x50] sm:$0xf]
    %v4305 = vld [vmem:[#allocation14 + $0x54] sm:$0xf]
    %v4306 = vld [vmem:[#allocation14 + $0x58] sm:$0xf]
    %v4307 = vld [vmem:[#allocation14 + $0x5c] sm:$0xf]
    %v4308 = vld [vmem:[#allocation14 + $0x60] sm:$0xf]
    %v4309 = vld [vmem:[#allocation14 + $0x64] sm:$0xf]
    %v4310 = vld [vmem:[#allocation14 + $0x68] sm:$0xf]
    %v4311 = vld [vmem:[#allocation14 + $0x6c] sm:$0xf]
    %v4312 = vld [vmem:[#allocation14 + $0x70] sm:$0xf]
    %v4313 = vld [vmem:[#allocation14 + $0x74] sm:$0xf]
    %v4314 = vld [vmem:[#allocation14 + $0x78] sm:$0xf]
    %v4315 = vld [vmem:[#allocation14 + $0x7c] sm:$0xf]
    %v4316 = vld [vmem:[%s5] sm:$0x1]
    %v4318 = vperm.slane %v4316, 0
    %v4352 = vunpack.c.l.b16 %v4284
    %v4353 = vunpack.c.l.b16 %v4285
    %v4354 = vunpack.c.l.b16 %v4286
    %v4355 = vunpack.c.l.b16 %v4287
    %v4356 = vunpack.c.l.b16 %v4288
    %v4357 = vunpack.c.l.b16 %v4289
    %v4358 = vunpack.c.l.b16 %v4290
    %v4359 = vunpack.c.l.b16 %v4291
    %v4360 = vunpack.c.l.b16 %v4292
    %v4361 = vunpack.c.l.b16 %v4293
    %v4362 = vunpack.c.l.b16 %v4294
    %v4363 = vunpack.c.l.b16 %v4295
    %v4364 = vunpack.c.l.b16 %v4296
    %v4365 = vunpack.c.l.b16 %v4297
    %v4366 = vunpack.c.l.b16 %v4298
    %v4367 = vunpack.c.l.b16 %v4299
    %v4368 = vunpack.c.l.b16 %v4300
    %v4369 = vunpack.c.l.b16 %v4301
    %v4370 = vunpack.c.l.b16 %v4302
    %v4371 = vunpack.c.l.b16 %v4303
    %v4372 = vunpack.c.l.b16 %v4304
    %v4373 = vunpack.c.l.b16 %v4305
    %v4374 = vunpack.c.l.b16 %v4306
    %v4375 = vunpack.c.l.b16 %v4307
    %v4376 = vunpack.c.l.b16 %v4308
    %v4377 = vunpack.c.l.b16 %v4309
    %v4378 = vunpack.c.l.b16 %v4310
    %v4379 = vunpack.c.l.b16 %v4311
    %v4380 = vunpack.c.l.b16 %v4312
    %v4381 = vunpack.c.l.b16 %v4313
    %v4382 = vunpack.c.l.b16 %v4314
    %v4383 = vunpack.c.l.b16 %v4315
    %v4384 = vpack.c.b16 %v4353, %v4352
    %v4385 = vpack.c.b16 %v4355, %v4354
    %v4386 = vpack.c.b16 %v4357, %v4356
    %v4387 = vpack.c.b16 %v4359, %v4358
    %v4388 = vpack.c.b16 %v4361, %v4360
    %v4389 = vpack.c.b16 %v4363, %v4362
    %v4390 = vpack.c.b16 %v4365, %v4364
    %v4391 = vpack.c.b16 %v4367, %v4366
    %v4392 = vpack.c.b16 %v4369, %v4368
    %v4393 = vpack.c.b16 %v4371, %v4370
    %v4394 = vpack.c.b16 %v4373, %v4372
    %v4395 = vpack.c.b16 %v4375, %v4374
    %v4396 = vpack.c.b16 %v4377, %v4376
    %v4397 = vpack.c.b16 %v4379, %v4378
    %v4398 = vpack.c.b16 %v4381, %v4380
    %v4399 = vpack.c.b16 %v4383, %v4382
    %4416 = vmatpush.bf16.msra.mxu0 %v4391
    %4417 = vmatpush.bf16.msra.mxu0 %v4390
    %4418 = vmatpush.bf16.msra.mxu0 %v4389
    %4419 = vmatpush.bf16.msra.mxu0 %v4388
    %4420 = vmatpush.bf16.msra.mxu0 %v4387
    %4421 = vmatpush.bf16.msra.mxu0 %v4386
    %4422 = vmatpush.bf16.msra.mxu0 %v4385
    %4423 = vmatpush.bf16.msra.mxu0 %v4384
    %4424 = vmatmul.bf16.gmra.mxu0 %v4276
    %v4425 = vpop.f32.mrf.mxu0
    %v4426 = vadd.f32 %v4318, %v4425
    %v4427 = vpop.f32.mrf.mxu0
    %v4428 = vadd.f32 %v4318, %v4427
    %4429 = vmatmul.bf16.gmra.mxu0 %v4278
    %v4430 = vpop.f32.mrf.mxu0
    %v4431 = vadd.f32 %v4318, %v4430
    %v4432 = vpop.f32.mrf.mxu0
    %v4433 = vadd.f32 %v4318, %v4432
    %4434 = vmatmul.bf16.gmra.mxu0 %v4280
    %v4435 = vpop.f32.mrf.mxu0
    %v4436 = vadd.f32 %v4318, %v4435
    %v4437 = vpop.f32.mrf.mxu0
    %v4438 = vadd.f32 %v4318, %v4437
    %4439 = vmatmul.bf16.gmra.mxu0 %v4282
    %v4440 = vpop.f32.mrf.mxu0
    %v4441 = vadd.f32 %v4318, %v4440
    %v4442 = vpop.f32.mrf.mxu0
    %v4443 = vadd.f32 %v4318, %v4442
    %4444 = vdwg.mxu0
    %4445 = vmatpush.bf16.msra.mxu0 %v4399
    %4446 = vmatpush.bf16.msra.mxu0 %v4398
    %4447 = vmatpush.bf16.msra.mxu0 %v4397
    %4448 = vmatpush.bf16.msra.mxu0 %v4396
    %4449 = vmatpush.bf16.msra.mxu0 %v4395
    %4450 = vmatpush.bf16.msra.mxu0 %v4394
    %4451 = vmatpush.bf16.msra.mxu0 %v4393
    %4452 = vmatpush.bf16.msra.mxu0 %v4392
    %4453 = vmatmul.bf16.gmra.mxu0 %v4277
    %v4454 = vpop.f32.mrf.mxu0
    %v4455 = vadd.f32 %v4426, %v4454
    %v4456 = vpop.f32.mrf.mxu0
    %v4457 = vadd.f32 %v4428, %v4456
    %4458 = vmatmul.bf16.gmra.mxu0 %v4279
    %v4459 = vpop.f32.mrf.mxu0
    %v4460 = vadd.f32 %v4431, %v4459
    %v4461 = vpop.f32.mrf.mxu0
    %v4462 = vadd.f32 %v4433, %v4461
    %4463 = vmatmul.bf16.gmra.mxu0 %v4281
    %v4464 = vpop.f32.mrf.mxu0
    %v4465 = vadd.f32 %v4436, %v4464
    %v4466 = vpop.f32.mrf.mxu0
    %v4467 = vadd.f32 %v4438, %v4466
    %4468 = vmatmul.bf16.gmra.mxu0 %v4283
    %v4469 = vpop.f32.mrf.mxu0
    %v4470 = vadd.f32 %v4441, %v4469
    %v4471 = vpop.f32.mrf.mxu0
    %v4472 = vadd.f32 %v4443, %v4471
    %4473 = vdwg.mxu0
    %v4474 = vmax.f32 %v4455, 0.0
    %v4475 = vmax.f32 %v4457, 0.0
    %v4476 = vmax.f32 %v4460, 0.0
    %v4477 = vmax.f32 %v4462, 0.0
    %v4478 = vmax.f32 %v4465, 0.0
    %v4479 = vmax.f32 %v4467, 0.0
    %v4480 = vmax.f32 %v4470, 0.0
    %v4481 = vmax.f32 %v4472, 0.0
    %v4482 = vpack.c.bf16 %v4475, %v4474
    %v4483 = vpack.c.bf16 %v4477, %v4476
    %v4484 = vpack.c.bf16 %v4479, %v4478
    %v4485 = vpack.c.bf16 %v4481, %v4480
    %v4486 = vld [vmem:[#allocation15] sm:$0xf]
    %v4487 = vld [vmem:[#allocation15 + $0x4] sm:$0xf]
    %v4488 = vld [vmem:[#allocation15 + $0x8] sm:$0xf]
    %v4489 = vld [vmem:[#allocation15 + $0xc] sm:$0xf]
    %v4490 = vld [vmem:[#allocation15 + $0x10] sm:$0xf]
    %v4491 = vld [vmem:[#allocation15 + $0x14] sm:$0xf]
    %v4492 = vld [vmem:[#allocation15 + $0x18] sm:$0xf]
    %v4493 = vld [vmem:[#allocation15 + $0x1c] sm:$0xf]
    %v4494 = vld [vmem:[#allocation15 + $0x20] sm:$0xf]
    %v4495 = vld [vmem:[#allocation15 + $0x24] sm:$0xf]
    %v4496 = vld [vmem:[#allocation15 + $0x28] sm:$0xf]
    %v4497 = vld [vmem:[#allocation15 + $0x2c] sm:$0xf]
    %v4498 = vld [vmem:[#allocation15 + $0x30] sm:$0xf]
    %v4499 = vld [vmem:[#allocation15 + $0x34] sm:$0xf]
    %v4500 = vld [vmem:[#allocation15 + $0x38] sm:$0xf]
    %v4501 = vld [vmem:[#allocation15 + $0x3c] sm:$0xf]
    %v4502 = vld [vmem:[%s7] sm:$0x1]
    %v4504 = vperm.slane %v4502, 0
    %v4522 = vunpack.c.l.b16 %v4486
    %v4523 = vunpack.c.l.b16 %v4487
    %v4524 = vunpack.c.l.b16 %v4488
    %v4525 = vunpack.c.l.b16 %v4489
    %v4526 = vunpack.c.l.b16 %v4490
    %v4527 = vunpack.c.l.b16 %v4491
    %v4528 = vunpack.c.l.b16 %v4492
    %v4529 = vunpack.c.l.b16 %v4493
    %v4530 = vunpack.c.l.b16 %v4494
    %v4531 = vunpack.c.l.b16 %v4495
    %v4532 = vunpack.c.l.b16 %v4496
    %v4533 = vunpack.c.l.b16 %v4497
    %v4534 = vunpack.c.l.b16 %v4498
    %v4535 = vunpack.c.l.b16 %v4499
    %v4536 = vunpack.c.l.b16 %v4500
    %v4537 = vunpack.c.l.b16 %v4501
    %v4538 = vpack.c.b16 %v4523, %v4522
    %v4539 = vpack.c.b16 %v4525, %v4524
    %v4540 = vpack.c.b16 %v4527, %v4526
    %v4541 = vpack.c.b16 %v4529, %v4528
    %v4542 = vpack.c.b16 %v4531, %v4530
    %v4543 = vpack.c.b16 %v4533, %v4532
    %v4544 = vpack.c.b16 %v4535, %v4534
    %v4545 = vpack.c.b16 %v4537, %v4536
    %4554 = vmatpush.bf16.msra.mxu0 %v4545
    %4555 = vmatpush.bf16.msra.mxu0 %v4544
    %4556 = vmatpush.bf16.msra.mxu0 %v4543
    %4557 = vmatpush.bf16.msra.mxu0 %v4542
    %4558 = vmatpush.bf16.msra.mxu0 %v4541
    %4559 = vmatpush.bf16.msra.mxu0 %v4540
    %4560 = vmatpush.bf16.msra.mxu0 %v4539
    %4561 = vmatpush.bf16.msra.mxu0 %v4538
    %4562 = vmatmul.bf16.gmra.mxu0 %v4482
    %v4563 = vpop.f32.mrf.mxu0
    %v4564 = vadd.f32 %v4504, %v4563
    %v4565 = vpop.f32.mrf.mxu0
    %v4566 = vadd.f32 %v4504, %v4565
    %4567 = vmatmul.bf16.gmra.mxu0 %v4483
    %v4568 = vpop.f32.mrf.mxu0
    %v4569 = vadd.f32 %v4504, %v4568
    %v4570 = vpop.f32.mrf.mxu0
    %v4571 = vadd.f32 %v4504, %v4570
    %4572 = vmatmul.bf16.gmra.mxu0 %v4484
    %v4573 = vpop.f32.mrf.mxu0
    %v4574 = vadd.f32 %v4504, %v4573
    %v4575 = vpop.f32.mrf.mxu0
    %v4576 = vadd.f32 %v4504, %v4575
    %4577 = vmatmul.bf16.gmra.mxu0 %v4485
    %v4578 = vpop.f32.mrf.mxu0
    %v4579 = vadd.f32 %v4504, %v4578
    %v4580 = vpop.f32.mrf.mxu0
    %v4581 = vadd.f32 %v4504, %v4580
    %4582 = vdwg.mxu0
    %4583 = vst [vmem:[#allocation17] sm:$0xff] %v4564
    %4584 = vst [vmem:[#allocation17 + $0x8] sm:$0xff] %v4566
    %4585 = vst [vmem:[#allocation17 + $0x10] sm:$0xff] %v4569
    %4586 = vst [vmem:[#allocation17 + $0x18] sm:$0xff] %v4571
    %4587 = vst [vmem:[#allocation17 + $0x20] sm:$0xff] %v4574
    %4588 = vst [vmem:[#allocation17 + $0x28] sm:$0xff] %v4576
    %4589 = vst [vmem:[#allocation17 + $0x30] sm:$0xff] %v4579
    %4590 = vst [vmem:[#allocation17 + $0x38] sm:$0xff] %v4581
    // Predicated region
    $region62: #{tpu_custom_call.1} parent=1 // pred_check
      _
    $region63: #{tpu_custom_call.1} parent=1 // pred_check_branch
      %4592 = sbr.rel (0) target = $region65
    $region64: #{tpu_custom_call.1} parent=1 // pred_region
      %4594 = vsyncadd [#allocation8], 0
      %s4595 = sshll.u32 [#allocation17], 4
      %s4596 = int_to_ptr.vmem [resolvable:$true] %s4595
      %s4597 = sshll.u32 %s8, 4
      %s4598 = int_to_ptr.hbm [resolvable:$true] %s4597
      %4603 = dma.vmem_to_hbm [thread:$0]  %s4596, 1024, %s4598, [#allocation8], 128, 128, 8
    $region65: #{tpu_custom_call.1} parent=1 // pred_fallthru
      _
    // Predicated region
    $region66: #{tpu_custom_call.1} parent=1 // pred_check
      _
    $region67: #{tpu_custom_call.1} parent=1 // pred_check_branch
      %4605 = sbr.rel (0) target = $region69
    $region68: #{tpu_custom_call.1} parent=1 // pred_region
      %4607 = dma.done [#allocation8], 1024
    $region69: #{tpu_custom_call.1} parent=1 // pred_fallthru
      _
    %4608 = vsyncpa [#allocation7], 1
    %4609 = vsyncpa [#allocation10], 1
    %4610 = vsyncpa [#allocation13], 1
    %4611 = vsyncpa [#allocation16], 1
    %4612 = vsyncpa [#allocation8], 1

</llo_original>
